<compile_context>
chip_gen: v6e
topology: v6e:2x2x1
jax: 0.10.0
libtpu: 0.0.40
codegen_flags: <defaults>
</compile_context>

<pallas_src>
import jax
import jax.numpy as jnp
from jax.experimental import pallas as pl
from jax.experimental.pallas import tpu as pltpu


# Hidden widths are fixed by the module definition.
HIDDEN1 = {"scRNA": 256, "ATAC": 256, "SNV": 128}
HIDDEN2 = {"scRNA": 512, "ATAC": 512, "SNV": 256}
BRANCHES = ("scRNA", "ATAC", "SNV")


def _round_up(x, m):
    return (x + m - 1) // m * m


def _softplus(z):
    # torch.nn.Softplus(beta=1, threshold=20): linear above 20.
    return jnp.where(z > 20.0, z, jnp.log1p(jnp.exp(jnp.minimum(z, 20.0))))


def _sigmoid(z):
    # Single EUP push (tanh) instead of exp + reciprocal; mathematically exact.
    return 0.5 * jnp.tanh(0.5 * z) + 0.5


# ---------------------------------------------------------------------------
# Kernel
# ---------------------------------------------------------------------------
def _make_kernel(num_j, r_tiles, a_tiles, s_tiles):
    c1 = HIDDEN1["scRNA"]
    c2 = c1 + HIDDEN1["ATAC"]
    c3 = c2 + HIDDEN1["SNV"]

    def kernel(x_ref, w1c, b1c,
               w2r, b2r, w2a, b2a, w2s, b2s,
               w3r, b3r, w3a, b3a, w3s, b3s,
               or_ref, oa_ref, os_ref,
               h2r, h2a, h2s):
        j = pl.program_id(1)

        def hidden():
            x = x_ref[...].astype(jnp.bfloat16)
            # Fused layer-1 for all three branches: one wide N=640 matmul
            # instead of three shallow-K (latent_dim ~ 32) pushes.
            h1 = jnp.dot(x, w1c[...], preferred_element_type=jnp.float32)
            h1 = jnp.maximum(h1 + b1c[...], 0.0).astype(jnp.bfloat16)

            def layer2(h, w2_ref, b2_ref):
                z = jnp.dot(h, w2_ref[...], preferred_element_type=jnp.float32)
                return jnp.maximum(z + b2_ref[...], 0.0).astype(jnp.bfloat16)

            h2r[...] = layer2(h1[:, :c1], w2r, b2r)
            h2a[...] = layer2(h1[:, c1:c2], w2a, b2a)
            h2s[...] = layer2(h1[:, c2:c3], w2s, b2s)

        # Hidden activations computed once per batch tile (j == 0), reused for
        # every final-layer N tile.  Requires the j axis to be "arbitrary".
        if num_j == 1:
            hidden()
        else:
            pl.when(j == 0)(hidden)

        def final(h2_ref, w3_ref, b3_ref, out_ref, act):
            def _do():
                z = jnp.dot(h2_ref[...], w3_ref[...],
                            preferred_element_type=jnp.float32) + b3_ref[...]
                y = _softplus(z) if act == "softplus" else _sigmoid(z)
                out_ref[...] = y.astype(out_ref.dtype)
            return _do

        def run(tiles, fn):
            if tiles >= num_j:      # branch active on every j step
                fn()
            else:                   # branch finished; skip (block idx clamped)
                pl.when(j < tiles)(fn)

        run(r_tiles, final(h2r, w3r, b3r, or_ref, "softplus"))
        run(a_tiles, final(h2a, w3a, b3a, oa_ref, "softplus"))
        run(s_tiles, final(h2s, w3s, b3s, os_ref, "sigmoid"))

    return kernel


# ---------------------------------------------------------------------------
# One-time parameter preparation (hoisted out of the per-call path)
# ---------------------------------------------------------------------------
def prepare_decoder_params(params, *, final_tile=512):
    """Cast weights to bf16, concatenate layer-1 across branches, and pad the
    final-layer N dimension to a multiple of the final-layer tile size.

    Done once; every forward then passes these arrays straight to the kernel
    (no per-call re-read/convert/pad of the f32 weights)."""
    assert final_tile % 128 == 0
    w1s, b1s = [], []
    branches = {}
    for name in BRANCHES:
        (w1, b1), (w2, b2), (w3, b3) = params[name]
        assert w1.shape[1] == HIDDEN1[name] and w2.shape[1] == HIDDEN2[name]
        w1s.append(w1)
        b1s.append(b1)
        out_d = w3.shape[1]
        tn = min(final_tile, _round_up(out_d, 128))
        out_p = _round_up(out_d, tn)
        if out_p != out_d:
            w3 = jnp.pad(w3, ((0, 0), (0, out_p - out_d)))
            b3 = jnp.pad(b3, ((0, 0), (0, out_p - out_d)))
        branches[name] = dict(
            w2=w2.astype(jnp.bfloat16), b2=b2.astype(jnp.float32),
            w3=w3.astype(jnp.bfloat16), b3=b3.astype(jnp.float32),
            out_d=out_d, out_p=out_p, tn=tn, tiles=out_p // tn,
        )
    w1_cat = jnp.concatenate(w1s, axis=1).astype(jnp.bfloat16)   # (Dl, 640)
    b1_cat = jnp.concatenate(b1s, axis=1).astype(jnp.float32)    # (1, 640)
    return dict(w1_cat=w1_cat, b1_cat=b1_cat, branches=branches,
                latent_dim=w1_cat.shape[0])


# ---------------------------------------------------------------------------
# Forward wrapper
# ---------------------------------------------------------------------------
def decoder_forward(prepped, latent_variant, *, batch_tile=256,
                    out_dtype=jnp.float32):
    """Mirrors Decoder.forward: returns (scRNA_recon, ATAC_recon, SNV_recon)."""
    B, Dl = latent_variant.shape
    assert Dl == prepped["latent_dim"]

    # Batch tile: multiple of 16 (bf16 sublane packing), default 256 to fill
    # the 2x256x256 MXU on v6e/v7x.
    tb = _round_up(min(batch_tile, _round_up(B, 16)), 16)
    Bp = _round_up(B, tb)
    x = latent_variant if Bp == B else jnp.pad(latent_variant,
                                               ((0, Bp - B), (0, 0)))

    br = prepped["branches"]
    r, a, s = br["scRNA"], br["ATAC"], br["SNV"]
    num_j = max(r["tiles"], a["tiles"], s["tiles"])
    grid = (Bp // tb, num_j)

    def const2d(arr):
        # Constant block index -> stays VMEM-resident across the whole grid.
        return pl.BlockSpec(arr.shape, lambda i, j: (0, 0))

    def n_tiled_spec(rows, tn, tiles, batch_indexed):
        if tiles == num_j:
            col = lambda i, j: j
        else:
            last = tiles - 1
            col = lambda i, j: jnp.minimum(j, last)   # clamp once finished
        if batch_indexed:
            return pl.BlockSpec((rows, tn), lambda i, j: (i, col(i, j)))
        return pl.BlockSpec((rows, tn), lambda i, j: (0, col(i, j)))

    in_specs = [
        pl.BlockSpec((tb, Dl), lambda i, j: (i, 0)),              # x
        const2d(prepped["w1_cat"]), const2d(prepped["b1_cat"]),
        const2d(r["w2"]), const2d(r["b2"]),
        const2d(a["w2"]), const2d(a["b2"]),
        const2d(s["w2"]), const2d(s["b2"]),
        n_tiled_spec(r["w3"].shape[0], r["tn"], r["tiles"], False),
        n_tiled_spec(1,               r["tn"], r["tiles"], False),
        n_tiled_spec(a["w3"].shape[0], a["tn"], a["tiles"], False),
        n_tiled_spec(1,               a["tn"], a["tiles"], False),
        n_tiled_spec(s["w3"].shape[0], s["tn"], s["tiles"], False),
        n_tiled_spec(1,               s["tn"], s["tiles"], False),
    ]
    out_specs = (
        n_tiled_spec(tb, r["tn"], r["tiles"], True),
        n_tiled_spec(tb, a["tn"], a["tiles"], True),
        n_tiled_spec(tb, s["tn"], s["tiles"], True),
    )
    out_shapes = (
        jax.ShapeDtypeStruct((Bp, r["out_p"]), out_dtype),
        jax.ShapeDtypeStruct((Bp, a["out_p"]), out_dtype),
        jax.ShapeDtypeStruct((Bp, s["out_p"]), out_dtype),
    )
    scratch_shapes = [
        pltpu.VMEM((tb, HIDDEN2["scRNA"]), jnp.bfloat16),
        pltpu.VMEM((tb, HIDDEN2["ATAC"]), jnp.bfloat16),
        pltpu.VMEM((tb, HIDDEN2["SNV"]), jnp.bfloat16),
    ]

    args = (x,
            prepped["w1_cat"], prepped["b1_cat"],
            r["w2"], r["b2"], a["w2"], a["b2"], s["w2"], s["b2"],
            r["w3"], r["b3"], a["w3"], a["b3"], s["w3"], s["b3"])

    # --- compiler hints: cost estimate + explicit VMEM budget ----------------
    def nbytes(arr):
        return arr.size * arr.dtype.itemsize

    out_isz = jnp.dtype(out_dtype).itemsize
    weight_bytes = sum(nbytes(w) for w in args[1:])
    out_bytes = sum(Bp * b["out_p"] * out_isz for b in (r, a, s))
    flops = 2 * Bp * (Dl * prepped["w1_cat"].shape[1]
                      + sum(b["w2"].shape[0] * b["w2"].shape[1] for b in (r, a, s))
                      + sum(b["w3"].shape[0] * b["out_p"] for b in (r, a, s)))
    transcendentals = Bp * (2 * (r["out_p"] + a["out_p"]) + s["out_p"])
    cost = pl.CostEstimate(flops=int(flops),
                           transcendentals=int(transcendentals),
                           bytes_accessed=int(nbytes(x) + weight_bytes + out_bytes))

    const_bytes = sum(nbytes(w) for w in (prepped["w1_cat"], prepped["b1_cat"],
                                          r["w2"], r["b2"], a["w2"], a["b2"],
                                          s["w2"], s["b2"]))
    w3_blk = sum(b["w3"].shape[0] * b["tn"] * 2 + b["tn"] * 4 for b in (r, a, s))
    out_blk = sum(tb * b["tn"] * out_isz for b in (r, a, s))
    x_blk = tb * Dl * 4
    scratch_bytes = tb * (HIDDEN2["scRNA"] + HIDDEN2["ATAC"] + HIDDEN2["SNV"]) * 2
    vmem_est = 2 * (const_bytes + w3_blk + out_blk + x_blk) + scratch_bytes
    vmem_limit = int(min(max(vmem_est + (4 << 20), 16 << 20), 64 << 20))

    kernel = _make_kernel(num_j, r["tiles"], a["tiles"], s["tiles"])
    # Batch axis "parallel" (megacore); N axis must be "arbitrary" because the
    # h2 scratch is computed only at j == 0 and reused across j.
    outs = pl.pallas_call(
        kernel,
        out_shape=out_shapes,
        grid=grid,
        in_specs=in_specs,
        out_specs=out_specs,
        scratch_shapes=scratch_shapes,
        compiler_params=pltpu.CompilerParams(
            dimension_semantics=("parallel", "arbitrary"),
            vmem_limit_bytes=vmem_limit),
        cost_estimate=cost,
    )(*args)

    def crop(y, b):
        if Bp == B and b["out_p"] == b["out_d"]:
            return y          # skip slice round-trip when already aligned
        return y[:B, :b["out_d"]]

    return crop(outs[0], r), crop(outs[1], a), crop(outs[2], s)


# ---------------------------------------------------------------------------
# Parameter construction (deterministic, PyTorch-Linear-style uniform init)
# ---------------------------------------------------------------------------
def _init_linear(key, in_dim, out_dim):
    kw, kb = jax.random.split(key)
    bound = 1.0 / jnp.sqrt(jnp.float32(in_dim))
    # Stored directly in (in, out) layout = transpose of torch's (out, in).
    w = jax.random.uniform(kw, (in_dim, out_dim), jnp.float32, -bound, bound)
    b = jax.random.uniform(kb, (1, out_dim), jnp.float32, -bound, bound)
    return w, b


def make_decoder_params(key, latent_dim, scRNA_dim, ATAC_dim, SNV_dim):
    keys = jax.random.split(key, 9)
    return {
        "scRNA": [
            _init_linear(keys[0], latent_dim, 256),
            _init_linear(keys[1], 256, 512),
            _init_linear(keys[2], 512, scRNA_dim),
        ],
        "ATAC": [
            _init_linear(keys[3], latent_dim, 256),
            _init_linear(keys[4], 256, 512),
            _init_linear(keys[5], 512, ATAC_dim),
        ],
        "SNV": [
            _init_linear(keys[6], latent_dim, 128),
            _init_linear(keys[7], 128, 256),
            _init_linear(keys[8], 256, SNV_dim),
        ],
    }


# ---------------------------------------------------------------------------
# Reference (pure JAX, mirrors the kernel's bf16 weight/activation precision)
# ---------------------------------------------------------------------------
def _decoder_forward_ref(params, x):
    xb = x.astype(jnp.bfloat16)

    def lin(h, w, b):
        return jnp.dot(h, w.astype(jnp.bfloat16),
                       preferred_element_type=jnp.float32) + b

    def mlp(name, act):
        (w1, b1), (w2, b2), (w3, b3) = params[name]
        h = jnp.maximum(lin(xb, w1, b1), 0.0).astype(jnp.bfloat16)
        h = jnp.maximum(lin(h, w2, b2), 0.0).astype(jnp.bfloat16)
        z = lin(h, w3, b3)
        if act == "softplus":
            return jnp.where(z > 20.0, z, jnp.log1p(jnp.exp(jnp.minimum(z, 20.0))))
        return jax.nn.sigmoid(z)

    return (mlp("scRNA", "softplus"),
            mlp("ATAC", "softplus"),
            mlp("SNV", "sigmoid"))


if __name__ == "__main__":
    # Small problem sizes (hidden widths 256/512/128/256 are fixed by the
    # module).  batch_tile / final_tile are set small so that BOTH grid axes
    # (batch tiles, final-layer N tiles) and the clamped index maps are
    # exercised even at toy shapes.
    B = 40
    latent_dim = 32
    scRNA_dim = 256
    ATAC_dim = 384
    SNV_dim = 128

    key = jax.random.PRNGKey(0)
    k_params, k_x = jax.random.split(key)

    params = make_decoder_params(k_params, latent_dim, scRNA_dim, ATAC_dim, SNV_dim)
    latent_variant = jax.random.normal(k_x, (B, latent_dim), jnp.float32)

    prepped = prepare_decoder_params(params, final_tile=128)   # one-time prep
    outs = decoder_forward(prepped, latent_variant, batch_tile=16)
    outs = jax.block_until_ready(outs)

    refs = _decoder_forward_ref(params, latent_variant)
    for o, ref in zip(outs, refs):
        assert o.shape == ref.shape, (o.shape, ref.shape)
        assert o.dtype == jnp.float32
        assert jnp.max(jnp.abs(o - ref)) < 1e-2

    print("KERNEL_OK")
</pallas_src>

<mosaic_0001>
module attributes {stable_mosaic.version = 11 : i64} {
  func.func @kernel(%arg0: i32, %arg1: i32, %arg2: memref<16x32xf32, #tpu.memory_space<vmem>>, %arg3: memref<32x640xbf16, #tpu.memory_space<vmem>>, %arg4: memref<1x640xf32, #tpu.memory_space<vmem>>, %arg5: memref<256x512xbf16, #tpu.memory_space<vmem>>, %arg6: memref<1x512xf32, #tpu.memory_space<vmem>>, %arg7: memref<256x512xbf16, #tpu.memory_space<vmem>>, %arg8: memref<1x512xf32, #tpu.memory_space<vmem>>, %arg9: memref<128x256xbf16, #tpu.memory_space<vmem>>, %arg10: memref<1x256xf32, #tpu.memory_space<vmem>>, %arg11: memref<512x128xbf16, #tpu.memory_space<vmem>>, %arg12: memref<1x128xf32, #tpu.memory_space<vmem>>, %arg13: memref<512x128xbf16, #tpu.memory_space<vmem>>, %arg14: memref<1x128xf32, #tpu.memory_space<vmem>>, %arg15: memref<256x128xbf16, #tpu.memory_space<vmem>>, %arg16: memref<1x128xf32, #tpu.memory_space<vmem>>, %arg17: memref<16x128xf32, #tpu.memory_space<vmem>>, %arg18: memref<16x128xf32, #tpu.memory_space<vmem>>, %arg19: memref<16x128xf32, #tpu.memory_space<vmem>>, %arg20: memref<16x512xbf16, #tpu.memory_space<vmem>>, %arg21: memref<16x512xbf16, #tpu.memory_space<vmem>>, %arg22: memref<16x256xbf16, #tpu.memory_space<vmem>>) attributes {dimension_semantics = [#tpu.dimension_semantics<parallel>, #tpu.dimension_semantics<arbitrary>], iteration_bounds = array<i64: 3, 3>, scalar_prefetch = 0 : i64, scratch_operands = 3 : i64, tpu.core_type = #tpu.core_type<tc>, window_params = [{transform_indices = @transform_0, window_bounds = array<i64: 16, 32>}, {pipeline_mode = #tpu.pipeline_mode<synchronous>, transform_indices = @transform_1, window_bounds = array<i64: 32, 640>}, {pipeline_mode = #tpu.pipeline_mode<synchronous>, transform_indices = @transform_2, window_bounds = array<i64: 1, 640>}, {pipeline_mode = #tpu.pipeline_mode<synchronous>, transform_indices = @transform_3, window_bounds = array<i64: 256, 512>}, {pipeline_mode = #tpu.pipeline_mode<synchronous>, transform_indices = @transform_4, window_bounds = array<i64: 1, 512>}, {pipeline_mode = #tpu.pipeline_mode<synchronous>, transform_indices = @transform_5, window_bounds = array<i64: 256, 512>}, {pipeline_mode = #tpu.pipeline_mode<synchronous>, transform_indices = @transform_6, window_bounds = array<i64: 1, 512>}, {pipeline_mode = #tpu.pipeline_mode<synchronous>, transform_indices = @transform_7, window_bounds = array<i64: 128, 256>}, {pipeline_mode = #tpu.pipeline_mode<synchronous>, transform_indices = @transform_8, window_bounds = array<i64: 1, 256>}, {transform_indices = @transform_9, window_bounds = array<i64: 512, 128>}, {transform_indices = @transform_10, window_bounds = array<i64: 1, 128>}, {transform_indices = @transform_11, window_bounds = array<i64: 512, 128>}, {transform_indices = @transform_12, window_bounds = array<i64: 1, 128>}, {transform_indices = @transform_13, window_bounds = array<i64: 256, 128>}, {transform_indices = @transform_14, window_bounds = array<i64: 1, 128>}, {transform_indices = @transform_15, window_bounds = array<i64: 16, 128>}, {transform_indices = @transform_16, window_bounds = array<i64: 16, 128>}, {transform_indices = @transform_17, window_bounds = array<i64: 16, 128>}]} {
    %c0_i32 = arith.constant 0 : i32
    %0 = arith.cmpi eq, %arg1, %c0_i32 : i32
    %1 = arith.extui %0 : i1 to i32
    %c0_i32_0 = arith.constant 0 : i32
    %2 = arith.cmpi ne, %1, %c0_i32_0 : i32
    scf.if %2 {
      %c0_12 = arith.constant 0 : index
      %c0_13 = arith.constant 0 : index
      %23 = vector.load %arg2[%c0_12, %c0_13] : memref<16x32xf32, #tpu.memory_space<vmem>>, vector<16x32xf32>
      %24 = arith.truncf %23 : vector<16x32xf32> to vector<16x32xbf16>
      %c0_14 = arith.constant 0 : index
      %c0_15 = arith.constant 0 : index
      %25 = vector.load %arg3[%c0_14, %c0_15] : memref<32x640xbf16, #tpu.memory_space<vmem>>, vector<32x640xbf16>
      %cst_16 = arith.constant dense<0.000000e+00> : vector<16x640xf32>
      %26 = tpu.matmul %24, %25, %cst_16 {dimension_numbers = #tpu.dot_dimension_numbers<[1], [0], [0], [1], [0, 0, 1, 1], [], []>} : vector<16x32xbf16>, vector<32x640xbf16>, vector<16x640xf32> -> vector<16x640xf32>
      %c0_17 = arith.constant 0 : index
      %c0_18 = arith.constant 0 : index
      %27 = vector.load %arg4[%c0_17, %c0_18] : memref<1x640xf32, #tpu.memory_space<vmem>>, vector<1x640xf32>
      %28 = vector.broadcast %27 : vector<1x640xf32> to vector<16x640xf32>
      %29 = arith.addf %26, %28 : vector<16x640xf32>
      %cst_19 = arith.constant 0.000000e+00 : f32
      %30 = vector.broadcast %cst_19 : f32 to vector<16x640xf32>
      %31 = arith.maximumf %29, %30 : vector<16x640xf32>
      %32 = arith.truncf %31 : vector<16x640xf32> to vector<16x640xbf16>
      %33 = vector.extract_strided_slice %32 {offsets = [0, 0], sizes = [16, 256], strides = [1, 1]} : vector<16x640xbf16> to vector<16x256xbf16>
      %c0_20 = arith.constant 0 : index
      %c0_21 = arith.constant 0 : index
      %34 = vector.load %arg5[%c0_20, %c0_21] : memref<256x512xbf16, #tpu.memory_space<vmem>>, vector<256x512xbf16>
      %cst_22 = arith.constant dense<0.000000e+00> : vector<16x512xf32>
      %35 = tpu.matmul %33, %34, %cst_22 {dimension_numbers = #tpu.dot_dimension_numbers<[1], [0], [0], [1], [0, 0, 1, 1], [], []>} : vector<16x256xbf16>, vector<256x512xbf16>, vector<16x512xf32> -> vector<16x512xf32>
      %c0_23 = arith.constant 0 : index
      %c0_24 = arith.constant 0 : index
      %36 = vector.load %arg6[%c0_23, %c0_24] : memref<1x512xf32, #tpu.memory_space<vmem>>, vector<1x512xf32>
      %37 = vector.broadcast %36 : vector<1x512xf32> to vector<16x512xf32>
      %38 = arith.addf %35, %37 : vector<16x512xf32>
      %cst_25 = arith.constant 0.000000e+00 : f32
      %39 = vector.broadcast %cst_25 : f32 to vector<16x512xf32>
      %40 = arith.maximumf %38, %39 : vector<16x512xf32>
      %41 = arith.truncf %40 : vector<16x512xf32> to vector<16x512xbf16>
      %c0_26 = arith.constant 0 : index
      %c0_27 = arith.constant 0 : index
      %42 = vector.load %arg20[%c0_26, %c0_27] : memref<16x512xbf16, #tpu.memory_space<vmem>>, vector<16x512xbf16>
      tpu.vector_store %arg20[%c0_26, %c0_27], %41 {strides = array<i32>} : memref<16x512xbf16, #tpu.memory_space<vmem>>, vector<16x512xbf16>,
      %43 = vector.extract_strided_slice %32 {offsets = [0, 256], sizes = [16, 256], strides = [1, 1]} : vector<16x640xbf16> to vector<16x256xbf16>
      %c0_28 = arith.constant 0 : index
      %c0_29 = arith.constant 0 : index
      %44 = vector.load %arg7[%c0_28, %c0_29] : memref<256x512xbf16, #tpu.memory_space<vmem>>, vector<256x512xbf16>
      %cst_30 = arith.constant dense<0.000000e+00> : vector<16x512xf32>
      %45 = tpu.matmul %43, %44, %cst_30 {dimension_numbers = #tpu.dot_dimension_numbers<[1], [0], [0], [1], [0, 0, 1, 1], [], []>} : vector<16x256xbf16>, vector<256x512xbf16>, vector<16x512xf32> -> vector<16x512xf32>
      %c0_31 = arith.constant 0 : index
      %c0_32 = arith.constant 0 : index
      %46 = vector.load %arg8[%c0_31, %c0_32] : memref<1x512xf32, #tpu.memory_space<vmem>>, vector<1x512xf32>
      %47 = vector.broadcast %46 : vector<1x512xf32> to vector<16x512xf32>
      %48 = arith.addf %45, %47 : vector<16x512xf32>
      %cst_33 = arith.constant 0.000000e+00 : f32
      %49 = vector.broadcast %cst_33 : f32 to vector<16x512xf32>
      %50 = arith.maximumf %48, %49 : vector<16x512xf32>
      %51 = arith.truncf %50 : vector<16x512xf32> to vector<16x512xbf16>
      %c0_34 = arith.constant 0 : index
      %c0_35 = arith.constant 0 : index
      %52 = vector.load %arg21[%c0_34, %c0_35] : memref<16x512xbf16, #tpu.memory_space<vmem>>, vector<16x512xbf16>
      tpu.vector_store %arg21[%c0_34, %c0_35], %51 {strides = array<i32>} : memref<16x512xbf16, #tpu.memory_space<vmem>>, vector<16x512xbf16>,
      %53 = vector.extract_strided_slice %32 {offsets = [0, 512], sizes = [16, 128], strides = [1, 1]} : vector<16x640xbf16> to vector<16x128xbf16>
      %c0_36 = arith.constant 0 : index
      %c0_37 = arith.constant 0 : index
      %54 = vector.load %arg9[%c0_36, %c0_37] : memref<128x256xbf16, #tpu.memory_space<vmem>>, vector<128x256xbf16>
      %cst_38 = arith.constant dense<0.000000e+00> : vector<16x256xf32>
      %55 = tpu.matmul %53, %54, %cst_38 {dimension_numbers = #tpu.dot_dimension_numbers<[1], [0], [0], [1], [0, 0, 1, 1], [], []>} : vector<16x128xbf16>, vector<128x256xbf16>, vector<16x256xf32> -> vector<16x256xf32>
      %c0_39 = arith.constant 0 : index
      %c0_40 = arith.constant 0 : index
      %56 = vector.load %arg10[%c0_39, %c0_40] : memref<1x256xf32, #tpu.memory_space<vmem>>, vector<1x256xf32>
      %57 = vector.broadcast %56 : vector<1x256xf32> to vector<16x256xf32>
      %58 = arith.addf %55, %57 : vector<16x256xf32>
      %cst_41 = arith.constant 0.000000e+00 : f32
      %59 = vector.broadcast %cst_41 : f32 to vector<16x256xf32>
      %60 = arith.maximumf %58, %59 : vector<16x256xf32>
      %61 = arith.truncf %60 : vector<16x256xf32> to vector<16x256xbf16>
      %c0_42 = arith.constant 0 : index
      %c0_43 = arith.constant 0 : index
      %62 = vector.load %arg22[%c0_42, %c0_43] : memref<16x256xbf16, #tpu.memory_space<vmem>>, vector<16x256xbf16>
      tpu.vector_store %arg22[%c0_42, %c0_43], %61 {strides = array<i32>} : memref<16x256xbf16, #tpu.memory_space<vmem>>, vector<16x256xbf16>,
    } else {
    }
    %c2_i32 = arith.constant 2 : i32
    %3 = arith.cmpi slt, %arg1, %c2_i32 : i32
    %4 = arith.extui %3 : i1 to i32
    %c0_i32_1 = arith.constant 0 : i32
    %5 = arith.cmpi ne, %4, %c0_i32_1 : i32
    scf.if %5 {
      %c0_12 = arith.constant 0 : index
      %c0_13 = arith.constant 0 : index
      %23 = vector.load %arg20[%c0_12, %c0_13] : memref<16x512xbf16, #tpu.memory_space<vmem>>, vector<16x512xbf16>
      %c0_14 = arith.constant 0 : index
      %c0_15 = arith.constant 0 : index
      %24 = vector.load %arg11[%c0_14, %c0_15] : memref<512x128xbf16, #tpu.memory_space<vmem>>, vector<512x128xbf16>
      %cst_16 = arith.constant dense<0.000000e+00> : vector<16x128xf32>
      %25 = tpu.matmul %23, %24, %cst_16 {dimension_numbers = #tpu.dot_dimension_numbers<[1], [0], [0], [1], [0, 0, 1, 1], [], []>} : vector<16x512xbf16>, vector<512x128xbf16>, vector<16x128xf32> -> vector<16x128xf32>
      %c0_17 = arith.constant 0 : index
      %c0_18 = arith.constant 0 : index
      %26 = vector.load %arg12[%c0_17, %c0_18] : memref<1x128xf32, #tpu.memory_space<vmem>>, vector<1x128xf32>
      %27 = vector.broadcast %26 : vector<1x128xf32> to vector<16x128xf32>
      %28 = arith.addf %25, %27 : vector<16x128xf32>
      %cst_19 = arith.constant 2.000000e+01 : f32
      %29 = vector.broadcast %cst_19 : f32 to vector<16x128xf32>
      %30 = arith.cmpf ogt, %28, %29 : vector<16x128xf32>
      %cst_20 = arith.constant 2.000000e+01 : f32
      %31 = vector.broadcast %cst_20 : f32 to vector<16x128xf32>
      %32 = arith.minimumf %28, %31 : vector<16x128xf32>
      %33 = math.exp %32 : vector<16x128xf32>
      %34 = math.log1p %33 : vector<16x128xf32>
      %35 = arith.select %30, %28, %34 : vector<16x128xi1>, vector<16x128xf32>
      %c0_21 = arith.constant 0 : index
      %c0_22 = arith.constant 0 : index
      %36 = vector.load %arg17[%c0_21, %c0_22] : memref<16x128xf32, #tpu.memory_space<vmem>>, vector<16x128xf32>
      tpu.vector_store %arg17[%c0_21, %c0_22], %35 {strides = array<i32>} : memref<16x128xf32, #tpu.memory_space<vmem>>, vector<16x128xf32>,
    } else {
    }
    %c0 = arith.constant 0 : index
    %c0_2 = arith.constant 0 : index
    %6 = vector.load %arg21[%c0, %c0_2] : memref<16x512xbf16, #tpu.memory_space<vmem>>, vector<16x512xbf16>
    %c0_3 = arith.constant 0 : index
    %c0_4 = arith.constant 0 : index
    %7 = vector.load %arg13[%c0_3, %c0_4] : memref<512x128xbf16, #tpu.memory_space<vmem>>, vector<512x128xbf16>
    %cst = arith.constant dense<0.000000e+00> : vector<16x128xf32>
    %8 = tpu.matmul %6, %7, %cst {dimension_numbers = #tpu.dot_dimension_numbers<[1], [0], [0], [1], [0, 0, 1, 1], [], []>} : vector<16x512xbf16>, vector<512x128xbf16>, vector<16x128xf32> -> vector<16x128xf32>
    %c0_5 = arith.constant 0 : index
    %c0_6 = arith.constant 0 : index
    %9 = vector.load %arg14[%c0_5, %c0_6] : memref<1x128xf32, #tpu.memory_space<vmem>>, vector<1x128xf32>
    %10 = vector.broadcast %9 : vector<1x128xf32> to vector<16x128xf32>
    %11 = arith.addf %8, %10 : vector<16x128xf32>
    %cst_7 = arith.constant 2.000000e+01 : f32
    %12 = vector.broadcast %cst_7 : f32 to vector<16x128xf32>
    %13 = arith.cmpf ogt, %11, %12 : vector<16x128xf32>
    %cst_8 = arith.constant 2.000000e+01 : f32
    %14 = vector.broadcast %cst_8 : f32 to vector<16x128xf32>
    %15 = arith.minimumf %11, %14 : vector<16x128xf32>
    %16 = math.exp %15 : vector<16x128xf32>
    %17 = math.log1p %16 : vector<16x128xf32>
    %18 = arith.select %13, %11, %17 : vector<16x128xi1>, vector<16x128xf32>
    %c0_9 = arith.constant 0 : index
    %c0_10 = arith.constant 0 : index
    %19 = vector.load %arg18[%c0_9, %c0_10] : memref<16x128xf32, #tpu.memory_space<vmem>>, vector<16x128xf32>
    tpu.vector_store %arg18[%c0_9, %c0_10], %18 {strides = array<i32>} : memref<16x128xf32, #tpu.memory_space<vmem>>, vector<16x128xf32>,
    %c1_i32 = arith.constant 1 : i32
    %20 = arith.cmpi slt, %arg1, %c1_i32 : i32
    %21 = arith.extui %20 : i1 to i32
    %c0_i32_11 = arith.constant 0 : i32
    %22 = arith.cmpi ne, %21, %c0_i32_11 : i32
    scf.if %22 {
      %c0_12 = arith.constant 0 : index
      %c0_13 = arith.constant 0 : index
      %23 = vector.load %arg22[%c0_12, %c0_13] : memref<16x256xbf16, #tpu.memory_space<vmem>>, vector<16x256xbf16>
      %c0_14 = arith.constant 0 : index
      %c0_15 = arith.constant 0 : index
      %24 = vector.load %arg15[%c0_14, %c0_15] : memref<256x128xbf16, #tpu.memory_space<vmem>>, vector<256x128xbf16>
      %cst_16 = arith.constant dense<0.000000e+00> : vector<16x128xf32>
      %25 = tpu.matmul %23, %24, %cst_16 {dimension_numbers = #tpu.dot_dimension_numbers<[1], [0], [0], [1], [0, 0, 1, 1], [], []>} : vector<16x256xbf16>, vector<256x128xbf16>, vector<16x128xf32> -> vector<16x128xf32>
      %c0_17 = arith.constant 0 : index
      %c0_18 = arith.constant 0 : index
      %26 = vector.load %arg16[%c0_17, %c0_18] : memref<1x128xf32, #tpu.memory_space<vmem>>, vector<1x128xf32>
      %27 = vector.broadcast %26 : vector<1x128xf32> to vector<16x128xf32>
      %28 = arith.addf %25, %27 : vector<16x128xf32>
      %cst_19 = arith.constant 5.000000e-01 : f32
      %29 = vector.broadcast %cst_19 : f32 to vector<16x128xf32>
      %30 = arith.mulf %29, %28 : vector<16x128xf32>
      %31 = math.tanh %30 : vector<16x128xf32>
      %cst_20 = arith.constant 5.000000e-01 : f32
      %32 = vector.broadcast %cst_20 : f32 to vector<16x128xf32>
      %33 = arith.mulf %32, %31 : vector<16x128xf32>
      %cst_21 = arith.constant 5.000000e-01 : f32
      %34 = vector.broadcast %cst_21 : f32 to vector<16x128xf32>
      %35 = arith.addf %33, %34 : vector<16x128xf32>
      %c0_22 = arith.constant 0 : index
      %c0_23 = arith.constant 0 : index
      %36 = vector.load %arg19[%c0_22, %c0_23] : memref<16x128xf32, #tpu.memory_space<vmem>>, vector<16x128xf32>
      tpu.vector_store %arg19[%c0_22, %c0_23], %35 {strides = array<i32>} : memref<16x128xf32, #tpu.memory_space<vmem>>, vector<16x128xf32>,
    } else {
    }
    return
  }
  func.func @transform_0(%arg0: i32, %arg1: i32) -> (i32, i32) {
    %c0_i32 = arith.constant 0 : i32
    %c0_i32_0 = arith.constant 0 : i32
    return %arg0, %c0_i32 : i32, i32
  }
  func.func @transform_1(%arg0: i32, %arg1: i32) -> (i32, i32) {
    %c0_i32 = arith.constant 0 : i32
    %c0_i32_0 = arith.constant 0 : i32
    %c0_i32_1 = arith.constant 0 : i32
    return %c0_i32, %c0_i32_0 : i32, i32
  }
  func.func @transform_2(%arg0: i32, %arg1: i32) -> (i32, i32) {
    %c0_i32 = arith.constant 0 : i32
    %c0_i32_0 = arith.constant 0 : i32
    %c0_i32_1 = arith.constant 0 : i32
    return %c0_i32, %c0_i32_0 : i32, i32
  }
  func.func @transform_3(%arg0: i32, %arg1: i32) -> (i32, i32) {
    %c0_i32 = arith.constant 0 : i32
    %c0_i32_0 = arith.constant 0 : i32
    %c0_i32_1 = arith.constant 0 : i32
    return %c0_i32, %c0_i32_0 : i32, i32
  }
  func.func @transform_4(%arg0: i32, %arg1: i32) -> (i32, i32) {
    %c0_i32 = arith.constant 0 : i32
    %c0_i32_0 = arith.constant 0 : i32
    %c0_i32_1 = arith.constant 0 : i32
    return %c0_i32, %c0_i32_0 : i32, i32
  }
  func.func @transform_5(%arg0: i32, %arg1: i32) -> (i32, i32) {
    %c0_i32 = arith.constant 0 : i32
    %c0_i32_0 = arith.constant 0 : i32
    %c0_i32_1 = arith.constant 0 : i32
    return %c0_i32, %c0_i32_0 : i32, i32
  }
  func.func @transform_6(%arg0: i32, %arg1: i32) -> (i32, i32) {
    %c0_i32 = arith.constant 0 : i32
    %c0_i32_0 = arith.constant 0 : i32
    %c0_i32_1 = arith.constant 0 : i32
    return %c0_i32, %c0_i32_0 : i32, i32
  }
  func.func @transform_7(%arg0: i32, %arg1: i32) -> (i32, i32) {
    %c0_i32 = arith.constant 0 : i32
    %c0_i32_0 = arith.constant 0 : i32
    %c0_i32_1 = arith.constant 0 : i32
    return %c0_i32, %c0_i32_0 : i32, i32
  }
  func.func @transform_8(%arg0: i32, %arg1: i32) -> (i32, i32) {
    %c0_i32 = arith.constant 0 : i32
    %c0_i32_0 = arith.constant 0 : i32
    %c0_i32_1 = arith.constant 0 : i32
    return %c0_i32, %c0_i32_0 : i32, i32
  }
  func.func @transform_9(%arg0: i32, %arg1: i32) -> (i32, i32) {
    %c1_i32 = arith.constant 1 : i32
    %0 = arith.minsi %arg1, %c1_i32 : i32
    %c0_i32 = arith.constant 0 : i32
    %c0_i32_0 = arith.constant 0 : i32
    return %c0_i32, %0 : i32, i32
  }
  func.func @transform_10(%arg0: i32, %arg1: i32) -> (i32, i32) {
    %c1_i32 = arith.constant 1 : i32
    %0 = arith.minsi %arg1, %c1_i32 : i32
    %c0_i32 = arith.constant 0 : i32
    %c0_i32_0 = arith.constant 0 : i32
    return %c0_i32, %0 : i32, i32
  }
  func.func @transform_11(%arg0: i32, %arg1: i32) -> (i32, i32) {
    %c0_i32 = arith.constant 0 : i32
    %c0_i32_0 = arith.constant 0 : i32
    return %c0_i32, %arg1 : i32, i32
  }
  func.func @transform_12(%arg0: i32, %arg1: i32) -> (i32, i32) {
    %c0_i32 = arith.constant 0 : i32
    %c0_i32_0 = arith.constant 0 : i32
    return %c0_i32, %arg1 : i32, i32
  }
  func.func @transform_13(%arg0: i32, %arg1: i32) -> (i32, i32) {
    %c0_i32 = arith.constant 0 : i32
    %0 = arith.minsi %arg1, %c0_i32 : i32
    %c0_i32_0 = arith.constant 0 : i32
    %c0_i32_1 = arith.constant 0 : i32
    return %c0_i32_0, %0 : i32, i32
  }
  func.func @transform_14(%arg0: i32, %arg1: i32) -> (i32, i32) {
    %c0_i32 = arith.constant 0 : i32
    %0 = arith.minsi %arg1, %c0_i32 : i32
    %c0_i32_0 = arith.constant 0 : i32
    %c0_i32_1 = arith.constant 0 : i32
    return %c0_i32_0, %0 : i32, i32
  }
  func.func @transform_15(%arg0: i32, %arg1: i32) -> (i32, i32) {
    %c1_i32 = arith.constant 1 : i32
    %0 = arith.minsi %arg1, %c1_i32 : i32
    %c0_i32 = arith.constant 0 : i32
    return %arg0, %0 : i32, i32
  }
  func.func @transform_16(%arg0: i32, %arg1: i32) -> (i32, i32) {
    %c0_i32 = arith.constant 0 : i32
    return %arg0, %arg1 : i32, i32
  }
  func.func @transform_17(%arg0: i32, %arg1: i32) -> (i32, i32) {
    %c0_i32 = arith.constant 0 : i32
    %0 = arith.minsi %arg1, %c0_i32 : i32
    %c0_i32_0 = arith.constant 0 : i32
    return %arg0, %0 : i32, i32
  }
}

</mosaic_0001>

<llo_original>
// kernel: tpu_custom_call.1
$region0: #{tpu_custom_call.1}
  #allocation0 [shape = 'u32[]', space=smem, size = 0x4, offset = 0x4, fixed_abs, tag = 'smem constant byte address 0x4 - core index']
  #allocation1 [shape = 'u32[144,128]{1,0:T(1,128)}', space=vmem, size = 0x12000, scoped, tag = 'internal scratch']
  #allocation2 [shape = 'bf16[16,512]{1,0:T(8,128)(2,1)}', space=vmem, size = 0x4000, scoped, tag = 'scratch operand']
  #allocation3 [shape = 'bf16[16,512]{1,0:T(8,128)(2,1)}', space=vmem, size = 0x4000, scoped, tag = 'scratch operand']
  #allocation4 [shape = 'bf16[16,256]{1,0:T(8,128)(2,1)}', space=vmem, size = 0x2000, scoped, tag = 'scratch operand']
  %s0 = inlined_call_operand.vmem [shape: f32[48,32], index: 0, kind: input, shape index: {}]
  %s1 = inlined_call_operand.vmem [shape: bf16[32,640], index: 1, kind: input, shape index: {}]
  %s2 = inlined_call_operand.hbm [shape: f32[1,640], index: 2, kind: input, shape index: {}]
  %s3 = inlined_call_operand.hbm [shape: bf16[256,512], index: 3, kind: input, shape index: {}]
  %s4 = inlined_call_operand.vmem [shape: f32[1,512], index: 4, kind: input, shape index: {}]
  %s5 = inlined_call_operand.hbm [shape: bf16[256,512], index: 5, kind: input, shape index: {}]
  %s6 = inlined_call_operand.vmem [shape: f32[1,512], index: 6, kind: input, shape index: {}]
  %s7 = inlined_call_operand.hbm [shape: bf16[128,256], index: 7, kind: input, shape index: {}]
  %s8 = inlined_call_operand.vmem [shape: f32[1,256], index: 8, kind: input, shape index: {}]
  %s9 = inlined_call_operand.hbm [shape: bf16[512,256], index: 9, kind: input, shape index: {}]
  %s10 = inlined_call_operand.vmem [shape: f32[1,256], index: 10, kind: input, shape index: {}]
  %s11 = inlined_call_operand.hbm [shape: bf16[512,384], index: 11, kind: input, shape index: {}]
  %s12 = inlined_call_operand.vmem [shape: f32[1,384], index: 12, kind: input, shape index: {}]
  %s13 = inlined_call_operand.hbm [shape: bf16[256,128], index: 13, kind: input, shape index: {}]
  %s14 = inlined_call_operand.vmem [shape: f32[1,128], index: 14, kind: input, shape index: {}]
  %s15 = inlined_call_operand.hbm [shape: f32[48,256], index: 15, kind: output, shape index: {0}]
  %s16 = inlined_call_operand.hbm [shape: f32[48,384], index: 16, kind: output, shape index: {1}]
  %s17 = inlined_call_operand.hbm [shape: f32[48,128], index: 17, kind: output, shape index: {2}]
  %18 = xla_tuple %s15, %s16, %s17
  %s19 = sld [smem:[#allocation0]]
  $region149: #{tpu_custom_call.1} parent=0
    _
  %s21 = ssub.s32 1, %s19
  %s22 = scalar_select 0, %s21, %s19
  $region1: #{tpu_custom_call.1} parent=0
    #allocation5 [shape = 'u8[2560]{0}', space=vmem, size = 0xc00, scoped, tag = 'input window, operand 2, single buffered']
    #allocation6 [shape = 's32[2]{0}', space=sflag, size = 0x8, scoped, tag = 'scoped memory for tpu_custom_call.1']
    #allocation7 [shape = 's32[2]{0}', space=sflag, size = 0x8, scoped, tag = 'scoped memory for tpu_custom_call.1']
    #allocation8 [shape = 'u8[262144]{0}', space=vmem, size = 0x40000, scoped, tag = 'input window, operand 3, single buffered']
    #allocation9 [shape = 's32[1]{0}', space=sflag, size = 0x4, scoped, tag = 'scoped memory for tpu_custom_call.1']
    #allocation10 [shape = 'u8[262144]{0}', space=vmem, size = 0x40000, scoped, tag = 'input window, operand 5, single buffered']
    #allocation11 [shape = 'u8[65536]{0}', space=vmem, size = 0x10000, scoped, tag = 'input window, operand 7, single buffered']
    #allocation12 [shape = 's32[1]{0}', space=sflag, size = 0x4, scoped, tag = 'scoped memory for tpu_custom_call.1']
    #allocation13 [shape = 'u8[262144]{0}', space=vmem, size = 0x40000, scoped, tag = 'input window, operand 9']
    #allocation14 [shape = 'u8[262144]{0}', space=vmem, size = 0x40000, scoped, tag = 'input window, operand 11']
    #allocation15 [shape = 'u8[131072]{0}', space=vmem, size = 0x20000, scoped, tag = 'input window, operand 13']
    #allocation16 [shape = 'u8[16384]{0}', space=vmem, size = 0x4000, scoped, tag = 'output window, operand 0']
    #allocation17 [shape = 'u8[16384]{0}', space=vmem, size = 0x4000, scoped, tag = 'output window, operand 1']
    #allocation18 [shape = 's32[2]{0}', space=sflag, size = 0x8, scoped, tag = 'scoped memory for tpu_custom_call.1']
    #allocation19 [shape = 'u8[16384]{0}', space=vmem, size = 0x4000, scoped, tag = 'output window, operand 2']
    %23 = vsyncpa [#allocation6], 0
    %24 = vsyncpa [#allocation9], 0
    %25 = vsyncpa [#allocation12], 0
    %26 = vsyncpa [#allocation7], 0
    %s27 = scalar_lea.sflag [#allocation7], 1
    %28 = vsyncpa %s27, 0
    %29 = vsyncpa [#allocation18], 0
    %s30 = scalar_lea.sflag [#allocation18], 1
    %31 = vsyncpa %s30, 0
    loop: start=0, step=1, limit=11
    $region2: #{tpu_custom_call.1} parent=1 // loop_pre_header
      _
    $region3: #{tpu_custom_call.1} parent=1 // loop_header
      %s33 = sphi 0, %s37
      %p34 = scmp.ge.s32.totalorder %s33, 11
      %s40 = sphi 0, %s52
      %s41 = sphi 0, %s48
      %s42 = sphi 0, %s40
      %s43 = sphi 0, %s41
      %s44 = sphi 0, %s42
      %s45 = sphi 0, %s43
      %s55 = sphi 0, %s57
      %s58 = sphi 0, %s55
      %s59 = sphi 0, %s58
      %s75 = sphi 0, %s59
      %s79 = sphi 0, %s79
      %s81 = sphi 0, %s79
      %s82 = sphi 0, %s81
      %s96 = sphi 0, %s82
      %s100 = sphi 0, %s100
      %s102 = sphi 0, %s100
      %s103 = sphi 0, %s102
      %s117 = sphi 0, %s103
      %s121 = sphi 0, %s121
      %s123 = sphi 0, %s121
      %s124 = sphi 0, %s123
      %s138 = sphi 0, %s124
      %s142 = sphi 0, %s142
      %s144 = sphi 0, %s142
      %s145 = sphi 0, %s144
      %s159 = sphi 0, %s145
      %s163 = sphi 0, %s163
      %s165 = sphi 0, %s163
      %s166 = sphi 0, %s165
      %s180 = sphi 0, %s166
      %s184 = sphi 0, %s184
      %s186 = sphi 0, %s184
      %s187 = sphi 0, %s186
      %s201 = sphi 0, %s187
      %s205 = sphi 0, %s205
      %s207 = sphi 0, %s205
      %s208 = sphi 0, %s207
      %s222 = sphi 0, %s208
      %s226 = sphi 0, %s226
      %s228 = sphi 0, %s226
      %s229 = sphi 0, %s228
      %s243 = sphi 0, %s229
      %s253 = sphi 0, %s255
      %s256 = sphi 0, %s253
      %s257 = sphi 0, %s256
      %s273 = sphi 0, %s257
      %s283 = sphi 0, %s285
      %s286 = sphi 0, %s283
      %s287 = sphi 0, %s286
      %s303 = sphi 0, %s287
      %s309 = sphi 0, %s311
      %s312 = sphi 0, %s309
      %s313 = sphi 0, %s312
      %s329 = sphi 0, %s313
      %s335 = sphi 0, %s337
      %s338 = sphi 0, %s335
      %s339 = sphi 0, %s338
      %s355 = sphi 0, %s339
      %s365 = sphi 0, %s367
      %s368 = sphi 0, %s365
      %s369 = sphi 0, %s368
      %s385 = sphi 0, %s369
      %s395 = sphi 0, %s397
      %s398 = sphi 0, %s395
      %s399 = sphi 0, %s398
      %s415 = sphi 0, %s399
      %s427 = sphi 0, %s429
      %s430 = sphi 0, %s427
      %s431 = sphi 0, %s430
      %s447 = sphi 0, %s431
      %s455 = sphi 0, %s457
      %s458 = sphi 0, %s455
      %s459 = sphi 0, %s458
      %s475 = sphi 0, %s459
      %s487 = sphi 0, %s489
      %s490 = sphi 0, %s487
      %s491 = sphi 0, %s490
      %s507 = sphi 0, %s491
    $region4: #{tpu_custom_call.1} parent=1 // loop_header_branch
      %36 = sbr.rel (%p34) target = $region8
    $region5: #{tpu_custom_call.1} parent=1 // loop_body
      %s38 = ssub.s32 %s33, 1
      %s39 = ssub.s32 %s33, 2
      %s46 = sadd.s32 1, %s41
      %p47 = scmp.ge.s32.totalorder %s46, 3
      %s48 = scalar_select %p47, 0, %s46
      %s49 = sadd.s32 1, %s40
      %s50 = scalar_select %p47, %s49, %s40
      %p51 = scmp.ge.s32.totalorder %s50, 3
      %s52 = scalar_select %p51, 0, %s50
      %s53 = ssub.s32 %s40, %s52
      %p54 = scmp.eq.s32.totalorder %s53, 0
      %s56 = sadd.s32 %s55, 1
      %s57 = scalar_select %p54, %s55, %s56
      %p60 = pneg %p54
      %p61 = scmp.eq.s32.totalorder %s33, 8
      %p62 = por %p60, %p61
      %p63 = scmp.ne.s32.totalorder %s55, %s58
      %p64 = scmp.eq.s32.totalorder %s33, 0
      %p65 = por %p63, %p64
      %p66 = scmp.ne.s32.totalorder %s55, %s58
      %p67 = scmp.eq.s32.totalorder %s38, 8
      %p68 = por %p66, %p67
      %p69 = scmp.ne.s32.totalorder %s58, %s59
      %p70 = scmp.eq.s32.totalorder %s38, 0
      %p71 = por %p69, %p70
      %p72 = scmp.ne.s32.totalorder %s58, %s59
      %p73 = scmp.eq.s32.totalorder %s39, 8
      %p74 = por %p72, %p73
      %p76 = scmp.ne.s32.totalorder %s59, %s75
      %p77 = scmp.eq.s32.totalorder %s39, 0
      %p78 = por %p76, %p77
      %s80 = sadd.s32 %s79, 1
      %p83 = scmp.eq.s32.totalorder %s33, 8
      %p84 = scmp.ne.s32.totalorder %s79, %s81
      %p85 = scmp.eq.s32.totalorder %s33, 0
      %p86 = por %p84, %p85
      %p87 = scmp.ne.s32.totalorder %s79, %s81
      %p88 = scmp.eq.s32.totalorder %s38, 8
      %p89 = por %p87, %p88
      %p90 = scmp.ne.s32.totalorder %s81, %s82
      %p91 = scmp.eq.s32.totalorder %s38, 0
      %p92 = por %p90, %p91
      %p93 = scmp.ne.s32.totalorder %s81, %s82
      %p94 = scmp.eq.s32.totalorder %s39, 8
      %p95 = por %p93, %p94
      %p97 = scmp.ne.s32.totalorder %s82, %s96
      %p98 = scmp.eq.s32.totalorder %s39, 0
      %p99 = por %p97, %p98
      %s101 = sadd.s32 %s100, 1
      %p104 = scmp.eq.s32.totalorder %s33, 8
      %p105 = scmp.ne.s32.totalorder %s100, %s102
      %p106 = scmp.eq.s32.totalorder %s33, 0
      %p107 = por %p105, %p106
      %p108 = scmp.ne.s32.totalorder %s100, %s102
      %p109 = scmp.eq.s32.totalorder %s38, 8
      %p110 = por %p108, %p109
      %p111 = scmp.ne.s32.totalorder %s102, %s103
      %p112 = scmp.eq.s32.totalorder %s38, 0
      %p113 = por %p111, %p112
      %p114 = scmp.ne.s32.totalorder %s102, %s103
      %p115 = scmp.eq.s32.totalorder %s39, 8
      %p116 = por %p114, %p115
      %p118 = scmp.ne.s32.totalorder %s103, %s117
      %p119 = scmp.eq.s32.totalorder %s39, 0
      %p120 = por %p118, %p119
      %s122 = sadd.s32 %s121, 1
      %p125 = scmp.eq.s32.totalorder %s33, 8
      %p126 = scmp.ne.s32.totalorder %s121, %s123
      %p127 = scmp.eq.s32.totalorder %s33, 0
      %p128 = por %p126, %p127
      %p129 = scmp.ne.s32.totalorder %s121, %s123
      %p130 = scmp.eq.s32.totalorder %s38, 8
      %p131 = por %p129, %p130
      %p132 = scmp.ne.s32.totalorder %s123, %s124
      %p133 = scmp.eq.s32.totalorder %s38, 0
      %p134 = por %p132, %p133
      %p135 = scmp.ne.s32.totalorder %s123, %s124
      %p136 = scmp.eq.s32.totalorder %s39, 8
      %p137 = por %p135, %p136
      %p139 = scmp.ne.s32.totalorder %s124, %s138
      %p140 = scmp.eq.s32.totalorder %s39, 0
      %p141 = por %p139, %p140
      %s143 = sadd.s32 %s142, 1
      %p146 = scmp.eq.s32.totalorder %s33, 8
      %p147 = scmp.ne.s32.totalorder %s142, %s144
      %p148 = scmp.eq.s32.totalorder %s33, 0
      %p149 = por %p147, %p148
      %p150 = scmp.ne.s32.totalorder %s142, %s144
      %p151 = scmp.eq.s32.totalorder %s38, 8
      %p152 = por %p150, %p151
      %p153 = scmp.ne.s32.totalorder %s144, %s145
      %p154 = scmp.eq.s32.totalorder %s38, 0
      %p155 = por %p153, %p154
      %p156 = scmp.ne.s32.totalorder %s144, %s145
      %p157 = scmp.eq.s32.totalorder %s39, 8
      %p158 = por %p156, %p157
      %p160 = scmp.ne.s32.totalorder %s145, %s159
      %p161 = scmp.eq.s32.totalorder %s39, 0
      %p162 = por %p160, %p161
      %s164 = sadd.s32 %s163, 1
      %p167 = scmp.eq.s32.totalorder %s33, 8
      %p168 = scmp.ne.s32.totalorder %s163, %s165
      %p169 = scmp.eq.s32.totalorder %s33, 0
      %p170 = por %p168, %p169
      %p171 = scmp.ne.s32.totalorder %s163, %s165
      %p172 = scmp.eq.s32.totalorder %s38, 8
      %p173 = por %p171, %p172
      %p174 = scmp.ne.s32.totalorder %s165, %s166
      %p175 = scmp.eq.s32.totalorder %s38, 0
      %p176 = por %p174, %p175
      %p177 = scmp.ne.s32.totalorder %s165, %s166
      %p178 = scmp.eq.s32.totalorder %s39, 8
      %p179 = por %p177, %p178
      %p181 = scmp.ne.s32.totalorder %s166, %s180
      %p182 = scmp.eq.s32.totalorder %s39, 0
      %p183 = por %p181, %p182
      %s185 = sadd.s32 %s184, 1
      %p188 = scmp.eq.s32.totalorder %s33, 8
      %p189 = scmp.ne.s32.totalorder %s184, %s186
      %p190 = scmp.eq.s32.totalorder %s33, 0
      %p191 = por %p189, %p190
      %p192 = scmp.ne.s32.totalorder %s184, %s186
      %p193 = scmp.eq.s32.totalorder %s38, 8
      %p194 = por %p192, %p193
      %p195 = scmp.ne.s32.totalorder %s186, %s187
      %p196 = scmp.eq.s32.totalorder %s38, 0
      %p197 = por %p195, %p196
      %p198 = scmp.ne.s32.totalorder %s186, %s187
      %p199 = scmp.eq.s32.totalorder %s39, 8
      %p200 = por %p198, %p199
      %p202 = scmp.ne.s32.totalorder %s187, %s201
      %p203 = scmp.eq.s32.totalorder %s39, 0
      %p204 = por %p202, %p203
      %s206 = sadd.s32 %s205, 1
      %p209 = scmp.eq.s32.totalorder %s33, 8
      %p210 = scmp.ne.s32.totalorder %s205, %s207
      %p211 = scmp.eq.s32.totalorder %s33, 0
      %p212 = por %p210, %p211
      %p213 = scmp.ne.s32.totalorder %s205, %s207
      %p214 = scmp.eq.s32.totalorder %s38, 8
      %p215 = por %p213, %p214
      %p216 = scmp.ne.s32.totalorder %s207, %s208
      %p217 = scmp.eq.s32.totalorder %s38, 0
      %p218 = por %p216, %p217
      %p219 = scmp.ne.s32.totalorder %s207, %s208
      %p220 = scmp.eq.s32.totalorder %s39, 8
      %p221 = por %p219, %p220
      %p223 = scmp.ne.s32.totalorder %s208, %s222
      %p224 = scmp.eq.s32.totalorder %s39, 0
      %p225 = por %p223, %p224
      %s227 = sadd.s32 %s226, 1
      %p230 = scmp.eq.s32.totalorder %s33, 8
      %p231 = scmp.ne.s32.totalorder %s226, %s228
      %p232 = scmp.eq.s32.totalorder %s33, 0
      %p233 = por %p231, %p232
      %p234 = scmp.ne.s32.totalorder %s226, %s228
      %p235 = scmp.eq.s32.totalorder %s38, 8
      %p236 = por %p234, %p235
      %p237 = scmp.ne.s32.totalorder %s228, %s229
      %p238 = scmp.eq.s32.totalorder %s38, 0
      %p239 = por %p237, %p238
      %p240 = scmp.ne.s32.totalorder %s228, %s229
      %p241 = scmp.eq.s32.totalorder %s39, 8
      %p242 = por %p240, %p241
      %p244 = scmp.ne.s32.totalorder %s229, %s243
      %p245 = scmp.eq.s32.totalorder %s39, 0
      %p246 = por %p244, %p245
      %p247 = scmp.lt.s32.totalorder %s41, 1
      %s248 = scalar_select %p247, %s41, 1
      %p249 = scmp.lt.s32.totalorder %s48, 1
      %s250 = scalar_select %p249, %s48, 1
      %s251 = ssub.s32 %s248, %s250
      %p252 = scmp.eq.s32.totalorder %s251, 0
      %s254 = sadd.s32 %s253, 1
      %s255 = scalar_select %p252, %s253, %s254
      %p258 = pneg %p252
      %p259 = scmp.eq.s32.totalorder %s33, 8
      %p260 = por %p258, %p259
      %p261 = scmp.ne.s32.totalorder %s253, %s256
      %p262 = scmp.eq.s32.totalorder %s33, 0
      %p263 = por %p261, %p262
      %p264 = scmp.ne.s32.totalorder %s253, %s256
      %p265 = scmp.eq.s32.totalorder %s38, 8
      %p266 = por %p264, %p265
      %p267 = scmp.ne.s32.totalorder %s256, %s257
      %p268 = scmp.eq.s32.totalorder %s38, 0
      %p269 = por %p267, %p268
      %p270 = scmp.ne.s32.totalorder %s256, %s257
      %p271 = scmp.eq.s32.totalorder %s39, 8
      %p272 = por %p270, %p271
      %p274 = scmp.ne.s32.totalorder %s257, %s273
      %p275 = scmp.eq.s32.totalorder %s39, 0
      %p276 = por %p274, %p275
      %p277 = scmp.lt.s32.totalorder %s41, 1
      %s278 = scalar_select %p277, %s41, 1
      %p279 = scmp.lt.s32.totalorder %s48, 1
      %s280 = scalar_select %p279, %s48, 1
      %s281 = ssub.s32 %s278, %s280
      %p282 = scmp.eq.s32.totalorder %s281, 0
      %s284 = sadd.s32 %s283, 1
      %s285 = scalar_select %p282, %s283, %s284
      %p288 = pneg %p282
      %p289 = scmp.eq.s32.totalorder %s33, 8
      %p290 = por %p288, %p289
      %p291 = scmp.ne.s32.totalorder %s283, %s286
      %p292 = scmp.eq.s32.totalorder %s33, 0
      %p293 = por %p291, %p292
      %p294 = scmp.ne.s32.totalorder %s283, %s286
      %p295 = scmp.eq.s32.totalorder %s38, 8
      %p296 = por %p294, %p295
      %p297 = scmp.ne.s32.totalorder %s286, %s287
      %p298 = scmp.eq.s32.totalorder %s38, 0
      %p299 = por %p297, %p298
      %p300 = scmp.ne.s32.totalorder %s286, %s287
      %p301 = scmp.eq.s32.totalorder %s39, 8
      %p302 = por %p300, %p301
      %p304 = scmp.ne.s32.totalorder %s287, %s303
      %p305 = scmp.eq.s32.totalorder %s39, 0
      %p306 = por %p304, %p305
      %s307 = ssub.s32 %s41, %s48
      %p308 = scmp.eq.s32.totalorder %s307, 0
      %s310 = sadd.s32 %s309, 1
      %s311 = scalar_select %p308, %s309, %s310
      %p314 = pneg %p308
      %p315 = scmp.eq.s32.totalorder %s33, 8
      %p316 = por %p314, %p315
      %p317 = scmp.ne.s32.totalorder %s309, %s312
      %p318 = scmp.eq.s32.totalorder %s33, 0
      %p319 = por %p317, %p318
      %p320 = scmp.ne.s32.totalorder %s309, %s312
      %p321 = scmp.eq.s32.totalorder %s38, 8
      %p322 = por %p320, %p321
      %p323 = scmp.ne.s32.totalorder %s312, %s313
      %p324 = scmp.eq.s32.totalorder %s38, 0
      %p325 = por %p323, %p324
      %p326 = scmp.ne.s32.totalorder %s312, %s313
      %p327 = scmp.eq.s32.totalorder %s39, 8
      %p328 = por %p326, %p327
      %p330 = scmp.ne.s32.totalorder %s313, %s329
      %p331 = scmp.eq.s32.totalorder %s39, 0
      %p332 = por %p330, %p331
      %s333 = ssub.s32 %s41, %s48
      %p334 = scmp.eq.s32.totalorder %s333, 0
      %s336 = sadd.s32 %s335, 1
      %s337 = scalar_select %p334, %s335, %s336
      %p340 = pneg %p334
      %p341 = scmp.eq.s32.totalorder %s33, 8
      %p342 = por %p340, %p341
      %p343 = scmp.ne.s32.totalorder %s335, %s338
      %p344 = scmp.eq.s32.totalorder %s33, 0
      %p345 = por %p343, %p344
      %p346 = scmp.ne.s32.totalorder %s335, %s338
      %p347 = scmp.eq.s32.totalorder %s38, 8
      %p348 = por %p346, %p347
      %p349 = scmp.ne.s32.totalorder %s338, %s339
      %p350 = scmp.eq.s32.totalorder %s38, 0
      %p351 = por %p349, %p350
      %p352 = scmp.ne.s32.totalorder %s338, %s339
      %p353 = scmp.eq.s32.totalorder %s39, 8
      %p354 = por %p352, %p353
      %p356 = scmp.ne.s32.totalorder %s339, %s355
      %p357 = scmp.eq.s32.totalorder %s39, 0
      %p358 = por %p356, %p357
      %p359 = scmp.lt.s32.totalorder %s41, 0
      %s360 = scalar_select %p359, %s41, 0
      %p361 = scmp.lt.s32.totalorder %s48, 0
      %s362 = scalar_select %p361, %s48, 0
      %s363 = ssub.s32 %s360, %s362
      %p364 = scmp.eq.s32.totalorder %s363, 0
      %s366 = sadd.s32 %s365, 1
      %s367 = scalar_select %p364, %s365, %s366
      %p370 = pneg %p364
      %p371 = scmp.eq.s32.totalorder %s33, 8
      %p372 = por %p370, %p371
      %p373 = scmp.ne.s32.totalorder %s365, %s368
      %p374 = scmp.eq.s32.totalorder %s33, 0
      %p375 = por %p373, %p374
      %p376 = scmp.ne.s32.totalorder %s365, %s368
      %p377 = scmp.eq.s32.totalorder %s38, 8
      %p378 = por %p376, %p377
      %p379 = scmp.ne.s32.totalorder %s368, %s369
      %p380 = scmp.eq.s32.totalorder %s38, 0
      %p381 = por %p379, %p380
      %p382 = scmp.ne.s32.totalorder %s368, %s369
      %p383 = scmp.eq.s32.totalorder %s39, 8
      %p384 = por %p382, %p383
      %p386 = scmp.ne.s32.totalorder %s369, %s385
      %p387 = scmp.eq.s32.totalorder %s39, 0
      %p388 = por %p386, %p387
      %p389 = scmp.lt.s32.totalorder %s41, 0
      %s390 = scalar_select %p389, %s41, 0
      %p391 = scmp.lt.s32.totalorder %s48, 0
      %s392 = scalar_select %p391, %s48, 0
      %s393 = ssub.s32 %s390, %s392
      %p394 = scmp.eq.s32.totalorder %s393, 0
      %s396 = sadd.s32 %s395, 1
      %s397 = scalar_select %p394, %s395, %s396
      %p400 = pneg %p394
      %p401 = scmp.eq.s32.totalorder %s33, 8
      %p402 = por %p400, %p401
      %p403 = scmp.ne.s32.totalorder %s395, %s398
      %p404 = scmp.eq.s32.totalorder %s33, 0
      %p405 = por %p403, %p404
      %p406 = scmp.ne.s32.totalorder %s395, %s398
      %p407 = scmp.eq.s32.totalorder %s38, 8
      %p408 = por %p406, %p407
      %p409 = scmp.ne.s32.totalorder %s398, %s399
      %p410 = scmp.eq.s32.totalorder %s38, 0
      %p411 = por %p409, %p410
      %p412 = scmp.ne.s32.totalorder %s398, %s399
      %p413 = scmp.eq.s32.totalorder %s39, 8
      %p414 = por %p412, %p413
      %p416 = scmp.ne.s32.totalorder %s399, %s415
      %p417 = scmp.eq.s32.totalorder %s39, 0
      %p418 = por %p416, %p417
      %p419 = scmp.lt.s32.totalorder %s41, 1
      %s420 = scalar_select %p419, %s41, 1
      %p421 = scmp.lt.s32.totalorder %s48, 1
      %s422 = scalar_select %p421, %s48, 1
      %s423 = ssub.s32 %s40, %s52
      %s424 = ssub.s32 %s420, %s422
      %s425 = sor.u32 %s423, %s424
      %p426 = scmp.eq.s32.totalorder %s425, 0
      %s428 = sadd.s32 %s427, 1
      %s429 = scalar_select %p426, %s427, %s428
      %p432 = pneg %p426
      %p433 = scmp.eq.s32.totalorder %s33, 8
      %p434 = por %p432, %p433
      %p435 = scmp.ne.s32.totalorder %s427, %s430
      %p436 = scmp.eq.s32.totalorder %s33, 0
      %p437 = por %p435, %p436
      %p438 = scmp.ne.s32.totalorder %s427, %s430
      %p439 = scmp.eq.s32.totalorder %s38, 8
      %p440 = por %p438, %p439
      %p441 = scmp.ne.s32.totalorder %s430, %s431
      %p442 = scmp.eq.s32.totalorder %s38, 0
      %p443 = por %p441, %p442
      %p444 = scmp.ne.s32.totalorder %s430, %s431
      %p445 = scmp.eq.s32.totalorder %s39, 8
      %p446 = por %p444, %p445
      %p448 = scmp.ne.s32.totalorder %s431, %s447
      %p449 = scmp.eq.s32.totalorder %s39, 0
      %p450 = por %p448, %p449
      %s451 = ssub.s32 %s40, %s52
      %s452 = ssub.s32 %s41, %s48
      %s453 = sor.u32 %s451, %s452
      %p454 = scmp.eq.s32.totalorder %s453, 0
      %s456 = sadd.s32 %s455, 1
      %s457 = scalar_select %p454, %s455, %s456
      %p460 = pneg %p454
      %p461 = scmp.eq.s32.totalorder %s33, 8
      %p462 = por %p460, %p461
      %p463 = scmp.ne.s32.totalorder %s455, %s458
      %p464 = scmp.eq.s32.totalorder %s33, 0
      %p465 = por %p463, %p464
      %p466 = scmp.ne.s32.totalorder %s455, %s458
      %p467 = scmp.eq.s32.totalorder %s38, 8
      %p468 = por %p466, %p467
      %p469 = scmp.ne.s32.totalorder %s458, %s459
      %p470 = scmp.eq.s32.totalorder %s38, 0
      %p471 = por %p469, %p470
      %p472 = scmp.ne.s32.totalorder %s458, %s459
      %p473 = scmp.eq.s32.totalorder %s39, 8
      %p474 = por %p472, %p473
      %p476 = scmp.ne.s32.totalorder %s459, %s475
      %p477 = scmp.eq.s32.totalorder %s39, 0
      %p478 = por %p476, %p477
      %p479 = scmp.lt.s32.totalorder %s41, 0
      %s480 = scalar_select %p479, %s41, 0
      %p481 = scmp.lt.s32.totalorder %s48, 0
      %s482 = scalar_select %p481, %s48, 0
      %s483 = ssub.s32 %s40, %s52
      %s484 = ssub.s32 %s480, %s482
      %s485 = sor.u32 %s483, %s484
      %p486 = scmp.eq.s32.totalorder %s485, 0
      %s488 = sadd.s32 %s487, 1
      %s489 = scalar_select %p486, %s487, %s488
      %p492 = pneg %p486
      %p493 = scmp.eq.s32.totalorder %s33, 8
      %p494 = por %p492, %p493
      %p495 = scmp.ne.s32.totalorder %s487, %s490
      %p496 = scmp.eq.s32.totalorder %s33, 0
      %p497 = por %p495, %p496
      %p498 = scmp.ne.s32.totalorder %s487, %s490
      %p499 = scmp.eq.s32.totalorder %s38, 8
      %p500 = por %p498, %p499
      %p501 = scmp.ne.s32.totalorder %s490, %s491
      %p502 = scmp.eq.s32.totalorder %s38, 0
      %p503 = por %p501, %p502
      %p504 = scmp.ne.s32.totalorder %s490, %s491
      %p505 = scmp.eq.s32.totalorder %s39, 8
      %p506 = por %p504, %p505
      %p508 = scmp.ne.s32.totalorder %s491, %s507
      %p509 = scmp.eq.s32.totalorder %s39, 0
      %p510 = por %p508, %p509
      %p511 = scmp.le.s32.totalorder 1, %s33
      %p512 = scmp.lt.s32.totalorder %s33, 10
      %p513 = pnand %p511, %p512
      %p514 = pneg %p513
      // Predicated region
      $region9: #{tpu_custom_call.1} parent=5 // pred_check
        _
      $region10: #{tpu_custom_call.1} parent=5 // pred_check_branch
        %516 = sbr.rel (%p513) target = $region12
      $region11: #{tpu_custom_call.1} parent=5 // pred_region
        %s517 = ssub.s32 %s33, 1
        // Predicated region
        $region13: #{tpu_custom_call.1} parent=11 // pred_check
          %p518 = pneg %p92
        $region14: #{tpu_custom_call.1} parent=11 // pred_check_branch
          %520 = sbr.rel (%p518) target = $region16
        $region15: #{tpu_custom_call.1} parent=11 // pred_region
          _
        $region16: #{tpu_custom_call.1} parent=11 // pred_fallthru
          _
        // Predicated region
        $region17: #{tpu_custom_call.1} parent=11 // pred_check
          %p521 = pneg %p113
        $region18: #{tpu_custom_call.1} parent=11 // pred_check_branch
          %523 = sbr.rel (%p521) target = $region20
        $region19: #{tpu_custom_call.1} parent=11 // pred_region
          %s525 = ssub.s32 80, 80
          %526 = vsyncadd [#allocation6], %s525
          %s528 = sshll.u32 [#allocation5], 4
          %s529 = int_to_ptr.vmem [resolvable:$true] %s528
          %531 = dma.hbm_to_vmem [thread:$0]  %s2, 80, %s529, [#allocation6]
        $region20: #{tpu_custom_call.1} parent=11 // pred_fallthru
          _
        // Predicated region
        $region21: #{tpu_custom_call.1} parent=11 // pred_check
          %p532 = pneg %p134
        $region22: #{tpu_custom_call.1} parent=11 // pred_check_branch
          %534 = sbr.rel (%p532) target = $region24
        $region23: #{tpu_custom_call.1} parent=11 // pred_region
          %s536 = ssub.s32 8192, 8192
          %537 = vsyncadd [#allocation9], %s536
          %s538 = sshll.u32 [#allocation8], 4
          %s539 = int_to_ptr.vmem [resolvable:$true] %s538
          %544 = dma.hbm_to_vmem [thread:$0]  %s3, 8192, %s539, [#allocation9], 256, 256, 16
        $region24: #{tpu_custom_call.1} parent=11 // pred_fallthru
          _
        // Predicated region
        $region25: #{tpu_custom_call.1} parent=11 // pred_check
          %p545 = pneg %p155
        $region26: #{tpu_custom_call.1} parent=11 // pred_check_branch
          %547 = sbr.rel (%p545) target = $region28
        $region27: #{tpu_custom_call.1} parent=11 // pred_region
          _
        $region28: #{tpu_custom_call.1} parent=11 // pred_fallthru
          _
        // Predicated region
        $region29: #{tpu_custom_call.1} parent=11 // pred_check
          %p548 = pneg %p176
        $region30: #{tpu_custom_call.1} parent=11 // pred_check_branch
          %550 = sbr.rel (%p548) target = $region32
        $region31: #{tpu_custom_call.1} parent=11 // pred_region
          %s552 = ssub.s32 8192, 8192
          %553 = vsyncadd [#allocation9], %s552
          %s554 = sshll.u32 [#allocation10], 4
          %s555 = int_to_ptr.vmem [resolvable:$true] %s554
          %560 = dma.hbm_to_vmem [thread:$0]  %s5, 8192, %s555, [#allocation9], 256, 256, 16
        $region32: #{tpu_custom_call.1} parent=11 // pred_fallthru
          _
        // Predicated region
        $region33: #{tpu_custom_call.1} parent=11 // pred_check
          %p561 = pneg %p197
        $region34: #{tpu_custom_call.1} parent=11 // pred_check_branch
          %563 = sbr.rel (%p561) target = $region36
        $region35: #{tpu_custom_call.1} parent=11 // pred_region
          _
        $region36: #{tpu_custom_call.1} parent=11 // pred_fallthru
          _
        // Predicated region
        $region37: #{tpu_custom_call.1} parent=11 // pred_check
          %p564 = pneg %p218
        $region38: #{tpu_custom_call.1} parent=11 // pred_check_branch
          %566 = sbr.rel (%p564) target = $region40
        $region39: #{tpu_custom_call.1} parent=11 // pred_region
          %s568 = ssub.s32 2048, 2048
          %569 = vsyncadd [#allocation12], %s568
          %s570 = sshll.u32 [#allocation11], 4
          %s571 = int_to_ptr.vmem [resolvable:$true] %s570
          %576 = dma.hbm_to_vmem [thread:$0]  %s7, 2048, %s571, [#allocation12], 128, 128, 8
        $region40: #{tpu_custom_call.1} parent=11 // pred_fallthru
          _
        // Predicated region
        $region41: #{tpu_custom_call.1} parent=11 // pred_check
          %p577 = pneg %p239
        $region42: #{tpu_custom_call.1} parent=11 // pred_check_branch
          %579 = sbr.rel (%p577) target = $region44
        $region43: #{tpu_custom_call.1} parent=11 // pred_region
          _
        $region44: #{tpu_custom_call.1} parent=11 // pred_fallthru
          _
      $region12: #{tpu_custom_call.1} parent=5 // pred_fallthru
        _
      %p580 = scmp.lt.s32.totalorder %s33, 9
      // Predicated region
      $region45: #{tpu_custom_call.1} parent=5 // pred_check
        %p581 = pneg %p580
      $region46: #{tpu_custom_call.1} parent=5 // pred_check_branch
        %583 = sbr.rel (%p581) target = $region48
      $region47: #{tpu_custom_call.1} parent=5 // pred_region
        // Predicated region
        $region49: #{tpu_custom_call.1} parent=47 // pred_check
          %p584 = pneg %p65
        $region50: #{tpu_custom_call.1} parent=47 // pred_check_branch
          %586 = sbr.rel (%p584) target = $region52
        $region51: #{tpu_custom_call.1} parent=47 // pred_region
          %s587 = smul.u32 2, %s40
          %p588 = scmp.lt.s32.totalorder %s587, 5
          %s589 = scalar_select %p588, %s587, 5
          %s590 = smul.addr %s589, 8
          %s591 = scalar_lea.vmem %s0, %s590
          %s592 = smul.u32 2, %s40
        $region52: #{tpu_custom_call.1} parent=47 // pred_fallthru
          _
        // Predicated region
        $region53: #{tpu_custom_call.1} parent=47 // pred_check
          %p593 = pneg %p263
        $region54: #{tpu_custom_call.1} parent=47 // pred_check_branch
          %595 = sbr.rel (%p593) target = $region56
        $region55: #{tpu_custom_call.1} parent=47 // pred_region
          %s596 = sand.u32 %s33, 1
          %s597 = scalar_lea.sflag [#allocation6], %s596
          %s598 = sand.u32 %s253, 1
          %s599 = smul.addr %s598, 256
          %s600 = scalar_lea.vmem [#allocation13], %s599
          %p601 = scmp.lt.s32.totalorder %s41, 1
          %s602 = scalar_select %p601, %s41, 1
          %s604 = ssub.s32 4096, 4096
          %605 = vsyncadd %s597, %s604
          %s606 = smul.addr %s602, 64
          %s607 = scalar_lea.hbm %s9, %s606
          %s608 = sshll.u32 %s600, 4
          %s609 = int_to_ptr.vmem [resolvable:$true] %s608
          %614 = dma.hbm_to_vmem [thread:$0]  %s607, 4096, %s609, %s597, 128, 64, 4
        $region56: #{tpu_custom_call.1} parent=47 // pred_fallthru
          _
        // Predicated region
        $region57: #{tpu_custom_call.1} parent=47 // pred_check
          %p615 = pneg %p293
        $region58: #{tpu_custom_call.1} parent=47 // pred_check_branch
          %617 = sbr.rel (%p615) target = $region60
        $region59: #{tpu_custom_call.1} parent=47 // pred_region
          %p618 = scmp.lt.s32.totalorder %s41, 1
          %s619 = scalar_select %p618, %s41, 1
          %p620 = scmp.lt.s32.totalorder %s619, 1
          %s621 = scalar_select %p620, %s619, 1
          %s622 = scalar_lea.vmem %s10, %s621
          %p623 = scmp.lt.s32.totalorder %s41, 1
          %s624 = scalar_select %p623, %s41, 1
        $region60: #{tpu_custom_call.1} parent=47 // pred_fallthru
          _
        // Predicated region
        $region61: #{tpu_custom_call.1} parent=47 // pred_check
          %p625 = pneg %p319
        $region62: #{tpu_custom_call.1} parent=47 // pred_check_branch
          %627 = sbr.rel (%p625) target = $region64
        $region63: #{tpu_custom_call.1} parent=47 // pred_region
          %s628 = sand.u32 %s33, 1
          %s629 = scalar_lea.sflag [#allocation6], %s628
          %s630 = sand.u32 %s309, 1
          %s631 = smul.addr %s630, 256
          %s632 = scalar_lea.vmem [#allocation14], %s631
          %s634 = ssub.s32 4096, 4096
          %635 = vsyncadd %s629, %s634
          %s636 = smul.addr %s41, 64
          %s637 = scalar_lea.hbm %s11, %s636
          %s638 = sshll.u32 %s632, 4
          %s639 = int_to_ptr.vmem [resolvable:$true] %s638
          %644 = dma.hbm_to_vmem [thread:$0]  %s637, 4096, %s639, %s629, 192, 64, 4
        $region64: #{tpu_custom_call.1} parent=47 // pred_fallthru
          _
        // Predicated region
        $region65: #{tpu_custom_call.1} parent=47 // pred_check
          %p645 = pneg %p345
        $region66: #{tpu_custom_call.1} parent=47 // pred_check_branch
          %647 = sbr.rel (%p645) target = $region68
        $region67: #{tpu_custom_call.1} parent=47 // pred_region
          %p648 = scmp.lt.s32.totalorder %s41, 2
          %s649 = scalar_select %p648, %s41, 2
          %s650 = scalar_lea.vmem %s12, %s649
        $region68: #{tpu_custom_call.1} parent=47 // pred_fallthru
          _
        // Predicated region
        $region69: #{tpu_custom_call.1} parent=47 // pred_check
          %p651 = pneg %p375
        $region70: #{tpu_custom_call.1} parent=47 // pred_check_branch
          %653 = sbr.rel (%p651) target = $region72
        $region71: #{tpu_custom_call.1} parent=47 // pred_region
          %s654 = sand.u32 %s33, 1
          %s655 = scalar_lea.sflag [#allocation6], %s654
          %s656 = sand.u32 %s365, 1
          %s657 = smul.addr %s656, 128
          %s658 = scalar_lea.vmem [#allocation15], %s657
          %p659 = scmp.lt.s32.totalorder %s41, 0
          %s660 = scalar_select %p659, %s41, 0
          %s662 = ssub.s32 2048, 2048
          %663 = vsyncadd %s655, %s662
          %s664 = smul.addr %s660, 64
          %s665 = scalar_lea.hbm %s13, %s664
          %s666 = sshll.u32 %s658, 4
          %s667 = int_to_ptr.vmem [resolvable:$true] %s666
          %672 = dma.hbm_to_vmem [thread:$0]  %s665, 2048, %s667, %s655, 64, 64, 4
        $region72: #{tpu_custom_call.1} parent=47 // pred_fallthru
          _
        // Predicated region
        $region73: #{tpu_custom_call.1} parent=47 // pred_check
          %p673 = pneg %p405
        $region74: #{tpu_custom_call.1} parent=47 // pred_check_branch
          %675 = sbr.rel (%p673) target = $region76
        $region75: #{tpu_custom_call.1} parent=47 // pred_region
          %p676 = scmp.lt.s32.totalorder %s41, 0
          %s677 = scalar_select %p676, %s41, 0
          %p678 = scmp.lt.s32.totalorder %s677, 0
          %s679 = scalar_select %p678, %s677, 0
          %s680 = scalar_lea.vmem %s14, %s679
          %p681 = scmp.lt.s32.totalorder %s41, 0
          %s682 = scalar_select %p681, %s41, 0
        $region76: #{tpu_custom_call.1} parent=47 // pred_fallthru
          _
      $region48: #{tpu_custom_call.1} parent=5 // pred_fallthru
        _
      %p683 = scmp.le.s32.totalorder 1, %s33
      %p684 = scmp.lt.s32.totalorder %s33, 10
      %p685 = pnand %p683, %p684
      %p686 = pneg %p685
      // Predicated region
      $region77: #{tpu_custom_call.1} parent=5 // pred_check
        _
      $region78: #{tpu_custom_call.1} parent=5 // pred_check_branch
        %688 = sbr.rel (%p685) target = $region80
      $region79: #{tpu_custom_call.1} parent=5 // pred_region
        %s689 = ssub.s32 %s33, 1
        // Predicated region
        $region81: #{tpu_custom_call.1} parent=79 // pred_check
          %p690 = pneg %p113
        $region82: #{tpu_custom_call.1} parent=79 // pred_check_branch
          %692 = sbr.rel (%p690) target = $region84
        $region83: #{tpu_custom_call.1} parent=79 // pred_region
          %693 = dma.done [#allocation6], 80
        $region84: #{tpu_custom_call.1} parent=79 // pred_fallthru
          _
        // Predicated region
        $region85: #{tpu_custom_call.1} parent=79 // pred_check
          %p694 = pneg %p134
        $region86: #{tpu_custom_call.1} parent=79 // pred_check_branch
          %696 = sbr.rel (%p694) target = $region88
        $region87: #{tpu_custom_call.1} parent=79 // pred_region
          %697 = dma.done [#allocation9], 8192
        $region88: #{tpu_custom_call.1} parent=79 // pred_fallthru
          _
        // Predicated region
        $region89: #{tpu_custom_call.1} parent=79 // pred_check
          %p698 = pneg %p176
        $region90: #{tpu_custom_call.1} parent=79 // pred_check_branch
          %700 = sbr.rel (%p698) target = $region92
        $region91: #{tpu_custom_call.1} parent=79 // pred_region
          %701 = dma.done [#allocation9], 8192
        $region92: #{tpu_custom_call.1} parent=79 // pred_fallthru
          _
        // Predicated region
        $region93: #{tpu_custom_call.1} parent=79 // pred_check
          %p702 = pneg %p218
        $region94: #{tpu_custom_call.1} parent=79 // pred_check_branch
          %704 = sbr.rel (%p702) target = $region96
        $region95: #{tpu_custom_call.1} parent=79 // pred_region
          %705 = dma.done [#allocation12], 2048
        $region96: #{tpu_custom_call.1} parent=79 // pred_fallthru
          _
        %s706 = sand.u32 %s38, 1
        %s707 = scalar_lea.sflag [#allocation6], %s706
        %s708 = sand.u32 %s256, 1
        %s709 = smul.addr %s708, 256
        %s710 = scalar_lea.vmem [#allocation13], %s709
        // Predicated region
        $region97: #{tpu_custom_call.1} parent=79 // pred_check
          %p711 = pneg %p269
        $region98: #{tpu_custom_call.1} parent=79 // pred_check_branch
          %713 = sbr.rel (%p711) target = $region100
        $region99: #{tpu_custom_call.1} parent=79 // pred_region
          %714 = dma.done %s707, 4096
        $region100: #{tpu_custom_call.1} parent=79 // pred_fallthru
          _
        %s715 = sand.u32 %s38, 1
        %s716 = scalar_lea.sflag [#allocation6], %s715
        %s717 = sand.u32 %s312, 1
        %s718 = smul.addr %s717, 256
        %s719 = scalar_lea.vmem [#allocation14], %s718
        // Predicated region
        $region101: #{tpu_custom_call.1} parent=79 // pred_check
          %p720 = pneg %p325
        $region102: #{tpu_custom_call.1} parent=79 // pred_check_branch
          %722 = sbr.rel (%p720) target = $region104
        $region103: #{tpu_custom_call.1} parent=79 // pred_region
          %723 = dma.done %s716, 4096
        $region104: #{tpu_custom_call.1} parent=79 // pred_fallthru
          _
        %s724 = sand.u32 %s38, 1
        %s725 = scalar_lea.sflag [#allocation6], %s724
        %s726 = sand.u32 %s368, 1
        %s727 = smul.addr %s726, 128
        %s728 = scalar_lea.vmem [#allocation15], %s727
        // Predicated region
        $region105: #{tpu_custom_call.1} parent=79 // pred_check
          %p729 = pneg %p381
        $region106: #{tpu_custom_call.1} parent=79 // pred_check_branch
          %731 = sbr.rel (%p729) target = $region108
        $region107: #{tpu_custom_call.1} parent=79 // pred_region
          %732 = dma.done %s725, 2048
        $region108: #{tpu_custom_call.1} parent=79 // pred_fallthru
          _
        %s733 = smul.u32 2, %s42
        %p734 = scmp.lt.s32.totalorder %s733, 5
        %s735 = scalar_select %p734, %s733, 5
        %s736 = smul.addr %s735, 8
        %s737 = scalar_lea.vmem %s0, %s736
        %p738 = pneg %p71
        %p739 = pneg %p68
        %p740 = pneg %p92
        %p741 = pneg %p89
        %p742 = pneg %p113
        %p743 = pneg %p110
        %p744 = pneg %p134
        %p745 = pneg %p131
        %p746 = pneg %p155
        %p747 = pneg %p152
        %p748 = pneg %p176
        %p749 = pneg %p173
        %p750 = pneg %p197
        %p751 = pneg %p194
        %p752 = pneg %p218
        %p753 = pneg %p215
        %p754 = pneg %p239
        %p755 = pneg %p236
        %s756 = sand.u32 %s38, 1
        %s757 = scalar_lea.sflag [#allocation6], %s756
        %s758 = sand.u32 %s256, 1
        %s759 = smul.addr %s758, 256
        %s760 = scalar_lea.vmem [#allocation13], %s759
        %p761 = pneg %p269
        %p762 = pneg %p266
        %p763 = scmp.lt.s32.totalorder %s43, 1
        %s764 = scalar_select %p763, %s43, 1
        %p765 = scmp.lt.s32.totalorder %s764, 1
        %s766 = scalar_select %p765, %s764, 1
        %s767 = scalar_lea.vmem %s10, %s766
        %p768 = pneg %p299
        %p769 = pneg %p296
        %s770 = sand.u32 %s38, 1
        %s771 = scalar_lea.sflag [#allocation6], %s770
        %s772 = sand.u32 %s312, 1
        %s773 = smul.addr %s772, 256
        %s774 = scalar_lea.vmem [#allocation14], %s773
        %p775 = pneg %p325
        %p776 = pneg %p322
        %p777 = scmp.lt.s32.totalorder %s43, 2
        %s778 = scalar_select %p777, %s43, 2
        %s779 = scalar_lea.vmem %s12, %s778
        %p780 = pneg %p351
        %p781 = pneg %p348
        %s782 = sand.u32 %s38, 1
        %s783 = scalar_lea.sflag [#allocation6], %s782
        %s784 = sand.u32 %s368, 1
        %s785 = smul.addr %s784, 128
        %s786 = scalar_lea.vmem [#allocation15], %s785
        %p787 = pneg %p381
        %p788 = pneg %p378
        %p789 = scmp.lt.s32.totalorder %s43, 0
        %s790 = scalar_select %p789, %s43, 0
        %p791 = scmp.lt.s32.totalorder %s790, 0
        %s792 = scalar_select %p791, %s790, 0
        %s793 = scalar_lea.vmem %s14, %s792
        %p794 = pneg %p411
        %p795 = pneg %p408
        %p796 = pneg %p443
        %p797 = pneg %p440
        %s798 = sand.u32 %s430, 1
        %s799 = scalar_lea.sflag [#allocation7], %s798
        %s800 = sand.u32 %s430, 1
        %s801 = smul.addr %s800, 16
        %s802 = scalar_lea.vmem [#allocation16], %s801
        %p803 = pneg %p471
        %p804 = pneg %p468
        %s805 = sand.u32 %s38, 1
        %s806 = scalar_lea.sflag [#allocation18], %s805
        %s807 = sand.u32 %s458, 1
        %s808 = smul.addr %s807, 16
        %s809 = scalar_lea.vmem [#allocation17], %s808
        %p810 = pneg %p503
        %p811 = pneg %p500
        %s812 = sand.u32 %s38, 1
        %s813 = scalar_lea.sflag [#allocation18], %s812
        %s814 = sand.u32 %s490, 1
        %s815 = smul.addr %s814, 16
        %s816 = scalar_lea.vmem [#allocation19], %s815
        %s817 = smul.u32 2, %s42
        %p818 = scmp.lt.s32.totalorder %s817, 5
        %s819 = scalar_select %p818, %s817, 5
        %s820 = smul.addr %s819, 8
        %s821 = scalar_lea.vmem %s0, %s820
        %s822 = smul.u32 2, %s42
        %p823 = scmp.lt.s32.totalorder %s43, 1
        %s824 = scalar_select %p823, %s43, 1
        %p825 = scmp.lt.s32.totalorder %s43, 1
        %s826 = scalar_select %p825, %s43, 1
        %p827 = scmp.lt.s32.totalorder %s826, 1
        %s828 = scalar_select %p827, %s826, 1
        %s829 = scalar_lea.vmem %s10, %s828
        %p830 = scmp.lt.s32.totalorder %s43, 1
        %s831 = scalar_select %p830, %s43, 1
        %p832 = scmp.lt.s32.totalorder %s43, 2
        %s833 = scalar_select %p832, %s43, 2
        %s834 = scalar_lea.vmem %s12, %s833
        %p835 = scmp.lt.s32.totalorder %s43, 0
        %s836 = scalar_select %p835, %s43, 0
        %p837 = scmp.lt.s32.totalorder %s43, 0
        %s838 = scalar_select %p837, %s43, 0
        %p839 = scmp.lt.s32.totalorder %s838, 0
        %s840 = scalar_select %p839, %s838, 0
        %s841 = scalar_lea.vmem %s14, %s840
        %p842 = scmp.lt.s32.totalorder %s43, 0
        %s843 = scalar_select %p842, %s43, 0
        %p844 = scmp.lt.s32.totalorder %s43, 1
        %s845 = scalar_select %p844, %s43, 1
        %s846 = smul.u32 2, %s42
        %s847 = smul.u32 2, %s42
        %p848 = scmp.lt.s32.totalorder %s43, 0
        %s849 = scalar_select %p848, %s43, 0
        %s850 = smul.u32 2, %s42
        %p852 = scmp.eq.s32.totalorder %s43, 0
        // Predicated region
        $region109: #{tpu_custom_call.1} parent=79 // pred_check
          %p853 = pneg %p852
        $region110: #{tpu_custom_call.1} parent=79 // pred_check_branch
          %855 = sbr.rel (%p853) target = $region112
        $region111: #{tpu_custom_call.1} parent=79 // pred_region
          %v856 = vld [vmem:[%s821] sm:$0xff]
          %v857 = vld [vmem:[%s821 + $0x8] sm:$0xff]
          %v858 = vpack.c.bf16 %v857, %v856
          %v859 = vld [vmem:[%s1] sm:$0xff]
          %v860 = vld [vmem:[%s1 + $0x8] sm:$0xff]
          %v861 = vld [vmem:[%s1 + $0x10] sm:$0xf]
          %v862 = vld [vmem:[%s1 + $0x14] sm:$0xff]
          %v863 = vld [vmem:[%s1 + $0x1c] sm:$0xff]
          %v864 = vld [vmem:[%s1 + $0x24] sm:$0xf]
          %v865 = vld [vmem:[%s1 + $0x28] sm:$0xff]
          %v866 = vld [vmem:[%s1 + $0x30] sm:$0xff]
          %v867 = vld [vmem:[%s1 + $0x38] sm:$0xf]
          %v868 = vld [vmem:[%s1 + $0x3c] sm:$0xff]
          %v869 = vld [vmem:[%s1 + $0x44] sm:$0xff]
          %v870 = vld [vmem:[%s1 + $0x4c] sm:$0xf]
          %v871 = vld [vmem:[#allocation5] sm:$0x1f]
          %v873 = vlaneseq
          %v874 = vshrl.u32 %v873, 7
          %v875 = vsub.s32 0, %v874
          %v876 = vrot.slane %v871, %v875
          %v877 = vlaneseq
          %v878 = vshrl.u32 %v877, 7
          %v879 = vsub.s32 1, %v878
          %v880 = vrot.slane %v871, %v879
          %v881 = vlaneseq
          %v882 = vshrl.u32 %v881, 7
          %v883 = vsub.s32 2, %v882
          %v884 = vrot.slane %v871, %v883
          %v885 = vlaneseq
          %v886 = vshrl.u32 %v885, 7
          %v887 = vsub.s32 3, %v886
          %v888 = vrot.slane %v871, %v887
          %v889 = vlaneseq
          %v890 = vshrl.u32 %v889, 7
          %v891 = vsub.s32 4, %v890
          %v892 = vrot.slane %v871, %v891
          %v910 = vunpack.c.l.b16 %v859
          %v911 = vunpack.c.h.b16 %v859
          %v912 = vunpack.c.l.b16 %v860
          %v913 = vunpack.c.h.b16 %v860
          %v914 = vunpack.c.l.b16 %v861
          %v915 = vunpack.c.l.b16 %v862
          %v916 = vunpack.c.h.b16 %v862
          %v917 = vunpack.c.l.b16 %v863
          %v918 = vunpack.c.h.b16 %v863
          %v919 = vunpack.c.l.b16 %v864
          %v920 = vunpack.c.l.b16 %v865
          %v921 = vunpack.c.h.b16 %v865
          %v922 = vunpack.c.l.b16 %v866
          %v923 = vunpack.c.h.b16 %v866
          %v924 = vunpack.c.l.b16 %v867
          %v925 = vunpack.c.l.b16 %v868
          %v926 = vunpack.c.h.b16 %v868
          %v927 = vunpack.c.l.b16 %v869
          %v928 = vunpack.c.h.b16 %v869
          %v929 = vunpack.c.l.b16 %v870
          %v930 = vpack.c.b16 %v915, %v910
          %v931 = vpack.c.b16 %v916, %v911
          %v932 = vpack.c.b16 %v917, %v912
          %v933 = vpack.c.b16 %v918, %v913
          %v934 = vpack.c.b16 %v919, %v914
          %v935 = vpack.c.b16 %v925, %v920
          %v936 = vpack.c.b16 %v926, %v921
          %v937 = vpack.c.b16 %v927, %v922
          %v938 = vpack.c.b16 %v928, %v923
          %v939 = vpack.c.b16 %v929, %v924
          %vm950 = vcmask 261120
          %v952 = vsel %vm950, %v858, 0
          %954 = vmatprep.subr.bf16.mxu0 0
          %955 = vmatpush1.bf16.msra.mxu0 0
          %956 = vmatprep.subr.bf16.mxu0 0
          %957 = vmatpush1.bf16.msra.mxu0 0
          %958 = vmatprep.subr.bf16.mxu0 0
          %959 = vmatpush1.bf16.msra.mxu0 0
          %960 = vmatprep.subr.bf16.mxu0 0
          %961 = vmatpush1.bf16.msra.mxu0 0
          %962 = vmatprep.subr.bf16.mxu0 0
          %963 = vmatpush1.bf16.msra.mxu0 0
          %964 = vmatprep.subr.bf16.mxu0 0
          %965 = vmatpush1.bf16.msra.mxu0 0
          %966 = vmatprep.subr.bf16.mxu0 %v936
          %967 = vmatpush1.bf16.msra.mxu0 %v935
          %968 = vmatprep.subr.bf16.mxu0 %v931
          %969 = vmatpush1.bf16.msra.mxu0 %v930
          %970 = vmatprep.subr.bf16.mxu0 0
          %971 = vmatpush2.bf16.msra.mxu0 0
          %972 = vmatprep.subr.bf16.mxu0 0
          %973 = vmatpush2.bf16.msra.mxu0 0
          %974 = vmatprep.subr.bf16.mxu0 0
          %975 = vmatpush2.bf16.msra.mxu0 0
          %976 = vmatprep.subr.bf16.mxu0 0
          %977 = vmatpush2.bf16.msra.mxu0 0
          %978 = vmatprep.subr.bf16.mxu0 0
          %979 = vmatpush2.bf16.msra.mxu0 0
          %980 = vmatprep.subr.bf16.mxu0 0
          %981 = vmatpush2.bf16.msra.mxu0 0
          %982 = vmatprep.subr.bf16.mxu0 0
          %983 = vmatpush2.bf16.msra.mxu0 0
          %984 = vmatprep.subr.bf16.mxu0 0
          %985 = vmatpush2.bf16.msra.mxu0 0
          %986 = vmatprep.mubr.bf16.mxu0 0
          %987 = vmatmul.mubr.bf16.gmra.mxu0 %v952
          %v988 = vpop.f32.mrf.mxu0
          %v989 = vadd.f32 %v876, %v988
          %v990 = vpop.f32.mrf.mxu0
          %v991 = vadd.f32 %v880, %v990
          %v992 = vpop.f32.mrf.mxu0
          %v993 = vadd.f32 %v876, %v992
          %v994 = vpop.f32.mrf.mxu0
          %v995 = vadd.f32 %v880, %v994
          %996 = vdwg.mxu0
          %997 = vmatprep.subr.bf16.mxu0 0
          %998 = vmatpush1.bf16.msra.mxu0 0
          %999 = vmatprep.subr.bf16.mxu0 0
          %1000 = vmatpush1.bf16.msra.mxu0 0
          %1001 = vmatprep.subr.bf16.mxu0 0
          %1002 = vmatpush1.bf16.msra.mxu0 0
          %1003 = vmatprep.subr.bf16.mxu0 0
          %1004 = vmatpush1.bf16.msra.mxu0 0
          %1005 = vmatprep.subr.bf16.mxu0 0
          %1006 = vmatpush1.bf16.msra.mxu0 0
          %1007 = vmatprep.subr.bf16.mxu0 0
          %1008 = vmatpush1.bf16.msra.mxu0 0
          %1009 = vmatprep.subr.bf16.mxu0 %v938
          %1010 = vmatpush1.bf16.msra.mxu0 %v937
          %1011 = vmatprep.subr.bf16.mxu0 %v933
          %1012 = vmatpush1.bf16.msra.mxu0 %v932
          %1013 = vmatprep.subr.bf16.mxu0 0
          %1014 = vmatpush2.bf16.msra.mxu0 0
          %1015 = vmatprep.subr.bf16.mxu0 0
          %1016 = vmatpush2.bf16.msra.mxu0 0
          %1017 = vmatprep.subr.bf16.mxu0 0
          %1018 = vmatpush2.bf16.msra.mxu0 0
          %1019 = vmatprep.subr.bf16.mxu0 0
          %1020 = vmatpush2.bf16.msra.mxu0 0
          %1021 = vmatprep.subr.bf16.mxu0 0
          %1022 = vmatpush2.bf16.msra.mxu0 0
          %1023 = vmatprep.subr.bf16.mxu0 0
          %1024 = vmatpush2.bf16.msra.mxu0 0
          %1025 = vmatprep.subr.bf16.mxu0 0
          %1026 = vmatpush2.bf16.msra.mxu0 0
          %1027 = vmatprep.subr.bf16.mxu0 0
          %1028 = vmatpush2.bf16.msra.mxu0 0
          %1029 = vmatprep.mubr.bf16.mxu0 0
          %1030 = vmatmul.mubr.bf16.gmra.mxu0 %v952
          %v1031 = vpop.f32.mrf.mxu0
          %v1032 = vadd.f32 %v884, %v1031
          %v1033 = vpop.f32.mrf.mxu0
          %v1034 = vadd.f32 %v888, %v1033
          %v1035 = vpop.f32.mrf.mxu0
          %v1036 = vadd.f32 %v884, %v1035
          %v1037 = vpop.f32.mrf.mxu0
          %v1038 = vadd.f32 %v888, %v1037
          %1039 = vdwg.mxu0
          %1040 = vmatprep.subr.bf16.mxu0 0
          %1041 = vmatpush1.bf16.msra.mxu0 0
          %1042 = vmatprep.subr.bf16.mxu0 0
          %1043 = vmatpush1.bf16.msra.mxu0 0
          %1044 = vmatprep.subr.bf16.mxu0 0
          %1045 = vmatpush1.bf16.msra.mxu0 0
          %1046 = vmatprep.subr.bf16.mxu0 0
          %1047 = vmatpush1.bf16.msra.mxu0 0
          %1048 = vmatprep.subr.bf16.mxu0 0
          %1049 = vmatpush1.bf16.msra.mxu0 0
          %1050 = vmatprep.subr.bf16.mxu0 0
          %1051 = vmatpush1.bf16.msra.mxu0 0
          %1052 = vmatprep.subr.bf16.mxu0 0
          %1053 = vmatpush1.bf16.msra.mxu0 %v939
          %1054 = vmatprep.subr.bf16.mxu0 0
          %1055 = vmatpush1.bf16.msra.mxu0 %v934
          %1056 = vmatprep.subr.bf16.mxu0 0
          %1057 = vmatpush2.bf16.msra.mxu0 0
          %1058 = vmatprep.subr.bf16.mxu0 0
          %1059 = vmatpush2.bf16.msra.mxu0 0
          %1060 = vmatprep.subr.bf16.mxu0 0
          %1061 = vmatpush2.bf16.msra.mxu0 0
          %1062 = vmatprep.subr.bf16.mxu0 0
          %1063 = vmatpush2.bf16.msra.mxu0 0
          %1064 = vmatprep.subr.bf16.mxu0 0
          %1065 = vmatpush2.bf16.msra.mxu0 0
          %1066 = vmatprep.subr.bf16.mxu0 0
          %1067 = vmatpush2.bf16.msra.mxu0 0
          %1068 = vmatprep.subr.bf16.mxu0 0
          %1069 = vmatpush2.bf16.msra.mxu0 0
          %1070 = vmatprep.subr.bf16.mxu0 0
          %1071 = vmatpush2.bf16.msra.mxu0 0
          %1072 = vmatprep.mubr.bf16.mxu0 0
          %1073 = vmatmul.mubr.bf16.gmra.mxu0 %v952
          %v1074 = vpop.f32.mrf.mxu0
          %v1075 = vadd.f32 %v892, %v1074
          %v1076 = vpop.f32.mrf.mxu0
          %v1077 = vpop.f32.mrf.mxu0
          %v1078 = vadd.f32 %v892, %v1077
          %v1079 = vpop.f32.mrf.mxu0
          %1080 = vdwg.mxu0
          %v1081 = vmax.f32 %v989, 0.0
          %v1082 = vmax.f32 %v991, 0.0
          %v1083 = vmax.f32 %v1032, 0.0
          %v1084 = vmax.f32 %v1034, 0.0
          %v1085 = vmax.f32 %v1075, 0.0
          %v1086 = vmax.f32 %v993, 0.0
          %v1087 = vmax.f32 %v995, 0.0
          %v1088 = vmax.f32 %v1036, 0.0
          %v1089 = vmax.f32 %v1038, 0.0
          %v1090 = vmax.f32 %v1078, 0.0
          %v1091 = vpack.c.bf16 %v1086, %v1081
          %v1092 = vpack.c.bf16 %v1087, %v1082
          %v1093 = vpack.c.bf16 %v1088, %v1083
          %v1094 = vpack.c.bf16 %v1089, %v1084
          %v1095 = vpack.c.bf16 %v1090, %v1085
          %v1096 = vld [vmem:[#allocation8] sm:$0xff]
          %v1097 = vld [vmem:[#allocation8 + $0x8] sm:$0xff]
          %v1098 = vld [vmem:[#allocation8 + $0x10] sm:$0xff]
          %v1099 = vld [vmem:[#allocation8 + $0x18] sm:$0xff]
          %v1100 = vld [vmem:[#allocation8 + $0x20] sm:$0xff]
          %v1101 = vld [vmem:[#allocation8 + $0x28] sm:$0xff]
          %v1102 = vld [vmem:[#allocation8 + $0x30] sm:$0xff]
          %v1103 = vld [vmem:[#allocation8 + $0x38] sm:$0xff]
          %v1104 = vld [vmem:[#allocation8 + $0x40] sm:$0xff]
          %v1105 = vld [vmem:[#allocation8 + $0x48] sm:$0xff]
          %v1106 = vld [vmem:[#allocation8 + $0x50] sm:$0xff]
          %v1107 = vld [vmem:[#allocation8 + $0x58] sm:$0xff]
          %v1108 = vld [vmem:[#allocation8 + $0x60] sm:$0xff]
          %v1109 = vld [vmem:[#allocation8 + $0x68] sm:$0xff]
          %v1110 = vld [vmem:[#allocation8 + $0x70] sm:$0xff]
          %v1111 = vld [vmem:[#allocation8 + $0x78] sm:$0xff]
          %v1112 = vld [vmem:[#allocation8 + $0x80] sm:$0xff]
          %v1113 = vld [vmem:[#allocation8 + $0x88] sm:$0xff]
          %v1114 = vld [vmem:[#allocation8 + $0x90] sm:$0xff]
          %v1115 = vld [vmem:[#allocation8 + $0x98] sm:$0xff]
          %v1116 = vld [vmem:[#allocation8 + $0xa0] sm:$0xff]
          %v1117 = vld [vmem:[#allocation8 + $0xa8] sm:$0xff]
          %v1118 = vld [vmem:[#allocation8 + $0xb0] sm:$0xff]
          %v1119 = vld [vmem:[#allocation8 + $0xb8] sm:$0xff]
          %v1120 = vld [vmem:[#allocation8 + $0xc0] sm:$0xff]
          %v1121 = vld [vmem:[#allocation8 + $0xc8] sm:$0xff]
          %v1122 = vld [vmem:[#allocation8 + $0xd0] sm:$0xff]
          %v1123 = vld [vmem:[#allocation8 + $0xd8] sm:$0xff]
          %v1124 = vld [vmem:[#allocation8 + $0xe0] sm:$0xff]
          %v1125 = vld [vmem:[#allocation8 + $0xe8] sm:$0xff]
          %v1126 = vld [vmem:[#allocation8 + $0xf0] sm:$0xff]
          %v1127 = vld [vmem:[#allocation8 + $0xf8] sm:$0xff]
          %v1128 = vld [vmem:[#allocation8 + $0x100] sm:$0xff]
          %v1129 = vld [vmem:[#allocation8 + $0x108] sm:$0xff]
          %v1130 = vld [vmem:[#allocation8 + $0x110] sm:$0xff]
          %v1131 = vld [vmem:[#allocation8 + $0x118] sm:$0xff]
          %v1132 = vld [vmem:[#allocation8 + $0x120] sm:$0xff]
          %v1133 = vld [vmem:[#allocation8 + $0x128] sm:$0xff]
          %v1134 = vld [vmem:[#allocation8 + $0x130] sm:$0xff]
          %v1135 = vld [vmem:[#allocation8 + $0x138] sm:$0xff]
          %v1136 = vld [vmem:[#allocation8 + $0x140] sm:$0xff]
          %v1137 = vld [vmem:[#allocation8 + $0x148] sm:$0xff]
          %v1138 = vld [vmem:[#allocation8 + $0x150] sm:$0xff]
          %v1139 = vld [vmem:[#allocation8 + $0x158] sm:$0xff]
          %v1140 = vld [vmem:[#allocation8 + $0x160] sm:$0xff]
          %v1141 = vld [vmem:[#allocation8 + $0x168] sm:$0xff]
          %v1142 = vld [vmem:[#allocation8 + $0x170] sm:$0xff]
          %v1143 = vld [vmem:[#allocation8 + $0x178] sm:$0xff]
          %v1144 = vld [vmem:[#allocation8 + $0x180] sm:$0xff]
          %v1145 = vld [vmem:[#allocation8 + $0x188] sm:$0xff]
          %v1146 = vld [vmem:[#allocation8 + $0x190] sm:$0xff]
          %v1147 = vld [vmem:[#allocation8 + $0x198] sm:$0xff]
          %v1148 = vld [vmem:[#allocation8 + $0x1a0] sm:$0xff]
          %v1149 = vld [vmem:[#allocation8 + $0x1a8] sm:$0xff]
          %v1150 = vld [vmem:[#allocation8 + $0x1b0] sm:$0xff]
          %v1151 = vld [vmem:[#allocation8 + $0x1b8] sm:$0xff]
          %v1152 = vld [vmem:[#allocation8 + $0x1c0] sm:$0xff]
          %v1153 = vld [vmem:[#allocation8 + $0x1c8] sm:$0xff]
          %v1154 = vld [vmem:[#allocation8 + $0x1d0] sm:$0xff]
          %v1155 = vld [vmem:[#allocation8 + $0x1d8] sm:$0xff]
          %v1156 = vld [vmem:[#allocation8 + $0x1e0] sm:$0xff]
          %v1157 = vld [vmem:[#allocation8 + $0x1e8] sm:$0xff]
          %v1158 = vld [vmem:[#allocation8 + $0x1f0] sm:$0xff]
          %v1159 = vld [vmem:[#allocation8 + $0x1f8] sm:$0xff]
          %v1160 = vld [vmem:[%s4] sm:$0xf]
          %v1162 = vlaneseq
          %v1163 = vshrl.u32 %v1162, 7
          %v1164 = vsub.s32 0, %v1163
          %v1165 = vrot.slane %v1160, %v1164
          %v1166 = vlaneseq
          %v1167 = vshrl.u32 %v1166, 7
          %v1168 = vsub.s32 1, %v1167
          %v1169 = vrot.slane %v1160, %v1168
          %v1170 = vlaneseq
          %v1171 = vshrl.u32 %v1170, 7
          %v1172 = vsub.s32 2, %v1171
          %v1173 = vrot.slane %v1160, %v1172
          %v1174 = vlaneseq
          %v1175 = vshrl.u32 %v1174, 7
          %v1176 = vsub.s32 3, %v1175
          %v1177 = vrot.slane %v1160, %v1176
          %v1246 = vunpack.c.l.b16 %v1096
          %v1247 = vunpack.c.h.b16 %v1096
          %v1248 = vunpack.c.l.b16 %v1097
          %v1249 = vunpack.c.h.b16 %v1097
          %v1250 = vunpack.c.l.b16 %v1098
          %v1251 = vunpack.c.h.b16 %v1098
          %v1252 = vunpack.c.l.b16 %v1099
          %v1253 = vunpack.c.h.b16 %v1099
          %v1254 = vunpack.c.l.b16 %v1100
          %v1255 = vunpack.c.h.b16 %v1100
          %v1256 = vunpack.c.l.b16 %v1101
          %v1257 = vunpack.c.h.b16 %v1101
          %v1258 = vunpack.c.l.b16 %v1102
          %v1259 = vunpack.c.h.b16 %v1102
          %v1260 = vunpack.c.l.b16 %v1103
          %v1261 = vunpack.c.h.b16 %v1103
          %v1262 = vunpack.c.l.b16 %v1104
          %v1263 = vunpack.c.h.b16 %v1104
          %v1264 = vunpack.c.l.b16 %v1105
          %v1265 = vunpack.c.h.b16 %v1105
          %v1266 = vunpack.c.l.b16 %v1106
          %v1267 = vunpack.c.h.b16 %v1106
          %v1268 = vunpack.c.l.b16 %v1107
          %v1269 = vunpack.c.h.b16 %v1107
          %v1270 = vunpack.c.l.b16 %v1108
          %v1271 = vunpack.c.h.b16 %v1108
          %v1272 = vunpack.c.l.b16 %v1109
          %v1273 = vunpack.c.h.b16 %v1109
          %v1274 = vunpack.c.l.b16 %v1110
          %v1275 = vunpack.c.h.b16 %v1110
          %v1276 = vunpack.c.l.b16 %v1111
          %v1277 = vunpack.c.h.b16 %v1111
          %v1278 = vunpack.c.l.b16 %v1112
          %v1279 = vunpack.c.h.b16 %v1112
          %v1280 = vunpack.c.l.b16 %v1113
          %v1281 = vunpack.c.h.b16 %v1113
          %v1282 = vunpack.c.l.b16 %v1114
          %v1283 = vunpack.c.h.b16 %v1114
          %v1284 = vunpack.c.l.b16 %v1115
          %v1285 = vunpack.c.h.b16 %v1115
          %v1286 = vunpack.c.l.b16 %v1116
          %v1287 = vunpack.c.h.b16 %v1116
          %v1288 = vunpack.c.l.b16 %v1117
          %v1289 = vunpack.c.h.b16 %v1117
          %v1290 = vunpack.c.l.b16 %v1118
          %v1291 = vunpack.c.h.b16 %v1118
          %v1292 = vunpack.c.l.b16 %v1119
          %v1293 = vunpack.c.h.b16 %v1119
          %v1294 = vunpack.c.l.b16 %v1120
          %v1295 = vunpack.c.h.b16 %v1120
          %v1296 = vunpack.c.l.b16 %v1121
          %v1297 = vunpack.c.h.b16 %v1121
          %v1298 = vunpack.c.l.b16 %v1122
          %v1299 = vunpack.c.h.b16 %v1122
          %v1300 = vunpack.c.l.b16 %v1123
          %v1301 = vunpack.c.h.b16 %v1123
          %v1302 = vunpack.c.l.b16 %v1124
          %v1303 = vunpack.c.h.b16 %v1124
          %v1304 = vunpack.c.l.b16 %v1125
          %v1305 = vunpack.c.h.b16 %v1125
          %v1306 = vunpack.c.l.b16 %v1126
          %v1307 = vunpack.c.h.b16 %v1126
          %v1308 = vunpack.c.l.b16 %v1127
          %v1309 = vunpack.c.h.b16 %v1127
          %v1310 = vunpack.c.l.b16 %v1128
          %v1311 = vunpack.c.h.b16 %v1128
          %v1312 = vunpack.c.l.b16 %v1129
          %v1313 = vunpack.c.h.b16 %v1129
          %v1314 = vunpack.c.l.b16 %v1130
          %v1315 = vunpack.c.h.b16 %v1130
          %v1316 = vunpack.c.l.b16 %v1131
          %v1317 = vunpack.c.h.b16 %v1131
          %v1318 = vunpack.c.l.b16 %v1132
          %v1319 = vunpack.c.h.b16 %v1132
          %v1320 = vunpack.c.l.b16 %v1133
          %v1321 = vunpack.c.h.b16 %v1133
          %v1322 = vunpack.c.l.b16 %v1134
          %v1323 = vunpack.c.h.b16 %v1134
          %v1324 = vunpack.c.l.b16 %v1135
          %v1325 = vunpack.c.h.b16 %v1135
          %v1326 = vunpack.c.l.b16 %v1136
          %v1327 = vunpack.c.h.b16 %v1136
          %v1328 = vunpack.c.l.b16 %v1137
          %v1329 = vunpack.c.h.b16 %v1137
          %v1330 = vunpack.c.l.b16 %v1138
          %v1331 = vunpack.c.h.b16 %v1138
          %v1332 = vunpack.c.l.b16 %v1139
          %v1333 = vunpack.c.h.b16 %v1139
          %v1334 = vunpack.c.l.b16 %v1140
          %v1335 = vunpack.c.h.b16 %v1140
          %v1336 = vunpack.c.l.b16 %v1141
          %v1337 = vunpack.c.h.b16 %v1141
          %v1338 = vunpack.c.l.b16 %v1142
          %v1339 = vunpack.c.h.b16 %v1142
          %v1340 = vunpack.c.l.b16 %v1143
          %v1341 = vunpack.c.h.b16 %v1143
          %v1342 = vunpack.c.l.b16 %v1144
          %v1343 = vunpack.c.h.b16 %v1144
          %v1344 = vunpack.c.l.b16 %v1145
          %v1345 = vunpack.c.h.b16 %v1145
          %v1346 = vunpack.c.l.b16 %v1146
          %v1347 = vunpack.c.h.b16 %v1146
          %v1348 = vunpack.c.l.b16 %v1147
          %v1349 = vunpack.c.h.b16 %v1147
          %v1350 = vunpack.c.l.b16 %v1148
          %v1351 = vunpack.c.h.b16 %v1148
          %v1352 = vunpack.c.l.b16 %v1149
          %v1353 = vunpack.c.h.b16 %v1149
          %v1354 = vunpack.c.l.b16 %v1150
          %v1355 = vunpack.c.h.b16 %v1150
          %v1356 = vunpack.c.l.b16 %v1151
          %v1357 = vunpack.c.h.b16 %v1151
          %v1358 = vunpack.c.l.b16 %v1152
          %v1359 = vunpack.c.h.b16 %v1152
          %v1360 = vunpack.c.l.b16 %v1153
          %v1361 = vunpack.c.h.b16 %v1153
          %v1362 = vunpack.c.l.b16 %v1154
          %v1363 = vunpack.c.h.b16 %v1154
          %v1364 = vunpack.c.l.b16 %v1155
          %v1365 = vunpack.c.h.b16 %v1155
          %v1366 = vunpack.c.l.b16 %v1156
          %v1367 = vunpack.c.h.b16 %v1156
          %v1368 = vunpack.c.l.b16 %v1157
          %v1369 = vunpack.c.h.b16 %v1157
          %v1370 = vunpack.c.l.b16 %v1158
          %v1371 = vunpack.c.h.b16 %v1158
          %v1372 = vunpack.c.l.b16 %v1159
          %v1373 = vunpack.c.h.b16 %v1159
          %v1374 = vpack.c.b16 %v1250, %v1246
          %v1375 = vpack.c.b16 %v1251, %v1247
          %v1376 = vpack.c.b16 %v1252, %v1248
          %v1377 = vpack.c.b16 %v1253, %v1249
          %v1378 = vpack.c.b16 %v1258, %v1254
          %v1379 = vpack.c.b16 %v1259, %v1255
          %v1380 = vpack.c.b16 %v1260, %v1256
          %v1381 = vpack.c.b16 %v1261, %v1257
          %v1382 = vpack.c.b16 %v1266, %v1262
          %v1383 = vpack.c.b16 %v1267, %v1263
          %v1384 = vpack.c.b16 %v1268, %v1264
          %v1385 = vpack.c.b16 %v1269, %v1265
          %v1386 = vpack.c.b16 %v1274, %v1270
          %v1387 = vpack.c.b16 %v1275, %v1271
          %v1388 = vpack.c.b16 %v1276, %v1272
          %v1389 = vpack.c.b16 %v1277, %v1273
          %v1390 = vpack.c.b16 %v1282, %v1278
          %v1391 = vpack.c.b16 %v1283, %v1279
          %v1392 = vpack.c.b16 %v1284, %v1280
          %v1393 = vpack.c.b16 %v1285, %v1281
          %v1394 = vpack.c.b16 %v1290, %v1286
          %v1395 = vpack.c.b16 %v1291, %v1287
          %v1396 = vpack.c.b16 %v1292, %v1288
          %v1397 = vpack.c.b16 %v1293, %v1289
          %v1398 = vpack.c.b16 %v1298, %v1294
          %v1399 = vpack.c.b16 %v1299, %v1295
          %v1400 = vpack.c.b16 %v1300, %v1296
          %v1401 = vpack.c.b16 %v1301, %v1297
          %v1402 = vpack.c.b16 %v1306, %v1302
          %v1403 = vpack.c.b16 %v1307, %v1303
          %v1404 = vpack.c.b16 %v1308, %v1304
          %v1405 = vpack.c.b16 %v1309, %v1305
          %v1406 = vpack.c.b16 %v1314, %v1310
          %v1407 = vpack.c.b16 %v1315, %v1311
          %v1408 = vpack.c.b16 %v1316, %v1312
          %v1409 = vpack.c.b16 %v1317, %v1313
          %v1410 = vpack.c.b16 %v1322, %v1318
          %v1411 = vpack.c.b16 %v1323, %v1319
          %v1412 = vpack.c.b16 %v1324, %v1320
          %v1413 = vpack.c.b16 %v1325, %v1321
          %v1414 = vpack.c.b16 %v1330, %v1326
          %v1415 = vpack.c.b16 %v1331, %v1327
          %v1416 = vpack.c.b16 %v1332, %v1328
          %v1417 = vpack.c.b16 %v1333, %v1329
          %v1418 = vpack.c.b16 %v1338, %v1334
          %v1419 = vpack.c.b16 %v1339, %v1335
          %v1420 = vpack.c.b16 %v1340, %v1336
          %v1421 = vpack.c.b16 %v1341, %v1337
          %v1422 = vpack.c.b16 %v1346, %v1342
          %v1423 = vpack.c.b16 %v1347, %v1343
          %v1424 = vpack.c.b16 %v1348, %v1344
          %v1425 = vpack.c.b16 %v1349, %v1345
          %v1426 = vpack.c.b16 %v1354, %v1350
          %v1427 = vpack.c.b16 %v1355, %v1351
          %v1428 = vpack.c.b16 %v1356, %v1352
          %v1429 = vpack.c.b16 %v1357, %v1353
          %v1430 = vpack.c.b16 %v1362, %v1358
          %v1431 = vpack.c.b16 %v1363, %v1359
          %v1432 = vpack.c.b16 %v1364, %v1360
          %v1433 = vpack.c.b16 %v1365, %v1361
          %v1434 = vpack.c.b16 %v1370, %v1366
          %v1435 = vpack.c.b16 %v1371, %v1367
          %v1436 = vpack.c.b16 %v1372, %v1368
          %v1437 = vpack.c.b16 %v1373, %v1369
          %1502 = vmatprep.subr.bf16.mxu0 %v1403
          %1503 = vmatpush1.bf16.msra.mxu0 %v1402
          %1504 = vmatprep.subr.bf16.mxu0 %v1399
          %1505 = vmatpush1.bf16.msra.mxu0 %v1398
          %1506 = vmatprep.subr.bf16.mxu0 %v1395
          %1507 = vmatpush1.bf16.msra.mxu0 %v1394
          %1508 = vmatprep.subr.bf16.mxu0 %v1391
          %1509 = vmatpush1.bf16.msra.mxu0 %v1390
          %1510 = vmatprep.subr.bf16.mxu0 %v1387
          %1511 = vmatpush1.bf16.msra.mxu0 %v1386
          %1512 = vmatprep.subr.bf16.mxu0 %v1383
          %1513 = vmatpush1.bf16.msra.mxu0 %v1382
          %1514 = vmatprep.subr.bf16.mxu0 %v1379
          %1515 = vmatpush1.bf16.msra.mxu0 %v1378
          %1516 = vmatprep.subr.bf16.mxu0 %v1375
          %1517 = vmatpush1.bf16.msra.mxu0 %v1374
          %1518 = vmatprep.subr.bf16.mxu0 %v1435
          %1519 = vmatpush2.bf16.msra.mxu0 %v1434
          %1520 = vmatprep.subr.bf16.mxu0 %v1431
          %1521 = vmatpush2.bf16.msra.mxu0 %v1430
          %1522 = vmatprep.subr.bf16.mxu0 %v1427
          %1523 = vmatpush2.bf16.msra.mxu0 %v1426
          %1524 = vmatprep.subr.bf16.mxu0 %v1423
          %1525 = vmatpush2.bf16.msra.mxu0 %v1422
          %1526 = vmatprep.subr.bf16.mxu0 %v1419
          %1527 = vmatpush2.bf16.msra.mxu0 %v1418
          %1528 = vmatprep.subr.bf16.mxu0 %v1415
          %1529 = vmatpush2.bf16.msra.mxu0 %v1414
          %1530 = vmatprep.subr.bf16.mxu0 %v1411
          %1531 = vmatpush2.bf16.msra.mxu0 %v1410
          %1532 = vmatprep.subr.bf16.mxu0 %v1407
          %1533 = vmatpush2.bf16.msra.mxu0 %v1406
          %1534 = vmatprep.mubr.bf16.mxu0 %v1092
          %1535 = vmatmul.mubr.bf16.gmra.mxu0 %v1091
          %v1536 = vpop.f32.mrf.mxu0
          %v1537 = vadd.f32 %v1165, %v1536
          %v1538 = vpop.f32.mrf.mxu0
          %v1539 = vadd.f32 %v1169, %v1538
          %v1540 = vpop.f32.mrf.mxu0
          %v1541 = vadd.f32 %v1165, %v1540
          %v1542 = vpop.f32.mrf.mxu0
          %v1543 = vadd.f32 %v1169, %v1542
          %1544 = vdwg.mxu0
          %1545 = vmatprep.subr.bf16.mxu0 %v1405
          %1546 = vmatpush1.bf16.msra.mxu0 %v1404
          %1547 = vmatprep.subr.bf16.mxu0 %v1401
          %1548 = vmatpush1.bf16.msra.mxu0 %v1400
          %1549 = vmatprep.subr.bf16.mxu0 %v1397
          %1550 = vmatpush1.bf16.msra.mxu0 %v1396
          %1551 = vmatprep.subr.bf16.mxu0 %v1393
          %1552 = vmatpush1.bf16.msra.mxu0 %v1392
          %1553 = vmatprep.subr.bf16.mxu0 %v1389
          %1554 = vmatpush1.bf16.msra.mxu0 %v1388
          %1555 = vmatprep.subr.bf16.mxu0 %v1385
          %1556 = vmatpush1.bf16.msra.mxu0 %v1384
          %1557 = vmatprep.subr.bf16.mxu0 %v1381
          %1558 = vmatpush1.bf16.msra.mxu0 %v1380
          %1559 = vmatprep.subr.bf16.mxu0 %v1377
          %1560 = vmatpush1.bf16.msra.mxu0 %v1376
          %1561 = vmatprep.subr.bf16.mxu0 %v1437
          %1562 = vmatpush2.bf16.msra.mxu0 %v1436
          %1563 = vmatprep.subr.bf16.mxu0 %v1433
          %1564 = vmatpush2.bf16.msra.mxu0 %v1432
          %1565 = vmatprep.subr.bf16.mxu0 %v1429
          %1566 = vmatpush2.bf16.msra.mxu0 %v1428
          %1567 = vmatprep.subr.bf16.mxu0 %v1425
          %1568 = vmatpush2.bf16.msra.mxu0 %v1424
          %1569 = vmatprep.subr.bf16.mxu0 %v1421
          %1570 = vmatpush2.bf16.msra.mxu0 %v1420
          %1571 = vmatprep.subr.bf16.mxu0 %v1417
          %1572 = vmatpush2.bf16.msra.mxu0 %v1416
          %1573 = vmatprep.subr.bf16.mxu0 %v1413
          %1574 = vmatpush2.bf16.msra.mxu0 %v1412
          %1575 = vmatprep.subr.bf16.mxu0 %v1409
          %1576 = vmatpush2.bf16.msra.mxu0 %v1408
          %1577 = vmatprep.mubr.bf16.mxu0 %v1092
          %1578 = vmatmul.mubr.bf16.gmra.mxu0 %v1091
          %v1579 = vpop.f32.mrf.mxu0
          %v1580 = vadd.f32 %v1173, %v1579
          %v1581 = vpop.f32.mrf.mxu0
          %v1582 = vadd.f32 %v1177, %v1581
          %v1583 = vpop.f32.mrf.mxu0
          %v1584 = vadd.f32 %v1173, %v1583
          %v1585 = vpop.f32.mrf.mxu0
          %v1586 = vadd.f32 %v1177, %v1585
          %1587 = vdwg.mxu0
          %v1588 = vmax.f32 %v1537, 0.0
          %v1589 = vmax.f32 %v1539, 0.0
          %v1590 = vmax.f32 %v1580, 0.0
          %v1591 = vmax.f32 %v1582, 0.0
          %v1592 = vmax.f32 %v1541, 0.0
          %v1593 = vmax.f32 %v1543, 0.0
          %v1594 = vmax.f32 %v1584, 0.0
          %v1595 = vmax.f32 %v1586, 0.0
          %v1596 = vpack.c.bf16 %v1592, %v1588
          %v1597 = vpack.c.bf16 %v1593, %v1589
          %v1598 = vpack.c.bf16 %v1594, %v1590
          %v1599 = vpack.c.bf16 %v1595, %v1591
          %v1604 = vunpack.c.l.b16 %v1596
          %v1605 = vunpack.c.l.b16 %v1597
          %v1606 = vunpack.c.l.b16 %v1598
          %v1607 = vunpack.c.l.b16 %v1599
          %v1608 = vunpack.c.h.b16 %v1596
          %v1609 = vunpack.c.h.b16 %v1597
          %v1610 = vunpack.c.h.b16 %v1598
          %v1611 = vunpack.c.h.b16 %v1599
          %v1612 = vpack.c.b16 %v1605, %v1604
          %v1613 = vpack.c.b16 %v1607, %v1606
          %v1614 = vpack.c.b16 %v1609, %v1608
          %v1615 = vpack.c.b16 %v1611, %v1610
          %1620 = vst [vmem:[#allocation2] sm:$0xff] %v1612
          %1621 = vst [vmem:[#allocation2 + $0x8] sm:$0xff] %v1613
          %1622 = vst [vmem:[#allocation2 + $0x10] sm:$0xff] %v1614
          %1623 = vst [vmem:[#allocation2 + $0x18] sm:$0xff] %v1615
          %v1624 = vld [vmem:[#allocation10] sm:$0xff]
          %v1625 = vld [vmem:[#allocation10 + $0x8] sm:$0xff]
          %v1626 = vld [vmem:[#allocation10 + $0x10] sm:$0xff]
          %v1627 = vld [vmem:[#allocation10 + $0x18] sm:$0xff]
          %v1628 = vld [vmem:[#allocation10 + $0x20] sm:$0xff]
          %v1629 = vld [vmem:[#allocation10 + $0x28] sm:$0xff]
          %v1630 = vld [vmem:[#allocation10 + $0x30] sm:$0xff]
          %v1631 = vld [vmem:[#allocation10 + $0x38] sm:$0xff]
          %v1632 = vld [vmem:[#allocation10 + $0x40] sm:$0xff]
          %v1633 = vld [vmem:[#allocation10 + $0x48] sm:$0xff]
          %v1634 = vld [vmem:[#allocation10 + $0x50] sm:$0xff]
          %v1635 = vld [vmem:[#allocation10 + $0x58] sm:$0xff]
          %v1636 = vld [vmem:[#allocation10 + $0x60] sm:$0xff]
          %v1637 = vld [vmem:[#allocation10 + $0x68] sm:$0xff]
          %v1638 = vld [vmem:[#allocation10 + $0x70] sm:$0xff]
          %v1639 = vld [vmem:[#allocation10 + $0x78] sm:$0xff]
          %v1640 = vld [vmem:[#allocation10 + $0x80] sm:$0xff]
          %v1641 = vld [vmem:[#allocation10 + $0x88] sm:$0xff]
          %v1642 = vld [vmem:[#allocation10 + $0x90] sm:$0xff]
          %v1643 = vld [vmem:[#allocation10 + $0x98] sm:$0xff]
          %v1644 = vld [vmem:[#allocation10 + $0xa0] sm:$0xff]
          %v1645 = vld [vmem:[#allocation10 + $0xa8] sm:$0xff]
          %v1646 = vld [vmem:[#allocation10 + $0xb0] sm:$0xff]
          %v1647 = vld [vmem:[#allocation10 + $0xb8] sm:$0xff]
          %v1648 = vld [vmem:[#allocation10 + $0xc0] sm:$0xff]
          %v1649 = vld [vmem:[#allocation10 + $0xc8] sm:$0xff]
          %v1650 = vld [vmem:[#allocation10 + $0xd0] sm:$0xff]
          %v1651 = vld [vmem:[#allocation10 + $0xd8] sm:$0xff]
          %v1652 = vld [vmem:[#allocation10 + $0xe0] sm:$0xff]
          %v1653 = vld [vmem:[#allocation10 + $0xe8] sm:$0xff]
          %v1654 = vld [vmem:[#allocation10 + $0xf0] sm:$0xff]
          %v1655 = vld [vmem:[#allocation10 + $0xf8] sm:$0xff]
          %v1656 = vld [vmem:[#allocation10 + $0x100] sm:$0xff]
          %v1657 = vld [vmem:[#allocation10 + $0x108] sm:$0xff]
          %v1658 = vld [vmem:[#allocation10 + $0x110] sm:$0xff]
          %v1659 = vld [vmem:[#allocation10 + $0x118] sm:$0xff]
          %v1660 = vld [vmem:[#allocation10 + $0x120] sm:$0xff]
          %v1661 = vld [vmem:[#allocation10 + $0x128] sm:$0xff]
          %v1662 = vld [vmem:[#allocation10 + $0x130] sm:$0xff]
          %v1663 = vld [vmem:[#allocation10 + $0x138] sm:$0xff]
          %v1664 = vld [vmem:[#allocation10 + $0x140] sm:$0xff]
          %v1665 = vld [vmem:[#allocation10 + $0x148] sm:$0xff]
          %v1666 = vld [vmem:[#allocation10 + $0x150] sm:$0xff]
          %v1667 = vld [vmem:[#allocation10 + $0x158] sm:$0xff]
          %v1668 = vld [vmem:[#allocation10 + $0x160] sm:$0xff]
          %v1669 = vld [vmem:[#allocation10 + $0x168] sm:$0xff]
          %v1670 = vld [vmem:[#allocation10 + $0x170] sm:$0xff]
          %v1671 = vld [vmem:[#allocation10 + $0x178] sm:$0xff]
          %v1672 = vld [vmem:[#allocation10 + $0x180] sm:$0xff]
          %v1673 = vld [vmem:[#allocation10 + $0x188] sm:$0xff]
          %v1674 = vld [vmem:[#allocation10 + $0x190] sm:$0xff]
          %v1675 = vld [vmem:[#allocation10 + $0x198] sm:$0xff]
          %v1676 = vld [vmem:[#allocation10 + $0x1a0] sm:$0xff]
          %v1677 = vld [vmem:[#allocation10 + $0x1a8] sm:$0xff]
          %v1678 = vld [vmem:[#allocation10 + $0x1b0] sm:$0xff]
          %v1679 = vld [vmem:[#allocation10 + $0x1b8] sm:$0xff]
          %v1680 = vld [vmem:[#allocation10 + $0x1c0] sm:$0xff]
          %v1681 = vld [vmem:[#allocation10 + $0x1c8] sm:$0xff]
          %v1682 = vld [vmem:[#allocation10 + $0x1d0] sm:$0xff]
          %v1683 = vld [vmem:[#allocation10 + $0x1d8] sm:$0xff]
          %v1684 = vld [vmem:[#allocation10 + $0x1e0] sm:$0xff]
          %v1685 = vld [vmem:[#allocation10 + $0x1e8] sm:$0xff]
          %v1686 = vld [vmem:[#allocation10 + $0x1f0] sm:$0xff]
          %v1687 = vld [vmem:[#allocation10 + $0x1f8] sm:$0xff]
          %v1688 = vld [vmem:[%s6] sm:$0xf]
          %v1690 = vlaneseq
          %v1691 = vshrl.u32 %v1690, 7
          %v1692 = vsub.s32 0, %v1691
          %v1693 = vrot.slane %v1688, %v1692
          %v1694 = vlaneseq
          %v1695 = vshrl.u32 %v1694, 7
          %v1696 = vsub.s32 1, %v1695
          %v1697 = vrot.slane %v1688, %v1696
          %v1698 = vlaneseq
          %v1699 = vshrl.u32 %v1698, 7
          %v1700 = vsub.s32 2, %v1699
          %v1701 = vrot.slane %v1688, %v1700
          %v1702 = vlaneseq
          %v1703 = vshrl.u32 %v1702, 7
          %v1704 = vsub.s32 3, %v1703
          %v1705 = vrot.slane %v1688, %v1704
          %v1774 = vunpack.c.l.b16 %v1624
          %v1775 = vunpack.c.h.b16 %v1624
          %v1776 = vunpack.c.l.b16 %v1625
          %v1777 = vunpack.c.h.b16 %v1625
          %v1778 = vunpack.c.l.b16 %v1626
          %v1779 = vunpack.c.h.b16 %v1626
          %v1780 = vunpack.c.l.b16 %v1627
          %v1781 = vunpack.c.h.b16 %v1627
          %v1782 = vunpack.c.l.b16 %v1628
          %v1783 = vunpack.c.h.b16 %v1628
          %v1784 = vunpack.c.l.b16 %v1629
          %v1785 = vunpack.c.h.b16 %v1629
          %v1786 = vunpack.c.l.b16 %v1630
          %v1787 = vunpack.c.h.b16 %v1630
          %v1788 = vunpack.c.l.b16 %v1631
          %v1789 = vunpack.c.h.b16 %v1631
          %v1790 = vunpack.c.l.b16 %v1632
          %v1791 = vunpack.c.h.b16 %v1632
          %v1792 = vunpack.c.l.b16 %v1633
          %v1793 = vunpack.c.h.b16 %v1633
          %v1794 = vunpack.c.l.b16 %v1634
          %v1795 = vunpack.c.h.b16 %v1634
          %v1796 = vunpack.c.l.b16 %v1635
          %v1797 = vunpack.c.h.b16 %v1635
          %v1798 = vunpack.c.l.b16 %v1636
          %v1799 = vunpack.c.h.b16 %v1636
          %v1800 = vunpack.c.l.b16 %v1637
          %v1801 = vunpack.c.h.b16 %v1637
          %v1802 = vunpack.c.l.b16 %v1638
          %v1803 = vunpack.c.h.b16 %v1638
          %v1804 = vunpack.c.l.b16 %v1639
          %v1805 = vunpack.c.h.b16 %v1639
          %v1806 = vunpack.c.l.b16 %v1640
          %v1807 = vunpack.c.h.b16 %v1640
          %v1808 = vunpack.c.l.b16 %v1641
          %v1809 = vunpack.c.h.b16 %v1641
          %v1810 = vunpack.c.l.b16 %v1642
          %v1811 = vunpack.c.h.b16 %v1642
          %v1812 = vunpack.c.l.b16 %v1643
          %v1813 = vunpack.c.h.b16 %v1643
          %v1814 = vunpack.c.l.b16 %v1644
          %v1815 = vunpack.c.h.b16 %v1644
          %v1816 = vunpack.c.l.b16 %v1645
          %v1817 = vunpack.c.h.b16 %v1645
          %v1818 = vunpack.c.l.b16 %v1646
          %v1819 = vunpack.c.h.b16 %v1646
          %v1820 = vunpack.c.l.b16 %v1647
          %v1821 = vunpack.c.h.b16 %v1647
          %v1822 = vunpack.c.l.b16 %v1648
          %v1823 = vunpack.c.h.b16 %v1648
          %v1824 = vunpack.c.l.b16 %v1649
          %v1825 = vunpack.c.h.b16 %v1649
          %v1826 = vunpack.c.l.b16 %v1650
          %v1827 = vunpack.c.h.b16 %v1650
          %v1828 = vunpack.c.l.b16 %v1651
          %v1829 = vunpack.c.h.b16 %v1651
          %v1830 = vunpack.c.l.b16 %v1652
          %v1831 = vunpack.c.h.b16 %v1652
          %v1832 = vunpack.c.l.b16 %v1653
          %v1833 = vunpack.c.h.b16 %v1653
          %v1834 = vunpack.c.l.b16 %v1654
          %v1835 = vunpack.c.h.b16 %v1654
          %v1836 = vunpack.c.l.b16 %v1655
          %v1837 = vunpack.c.h.b16 %v1655
          %v1838 = vunpack.c.l.b16 %v1656
          %v1839 = vunpack.c.h.b16 %v1656
          %v1840 = vunpack.c.l.b16 %v1657
          %v1841 = vunpack.c.h.b16 %v1657
          %v1842 = vunpack.c.l.b16 %v1658
          %v1843 = vunpack.c.h.b16 %v1658
          %v1844 = vunpack.c.l.b16 %v1659
          %v1845 = vunpack.c.h.b16 %v1659
          %v1846 = vunpack.c.l.b16 %v1660
          %v1847 = vunpack.c.h.b16 %v1660
          %v1848 = vunpack.c.l.b16 %v1661
          %v1849 = vunpack.c.h.b16 %v1661
          %v1850 = vunpack.c.l.b16 %v1662
          %v1851 = vunpack.c.h.b16 %v1662
          %v1852 = vunpack.c.l.b16 %v1663
          %v1853 = vunpack.c.h.b16 %v1663
          %v1854 = vunpack.c.l.b16 %v1664
          %v1855 = vunpack.c.h.b16 %v1664
          %v1856 = vunpack.c.l.b16 %v1665
          %v1857 = vunpack.c.h.b16 %v1665
          %v1858 = vunpack.c.l.b16 %v1666
          %v1859 = vunpack.c.h.b16 %v1666
          %v1860 = vunpack.c.l.b16 %v1667
          %v1861 = vunpack.c.h.b16 %v1667
          %v1862 = vunpack.c.l.b16 %v1668
          %v1863 = vunpack.c.h.b16 %v1668
          %v1864 = vunpack.c.l.b16 %v1669
          %v1865 = vunpack.c.h.b16 %v1669
          %v1866 = vunpack.c.l.b16 %v1670
          %v1867 = vunpack.c.h.b16 %v1670
          %v1868 = vunpack.c.l.b16 %v1671
          %v1869 = vunpack.c.h.b16 %v1671
          %v1870 = vunpack.c.l.b16 %v1672
          %v1871 = vunpack.c.h.b16 %v1672
          %v1872 = vunpack.c.l.b16 %v1673
          %v1873 = vunpack.c.h.b16 %v1673
          %v1874 = vunpack.c.l.b16 %v1674
          %v1875 = vunpack.c.h.b16 %v1674
          %v1876 = vunpack.c.l.b16 %v1675
          %v1877 = vunpack.c.h.b16 %v1675
          %v1878 = vunpack.c.l.b16 %v1676
          %v1879 = vunpack.c.h.b16 %v1676
          %v1880 = vunpack.c.l.b16 %v1677
          %v1881 = vunpack.c.h.b16 %v1677
          %v1882 = vunpack.c.l.b16 %v1678
          %v1883 = vunpack.c.h.b16 %v1678
          %v1884 = vunpack.c.l.b16 %v1679
          %v1885 = vunpack.c.h.b16 %v1679
          %v1886 = vunpack.c.l.b16 %v1680
          %v1887 = vunpack.c.h.b16 %v1680
          %v1888 = vunpack.c.l.b16 %v1681
          %v1889 = vunpack.c.h.b16 %v1681
          %v1890 = vunpack.c.l.b16 %v1682
          %v1891 = vunpack.c.h.b16 %v1682
          %v1892 = vunpack.c.l.b16 %v1683
          %v1893 = vunpack.c.h.b16 %v1683
          %v1894 = vunpack.c.l.b16 %v1684
          %v1895 = vunpack.c.h.b16 %v1684
          %v1896 = vunpack.c.l.b16 %v1685
          %v1897 = vunpack.c.h.b16 %v1685
          %v1898 = vunpack.c.l.b16 %v1686
          %v1899 = vunpack.c.h.b16 %v1686
          %v1900 = vunpack.c.l.b16 %v1687
          %v1901 = vunpack.c.h.b16 %v1687
          %v1902 = vpack.c.b16 %v1778, %v1774
          %v1903 = vpack.c.b16 %v1779, %v1775
          %v1904 = vpack.c.b16 %v1780, %v1776
          %v1905 = vpack.c.b16 %v1781, %v1777
          %v1906 = vpack.c.b16 %v1786, %v1782
          %v1907 = vpack.c.b16 %v1787, %v1783
          %v1908 = vpack.c.b16 %v1788, %v1784
          %v1909 = vpack.c.b16 %v1789, %v1785
          %v1910 = vpack.c.b16 %v1794, %v1790
          %v1911 = vpack.c.b16 %v1795, %v1791
          %v1912 = vpack.c.b16 %v1796, %v1792
          %v1913 = vpack.c.b16 %v1797, %v1793
          %v1914 = vpack.c.b16 %v1802, %v1798
          %v1915 = vpack.c.b16 %v1803, %v1799
          %v1916 = vpack.c.b16 %v1804, %v1800
          %v1917 = vpack.c.b16 %v1805, %v1801
          %v1918 = vpack.c.b16 %v1810, %v1806
          %v1919 = vpack.c.b16 %v1811, %v1807
          %v1920 = vpack.c.b16 %v1812, %v1808
          %v1921 = vpack.c.b16 %v1813, %v1809
          %v1922 = vpack.c.b16 %v1818, %v1814
          %v1923 = vpack.c.b16 %v1819, %v1815
          %v1924 = vpack.c.b16 %v1820, %v1816
          %v1925 = vpack.c.b16 %v1821, %v1817
          %v1926 = vpack.c.b16 %v1826, %v1822
          %v1927 = vpack.c.b16 %v1827, %v1823
          %v1928 = vpack.c.b16 %v1828, %v1824
          %v1929 = vpack.c.b16 %v1829, %v1825
          %v1930 = vpack.c.b16 %v1834, %v1830
          %v1931 = vpack.c.b16 %v1835, %v1831
          %v1932 = vpack.c.b16 %v1836, %v1832
          %v1933 = vpack.c.b16 %v1837, %v1833
          %v1934 = vpack.c.b16 %v1842, %v1838
          %v1935 = vpack.c.b16 %v1843, %v1839
          %v1936 = vpack.c.b16 %v1844, %v1840
          %v1937 = vpack.c.b16 %v1845, %v1841
          %v1938 = vpack.c.b16 %v1850, %v1846
          %v1939 = vpack.c.b16 %v1851, %v1847
          %v1940 = vpack.c.b16 %v1852, %v1848
          %v1941 = vpack.c.b16 %v1853, %v1849
          %v1942 = vpack.c.b16 %v1858, %v1854
          %v1943 = vpack.c.b16 %v1859, %v1855
          %v1944 = vpack.c.b16 %v1860, %v1856
          %v1945 = vpack.c.b16 %v1861, %v1857
          %v1946 = vpack.c.b16 %v1866, %v1862
          %v1947 = vpack.c.b16 %v1867, %v1863
          %v1948 = vpack.c.b16 %v1868, %v1864
          %v1949 = vpack.c.b16 %v1869, %v1865
          %v1950 = vpack.c.b16 %v1874, %v1870
          %v1951 = vpack.c.b16 %v1875, %v1871
          %v1952 = vpack.c.b16 %v1876, %v1872
          %v1953 = vpack.c.b16 %v1877, %v1873
          %v1954 = vpack.c.b16 %v1882, %v1878
          %v1955 = vpack.c.b16 %v1883, %v1879
          %v1956 = vpack.c.b16 %v1884, %v1880
          %v1957 = vpack.c.b16 %v1885, %v1881
          %v1958 = vpack.c.b16 %v1890, %v1886
          %v1959 = vpack.c.b16 %v1891, %v1887
          %v1960 = vpack.c.b16 %v1892, %v1888
          %v1961 = vpack.c.b16 %v1893, %v1889
          %v1962 = vpack.c.b16 %v1898, %v1894
          %v1963 = vpack.c.b16 %v1899, %v1895
          %v1964 = vpack.c.b16 %v1900, %v1896
          %v1965 = vpack.c.b16 %v1901, %v1897
          %2030 = vmatprep.subr.bf16.mxu0 %v1931
          %2031 = vmatpush1.bf16.msra.mxu0 %v1930
          %2032 = vmatprep.subr.bf16.mxu0 %v1927
          %2033 = vmatpush1.bf16.msra.mxu0 %v1926
          %2034 = vmatprep.subr.bf16.mxu0 %v1923
          %2035 = vmatpush1.bf16.msra.mxu0 %v1922
          %2036 = vmatprep.subr.bf16.mxu0 %v1919
          %2037 = vmatpush1.bf16.msra.mxu0 %v1918
          %2038 = vmatprep.subr.bf16.mxu0 %v1915
          %2039 = vmatpush1.bf16.msra.mxu0 %v1914
          %2040 = vmatprep.subr.bf16.mxu0 %v1911
          %2041 = vmatpush1.bf16.msra.mxu0 %v1910
          %2042 = vmatprep.subr.bf16.mxu0 %v1907
          %2043 = vmatpush1.bf16.msra.mxu0 %v1906
          %2044 = vmatprep.subr.bf16.mxu0 %v1903
          %2045 = vmatpush1.bf16.msra.mxu0 %v1902
          %2046 = vmatprep.subr.bf16.mxu0 %v1963
          %2047 = vmatpush2.bf16.msra.mxu0 %v1962
          %2048 = vmatprep.subr.bf16.mxu0 %v1959
          %2049 = vmatpush2.bf16.msra.mxu0 %v1958
          %2050 = vmatprep.subr.bf16.mxu0 %v1955
          %2051 = vmatpush2.bf16.msra.mxu0 %v1954
          %2052 = vmatprep.subr.bf16.mxu0 %v1951
          %2053 = vmatpush2.bf16.msra.mxu0 %v1950
          %2054 = vmatprep.subr.bf16.mxu0 %v1947
          %2055 = vmatpush2.bf16.msra.mxu0 %v1946
          %2056 = vmatprep.subr.bf16.mxu0 %v1943
          %2057 = vmatpush2.bf16.msra.mxu0 %v1942
          %2058 = vmatprep.subr.bf16.mxu0 %v1939
          %2059 = vmatpush2.bf16.msra.mxu0 %v1938
          %2060 = vmatprep.subr.bf16.mxu0 %v1935
          %2061 = vmatpush2.bf16.msra.mxu0 %v1934
          %2062 = vmatprep.mubr.bf16.mxu0 %v1094
          %2063 = vmatmul.mubr.bf16.gmra.mxu0 %v1093
          %v2064 = vpop.f32.mrf.mxu0
          %v2065 = vadd.f32 %v1693, %v2064
          %v2066 = vpop.f32.mrf.mxu0
          %v2067 = vadd.f32 %v1697, %v2066
          %v2068 = vpop.f32.mrf.mxu0
          %v2069 = vadd.f32 %v1693, %v2068
          %v2070 = vpop.f32.mrf.mxu0
          %v2071 = vadd.f32 %v1697, %v2070
          %2072 = vdwg.mxu0
          %2073 = vmatprep.subr.bf16.mxu0 %v1933
          %2074 = vmatpush1.bf16.msra.mxu0 %v1932
          %2075 = vmatprep.subr.bf16.mxu0 %v1929
          %2076 = vmatpush1.bf16.msra.mxu0 %v1928
          %2077 = vmatprep.subr.bf16.mxu0 %v1925
          %2078 = vmatpush1.bf16.msra.mxu0 %v1924
          %2079 = vmatprep.subr.bf16.mxu0 %v1921
          %2080 = vmatpush1.bf16.msra.mxu0 %v1920
          %2081 = vmatprep.subr.bf16.mxu0 %v1917
          %2082 = vmatpush1.bf16.msra.mxu0 %v1916
          %2083 = vmatprep.subr.bf16.mxu0 %v1913
          %2084 = vmatpush1.bf16.msra.mxu0 %v1912
          %2085 = vmatprep.subr.bf16.mxu0 %v1909
          %2086 = vmatpush1.bf16.msra.mxu0 %v1908
          %2087 = vmatprep.subr.bf16.mxu0 %v1905
          %2088 = vmatpush1.bf16.msra.mxu0 %v1904
          %2089 = vmatprep.subr.bf16.mxu0 %v1965
          %2090 = vmatpush2.bf16.msra.mxu0 %v1964
          %2091 = vmatprep.subr.bf16.mxu0 %v1961
          %2092 = vmatpush2.bf16.msra.mxu0 %v1960
          %2093 = vmatprep.subr.bf16.mxu0 %v1957
          %2094 = vmatpush2.bf16.msra.mxu0 %v1956
          %2095 = vmatprep.subr.bf16.mxu0 %v1953
          %2096 = vmatpush2.bf16.msra.mxu0 %v1952
          %2097 = vmatprep.subr.bf16.mxu0 %v1949
          %2098 = vmatpush2.bf16.msra.mxu0 %v1948
          %2099 = vmatprep.subr.bf16.mxu0 %v1945
          %2100 = vmatpush2.bf16.msra.mxu0 %v1944
          %2101 = vmatprep.subr.bf16.mxu0 %v1941
          %2102 = vmatpush2.bf16.msra.mxu0 %v1940
          %2103 = vmatprep.subr.bf16.mxu0 %v1937
          %2104 = vmatpush2.bf16.msra.mxu0 %v1936
          %2105 = vmatprep.mubr.bf16.mxu0 %v1094
          %2106 = vmatmul.mubr.bf16.gmra.mxu0 %v1093
          %v2107 = vpop.f32.mrf.mxu0
          %v2108 = vadd.f32 %v1701, %v2107
          %v2109 = vpop.f32.mrf.mxu0
          %v2110 = vadd.f32 %v1705, %v2109
          %v2111 = vpop.f32.mrf.mxu0
          %v2112 = vadd.f32 %v1701, %v2111
          %v2113 = vpop.f32.mrf.mxu0
          %v2114 = vadd.f32 %v1705, %v2113
          %2115 = vdwg.mxu0
          %v2116 = vmax.f32 %v2065, 0.0
          %v2117 = vmax.f32 %v2067, 0.0
          %v2118 = vmax.f32 %v2108, 0.0
          %v2119 = vmax.f32 %v2110, 0.0
          %v2120 = vmax.f32 %v2069, 0.0
          %v2121 = vmax.f32 %v2071, 0.0
          %v2122 = vmax.f32 %v2112, 0.0
          %v2123 = vmax.f32 %v2114, 0.0
          %v2124 = vpack.c.bf16 %v2120, %v2116
          %v2125 = vpack.c.bf16 %v2121, %v2117
          %v2126 = vpack.c.bf16 %v2122, %v2118
          %v2127 = vpack.c.bf16 %v2123, %v2119
          %v2132 = vunpack.c.l.b16 %v2124
          %v2133 = vunpack.c.l.b16 %v2125
          %v2134 = vunpack.c.l.b16 %v2126
          %v2135 = vunpack.c.l.b16 %v2127
          %v2136 = vunpack.c.h.b16 %v2124
          %v2137 = vunpack.c.h.b16 %v2125
          %v2138 = vunpack.c.h.b16 %v2126
          %v2139 = vunpack.c.h.b16 %v2127
          %v2140 = vpack.c.b16 %v2133, %v2132
          %v2141 = vpack.c.b16 %v2135, %v2134
          %v2142 = vpack.c.b16 %v2137, %v2136
          %v2143 = vpack.c.b16 %v2139, %v2138
          %2148 = vst [vmem:[#allocation3] sm:$0xff] %v2140
          %2149 = vst [vmem:[#allocation3 + $0x8] sm:$0xff] %v2141
          %2150 = vst [vmem:[#allocation3 + $0x10] sm:$0xff] %v2142
          %2151 = vst [vmem:[#allocation3 + $0x18] sm:$0xff] %v2143
          %v2152 = vld [vmem:[#allocation11] sm:$0xff]
          %v2153 = vld [vmem:[#allocation11 + $0x8] sm:$0xff]
          %v2154 = vld [vmem:[#allocation11 + $0x10] sm:$0xff]
          %v2155 = vld [vmem:[#allocation11 + $0x18] sm:$0xff]
          %v2156 = vld [vmem:[#allocation11 + $0x20] sm:$0xff]
          %v2157 = vld [vmem:[#allocation11 + $0x28] sm:$0xff]
          %v2158 = vld [vmem:[#allocation11 + $0x30] sm:$0xff]
          %v2159 = vld [vmem:[#allocation11 + $0x38] sm:$0xff]
          %v2160 = vld [vmem:[#allocation11 + $0x40] sm:$0xff]
          %v2161 = vld [vmem:[#allocation11 + $0x48] sm:$0xff]
          %v2162 = vld [vmem:[#allocation11 + $0x50] sm:$0xff]
          %v2163 = vld [vmem:[#allocation11 + $0x58] sm:$0xff]
          %v2164 = vld [vmem:[#allocation11 + $0x60] sm:$0xff]
          %v2165 = vld [vmem:[#allocation11 + $0x68] sm:$0xff]
          %v2166 = vld [vmem:[#allocation11 + $0x70] sm:$0xff]
          %v2167 = vld [vmem:[#allocation11 + $0x78] sm:$0xff]
          %v2168 = vld [vmem:[%s8] sm:$0x3]
          %v2170 = vlaneseq
          %v2171 = vshrl.u32 %v2170, 7
          %v2172 = vsub.s32 0, %v2171
          %v2173 = vrot.slane %v2168, %v2172
          %v2174 = vlaneseq
          %v2175 = vshrl.u32 %v2174, 7
          %v2176 = vsub.s32 1, %v2175
          %v2177 = vrot.slane %v2168, %v2176
          %v2196 = vunpack.c.l.b16 %v2152
          %v2197 = vunpack.c.h.b16 %v2152
          %v2198 = vunpack.c.l.b16 %v2153
          %v2199 = vunpack.c.h.b16 %v2153
          %v2200 = vunpack.c.l.b16 %v2154
          %v2201 = vunpack.c.h.b16 %v2154
          %v2202 = vunpack.c.l.b16 %v2155
          %v2203 = vunpack.c.h.b16 %v2155
          %v2204 = vunpack.c.l.b16 %v2156
          %v2205 = vunpack.c.h.b16 %v2156
          %v2206 = vunpack.c.l.b16 %v2157
          %v2207 = vunpack.c.h.b16 %v2157
          %v2208 = vunpack.c.l.b16 %v2158
          %v2209 = vunpack.c.h.b16 %v2158
          %v2210 = vunpack.c.l.b16 %v2159
          %v2211 = vunpack.c.h.b16 %v2159
          %v2212 = vunpack.c.l.b16 %v2160
          %v2213 = vunpack.c.h.b16 %v2160
          %v2214 = vunpack.c.l.b16 %v2161
          %v2215 = vunpack.c.h.b16 %v2161
          %v2216 = vunpack.c.l.b16 %v2162
          %v2217 = vunpack.c.h.b16 %v2162
          %v2218 = vunpack.c.l.b16 %v2163
          %v2219 = vunpack.c.h.b16 %v2163
          %v2220 = vunpack.c.l.b16 %v2164
          %v2221 = vunpack.c.h.b16 %v2164
          %v2222 = vunpack.c.l.b16 %v2165
          %v2223 = vunpack.c.h.b16 %v2165
          %v2224 = vunpack.c.l.b16 %v2166
          %v2225 = vunpack.c.h.b16 %v2166
          %v2226 = vunpack.c.l.b16 %v2167
          %v2227 = vunpack.c.h.b16 %v2167
          %v2228 = vpack.c.b16 %v2198, %v2196
          %v2229 = vpack.c.b16 %v2199, %v2197
          %v2230 = vpack.c.b16 %v2202, %v2200
          %v2231 = vpack.c.b16 %v2203, %v2201
          %v2232 = vpack.c.b16 %v2206, %v2204
          %v2233 = vpack.c.b16 %v2207, %v2205
          %v2234 = vpack.c.b16 %v2210, %v2208
          %v2235 = vpack.c.b16 %v2211, %v2209
          %v2236 = vpack.c.b16 %v2214, %v2212
          %v2237 = vpack.c.b16 %v2215, %v2213
          %v2238 = vpack.c.b16 %v2218, %v2216
          %v2239 = vpack.c.b16 %v2219, %v2217
          %v2240 = vpack.c.b16 %v2222, %v2220
          %v2241 = vpack.c.b16 %v2223, %v2221
          %v2242 = vpack.c.b16 %v2226, %v2224
          %v2243 = vpack.c.b16 %v2227, %v2225
          %2260 = vmatprep.subr.bf16.mxu0 %v2243
          %2261 = vmatpush1.bf16.msra.mxu0 %v2242
          %2262 = vmatprep.subr.bf16.mxu0 %v2241
          %2263 = vmatpush1.bf16.msra.mxu0 %v2240
          %2264 = vmatprep.subr.bf16.mxu0 %v2239
          %2265 = vmatpush1.bf16.msra.mxu0 %v2238
          %2266 = vmatprep.subr.bf16.mxu0 %v2237
          %2267 = vmatpush1.bf16.msra.mxu0 %v2236
          %2268 = vmatprep.subr.bf16.mxu0 %v2235
          %2269 = vmatpush1.bf16.msra.mxu0 %v2234
          %2270 = vmatprep.subr.bf16.mxu0 %v2233
          %2271 = vmatpush1.bf16.msra.mxu0 %v2232
          %2272 = vmatprep.subr.bf16.mxu0 %v2231
          %2273 = vmatpush1.bf16.msra.mxu0 %v2230
          %2274 = vmatprep.subr.bf16.mxu0 %v2229
          %2275 = vmatpush1.bf16.msra.mxu0 %v2228
          %2276 = vmatprep.subr.bf16.mxu0 0
          %2277 = vmatpush2.bf16.msra.mxu0 0
          %2278 = vmatprep.subr.bf16.mxu0 0
          %2279 = vmatpush2.bf16.msra.mxu0 0
          %2280 = vmatprep.subr.bf16.mxu0 0
          %2281 = vmatpush2.bf16.msra.mxu0 0
          %2282 = vmatprep.subr.bf16.mxu0 0
          %2283 = vmatpush2.bf16.msra.mxu0 0
          %2284 = vmatprep.subr.bf16.mxu0 0
          %2285 = vmatpush2.bf16.msra.mxu0 0
          %2286 = vmatprep.subr.bf16.mxu0 0
          %2287 = vmatpush2.bf16.msra.mxu0 0
          %2288 = vmatprep.subr.bf16.mxu0 0
          %2289 = vmatpush2.bf16.msra.mxu0 0
          %2290 = vmatprep.subr.bf16.mxu0 0
          %2291 = vmatpush2.bf16.msra.mxu0 0
          %2292 = vmatprep.mubr.bf16.mxu0 0
          %2293 = vmatmul.mubr.bf16.gmra.mxu0 %v1095
          %v2294 = vpop.f32.mrf.mxu0
          %v2295 = vadd.f32 %v2173, %v2294
          %v2296 = vpop.f32.mrf.mxu0
          %v2297 = vadd.f32 %v2177, %v2296
          %v2298 = vpop.f32.mrf.mxu0
          %v2299 = vadd.f32 %v2173, %v2298
          %v2300 = vpop.f32.mrf.mxu0
          %v2301 = vadd.f32 %v2177, %v2300
          %2302 = vdwg.mxu0
          %v2303 = vmax.f32 %v2295, 0.0
          %v2304 = vmax.f32 %v2297, 0.0
          %v2305 = vmax.f32 %v2299, 0.0
          %v2306 = vmax.f32 %v2301, 0.0
          %v2307 = vpack.c.bf16 %v2305, %v2303
          %v2308 = vpack.c.bf16 %v2306, %v2304
          %v2311 = vunpack.c.l.b16 %v2307
          %v2312 = vunpack.c.l.b16 %v2308
          %v2313 = vunpack.c.h.b16 %v2307
          %v2314 = vunpack.c.h.b16 %v2308
          %v2315 = vpack.c.b16 %v2312, %v2311
          %v2316 = vpack.c.b16 %v2314, %v2313
          %2319 = vst [vmem:[#allocation4] sm:$0xff] %v2315
          %2320 = vst [vmem:[#allocation4 + $0x8] sm:$0xff] %v2316
        $region112: #{tpu_custom_call.1} parent=79 // pred_fallthru
          _
        %p2321 = scmp.lt.s32.totalorder %s43, 2
        // Predicated region
        $region113: #{tpu_custom_call.1} parent=79 // pred_check
          %p2322 = pneg %p2321
        $region114: #{tpu_custom_call.1} parent=79 // pred_check_branch
          %2324 = sbr.rel (%p2322) target = $region116
        $region115: #{tpu_custom_call.1} parent=79 // pred_region
          %v2325 = vld [vmem:[#allocation2] sm:$0xff]
          %v2326 = vld [vmem:[#allocation2 + $0x8] sm:$0xff]
          %v2327 = vld [vmem:[#allocation2 + $0x10] sm:$0xff]
          %v2328 = vld [vmem:[#allocation2 + $0x18] sm:$0xff]
          %v2329 = vld [vmem:[%s710] sm:$0xf]
          %v2330 = vld [vmem:[%s710 + $0x4] sm:$0xf]
          %v2331 = vld [vmem:[%s710 + $0x8] sm:$0xf]
          %v2332 = vld [vmem:[%s710 + $0xc] sm:$0xf]
          %v2333 = vld [vmem:[%s710 + $0x10] sm:$0xf]
          %v2334 = vld [vmem:[%s710 + $0x14] sm:$0xf]
          %v2335 = vld [vmem:[%s710 + $0x18] sm:$0xf]
          %v2336 = vld [vmem:[%s710 + $0x1c] sm:$0xf]
          %v2337 = vld [vmem:[%s710 + $0x20] sm:$0xf]
          %v2338 = vld [vmem:[%s710 + $0x24] sm:$0xf]
          %v2339 = vld [vmem:[%s710 + $0x28] sm:$0xf]
          %v2340 = vld [vmem:[%s710 + $0x2c] sm:$0xf]
          %v2341 = vld [vmem:[%s710 + $0x30] sm:$0xf]
          %v2342 = vld [vmem:[%s710 + $0x34] sm:$0xf]
          %v2343 = vld [vmem:[%s710 + $0x38] sm:$0xf]
          %v2344 = vld [vmem:[%s710 + $0x3c] sm:$0xf]
          %v2345 = vld [vmem:[%s710 + $0x40] sm:$0xf]
          %v2346 = vld [vmem:[%s710 + $0x44] sm:$0xf]
          %v2347 = vld [vmem:[%s710 + $0x48] sm:$0xf]
          %v2348 = vld [vmem:[%s710 + $0x4c] sm:$0xf]
          %v2349 = vld [vmem:[%s710 + $0x50] sm:$0xf]
          %v2350 = vld [vmem:[%s710 + $0x54] sm:$0xf]
          %v2351 = vld [vmem:[%s710 + $0x58] sm:$0xf]
          %v2352 = vld [vmem:[%s710 + $0x5c] sm:$0xf]
          %v2353 = vld [vmem:[%s710 + $0x60] sm:$0xf]
          %v2354 = vld [vmem:[%s710 + $0x64] sm:$0xf]
          %v2355 = vld [vmem:[%s710 + $0x68] sm:$0xf]
          %v2356 = vld [vmem:[%s710 + $0x6c] sm:$0xf]
          %v2357 = vld [vmem:[%s710 + $0x70] sm:$0xf]
          %v2358 = vld [vmem:[%s710 + $0x74] sm:$0xf]
          %v2359 = vld [vmem:[%s710 + $0x78] sm:$0xf]
          %v2360 = vld [vmem:[%s710 + $0x7c] sm:$0xf]
          %v2361 = vld [vmem:[%s710 + $0x80] sm:$0xf]
          %v2362 = vld [vmem:[%s710 + $0x84] sm:$0xf]
          %v2363 = vld [vmem:[%s710 + $0x88] sm:$0xf]
          %v2364 = vld [vmem:[%s710 + $0x8c] sm:$0xf]
          %v2365 = vld [vmem:[%s710 + $0x90] sm:$0xf]
          %v2366 = vld [vmem:[%s710 + $0x94] sm:$0xf]
          %v2367 = vld [vmem:[%s710 + $0x98] sm:$0xf]
          %v2368 = vld [vmem:[%s710 + $0x9c] sm:$0xf]
          %v2369 = vld [vmem:[%s710 + $0xa0] sm:$0xf]
          %v2370 = vld [vmem:[%s710 + $0xa4] sm:$0xf]
          %v2371 = vld [vmem:[%s710 + $0xa8] sm:$0xf]
          %v2372 = vld [vmem:[%s710 + $0xac] sm:$0xf]
          %v2373 = vld [vmem:[%s710 + $0xb0] sm:$0xf]
          %v2374 = vld [vmem:[%s710 + $0xb4] sm:$0xf]
          %v2375 = vld [vmem:[%s710 + $0xb8] sm:$0xf]
          %v2376 = vld [vmem:[%s710 + $0xbc] sm:$0xf]
          %v2377 = vld [vmem:[%s710 + $0xc0] sm:$0xf]
          %v2378 = vld [vmem:[%s710 + $0xc4] sm:$0xf]
          %v2379 = vld [vmem:[%s710 + $0xc8] sm:$0xf]
          %v2380 = vld [vmem:[%s710 + $0xcc] sm:$0xf]
          %v2381 = vld [vmem:[%s710 + $0xd0] sm:$0xf]
          %v2382 = vld [vmem:[%s710 + $0xd4] sm:$0xf]
          %v2383 = vld [vmem:[%s710 + $0xd8] sm:$0xf]
          %v2384 = vld [vmem:[%s710 + $0xdc] sm:$0xf]
          %v2385 = vld [vmem:[%s710 + $0xe0] sm:$0xf]
          %v2386 = vld [vmem:[%s710 + $0xe4] sm:$0xf]
          %v2387 = vld [vmem:[%s710 + $0xe8] sm:$0xf]
          %v2388 = vld [vmem:[%s710 + $0xec] sm:$0xf]
          %v2389 = vld [vmem:[%s710 + $0xf0] sm:$0xf]
          %v2390 = vld [vmem:[%s710 + $0xf4] sm:$0xf]
          %v2391 = vld [vmem:[%s710 + $0xf8] sm:$0xf]
          %v2392 = vld [vmem:[%s710 + $0xfc] sm:$0xf]
          %v2393 = vld [vmem:[%s829] sm:$0x1]
          %v2395 = vlaneseq
          %v2396 = vshrl.u32 %v2395, 7
          %v2397 = vsub.s32 0, %v2396
          %v2398 = vrot.slane %v2393, %v2397
          %v2404 = vunpack.c.l.b16 %v2325
          %v2405 = vunpack.c.h.b16 %v2325
          %v2406 = vunpack.c.l.b16 %v2326
          %v2407 = vunpack.c.h.b16 %v2326
          %v2408 = vunpack.c.l.b16 %v2327
          %v2409 = vunpack.c.h.b16 %v2327
          %v2410 = vunpack.c.l.b16 %v2328
          %v2411 = vunpack.c.h.b16 %v2328
          %v2412 = vpack.c.b16 %v2408, %v2404
          %v2413 = vpack.c.b16 %v2409, %v2405
          %v2414 = vpack.c.b16 %v2410, %v2406
          %v2415 = vpack.c.b16 %v2411, %v2407
          %v2484 = vunpack.c.l.b16 %v2329
          %v2485 = vunpack.c.l.b16 %v2330
          %v2486 = vunpack.c.l.b16 %v2331
          %v2487 = vunpack.c.l.b16 %v2332
          %v2488 = vunpack.c.l.b16 %v2333
          %v2489 = vunpack.c.l.b16 %v2334
          %v2490 = vunpack.c.l.b16 %v2335
          %v2491 = vunpack.c.l.b16 %v2336
          %v2492 = vunpack.c.l.b16 %v2337
          %v2493 = vunpack.c.l.b16 %v2338
          %v2494 = vunpack.c.l.b16 %v2339
          %v2495 = vunpack.c.l.b16 %v2340
          %v2496 = vunpack.c.l.b16 %v2341
          %v2497 = vunpack.c.l.b16 %v2342
          %v2498 = vunpack.c.l.b16 %v2343
          %v2499 = vunpack.c.l.b16 %v2344
          %v2500 = vunpack.c.l.b16 %v2345
          %v2501 = vunpack.c.l.b16 %v2346
          %v2502 = vunpack.c.l.b16 %v2347
          %v2503 = vunpack.c.l.b16 %v2348
          %v2504 = vunpack.c.l.b16 %v2349
          %v2505 = vunpack.c.l.b16 %v2350
          %v2506 = vunpack.c.l.b16 %v2351
          %v2507 = vunpack.c.l.b16 %v2352
          %v2508 = vunpack.c.l.b16 %v2353
          %v2509 = vunpack.c.l.b16 %v2354
          %v2510 = vunpack.c.l.b16 %v2355
          %v2511 = vunpack.c.l.b16 %v2356
          %v2512 = vunpack.c.l.b16 %v2357
          %v2513 = vunpack.c.l.b16 %v2358
          %v2514 = vunpack.c.l.b16 %v2359
          %v2515 = vunpack.c.l.b16 %v2360
          %v2516 = vunpack.c.l.b16 %v2361
          %v2517 = vunpack.c.l.b16 %v2362
          %v2518 = vunpack.c.l.b16 %v2363
          %v2519 = vunpack.c.l.b16 %v2364
          %v2520 = vunpack.c.l.b16 %v2365
          %v2521 = vunpack.c.l.b16 %v2366
          %v2522 = vunpack.c.l.b16 %v2367
          %v2523 = vunpack.c.l.b16 %v2368
          %v2524 = vunpack.c.l.b16 %v2369
          %v2525 = vunpack.c.l.b16 %v2370
          %v2526 = vunpack.c.l.b16 %v2371
          %v2527 = vunpack.c.l.b16 %v2372
          %v2528 = vunpack.c.l.b16 %v2373
          %v2529 = vunpack.c.l.b16 %v2374
          %v2530 = vunpack.c.l.b16 %v2375
          %v2531 = vunpack.c.l.b16 %v2376
          %v2532 = vunpack.c.l.b16 %v2377
          %v2533 = vunpack.c.l.b16 %v2378
          %v2534 = vunpack.c.l.b16 %v2379
          %v2535 = vunpack.c.l.b16 %v2380
          %v2536 = vunpack.c.l.b16 %v2381
          %v2537 = vunpack.c.l.b16 %v2382
          %v2538 = vunpack.c.l.b16 %v2383
          %v2539 = vunpack.c.l.b16 %v2384
          %v2540 = vunpack.c.l.b16 %v2385
          %v2541 = vunpack.c.l.b16 %v2386
          %v2542 = vunpack.c.l.b16 %v2387
          %v2543 = vunpack.c.l.b16 %v2388
          %v2544 = vunpack.c.l.b16 %v2389
          %v2545 = vunpack.c.l.b16 %v2390
          %v2546 = vunpack.c.l.b16 %v2391
          %v2547 = vunpack.c.l.b16 %v2392
          %v2548 = vpack.c.b16 %v2485, %v2484
          %v2549 = vpack.c.b16 %v2487, %v2486
          %v2550 = vpack.c.b16 %v2489, %v2488
          %v2551 = vpack.c.b16 %v2491, %v2490
          %v2552 = vpack.c.b16 %v2493, %v2492
          %v2553 = vpack.c.b16 %v2495, %v2494
          %v2554 = vpack.c.b16 %v2497, %v2496
          %v2555 = vpack.c.b16 %v2499, %v2498
          %v2556 = vpack.c.b16 %v2501, %v2500
          %v2557 = vpack.c.b16 %v2503, %v2502
          %v2558 = vpack.c.b16 %v2505, %v2504
          %v2559 = vpack.c.b16 %v2507, %v2506
          %v2560 = vpack.c.b16 %v2509, %v2508
          %v2561 = vpack.c.b16 %v2511, %v2510
          %v2562 = vpack.c.b16 %v2513, %v2512
          %v2563 = vpack.c.b16 %v2515, %v2514
          %v2564 = vpack.c.b16 %v2517, %v2516
          %v2565 = vpack.c.b16 %v2519, %v2518
          %v2566 = vpack.c.b16 %v2521, %v2520
          %v2567 = vpack.c.b16 %v2523, %v2522
          %v2568 = vpack.c.b16 %v2525, %v2524
          %v2569 = vpack.c.b16 %v2527, %v2526
          %v2570 = vpack.c.b16 %v2529, %v2528
          %v2571 = vpack.c.b16 %v2531, %v2530
          %v2572 = vpack.c.b16 %v2533, %v2532
          %v2573 = vpack.c.b16 %v2535, %v2534
          %v2574 = vpack.c.b16 %v2537, %v2536
          %v2575 = vpack.c.b16 %v2539, %v2538
          %v2576 = vpack.c.b16 %v2541, %v2540
          %v2577 = vpack.c.b16 %v2543, %v2542
          %v2578 = vpack.c.b16 %v2545, %v2544
          %v2579 = vpack.c.b16 %v2547, %v2546
          %2612 = vmatprep.subr.bf16.mxu0 0
          %2613 = vmatpush1.bf16.msra.mxu0 %v2555
          %2614 = vmatprep.subr.bf16.mxu0 0
          %2615 = vmatpush1.bf16.msra.mxu0 %v2554
          %2616 = vmatprep.subr.bf16.mxu0 0
          %2617 = vmatpush1.bf16.msra.mxu0 %v2553
          %2618 = vmatprep.subr.bf16.mxu0 0
          %2619 = vmatpush1.bf16.msra.mxu0 %v2552
          %2620 = vmatprep.subr.bf16.mxu0 0
          %2621 = vmatpush1.bf16.msra.mxu0 %v2551
          %2622 = vmatprep.subr.bf16.mxu0 0
          %2623 = vmatpush1.bf16.msra.mxu0 %v2550
          %2624 = vmatprep.subr.bf16.mxu0 0
          %2625 = vmatpush1.bf16.msra.mxu0 %v2549
          %2626 = vmatprep.subr.bf16.mxu0 0
          %2627 = vmatpush1.bf16.msra.mxu0 %v2548
          %2628 = vmatprep.subr.bf16.mxu0 0
          %2629 = vmatpush2.bf16.msra.mxu0 %v2563
          %2630 = vmatprep.subr.bf16.mxu0 0
          %2631 = vmatpush2.bf16.msra.mxu0 %v2562
          %2632 = vmatprep.subr.bf16.mxu0 0
          %2633 = vmatpush2.bf16.msra.mxu0 %v2561
          %2634 = vmatprep.subr.bf16.mxu0 0
          %2635 = vmatpush2.bf16.msra.mxu0 %v2560
          %2636 = vmatprep.subr.bf16.mxu0 0
          %2637 = vmatpush2.bf16.msra.mxu0 %v2559
          %2638 = vmatprep.subr.bf16.mxu0 0
          %2639 = vmatpush2.bf16.msra.mxu0 %v2558
          %2640 = vmatprep.subr.bf16.mxu0 0
          %2641 = vmatpush2.bf16.msra.mxu0 %v2557
          %2642 = vmatprep.subr.bf16.mxu0 0
          %2643 = vmatpush2.bf16.msra.mxu0 %v2556
          %2644 = vmatprep.mubr.bf16.mxu0 %v2413
          %2645 = vmatmul.mubr.bf16.gmra.mxu0 %v2412
          %v2646 = vpop.f32.mrf.mxu0
          %v2647 = vadd.f32 %v2398, %v2646
          %v2648 = vpop.f32.mrf.mxu0
          %v2649 = vpop.f32.mrf.mxu0
          %v2650 = vadd.f32 %v2398, %v2649
          %v2651 = vpop.f32.mrf.mxu0
          %2652 = vdwg.mxu0
          %2653 = vmatprep.subr.bf16.mxu0 0
          %2654 = vmatpush1.bf16.msra.mxu0 %v2571
          %2655 = vmatprep.subr.bf16.mxu0 0
          %2656 = vmatpush1.bf16.msra.mxu0 %v2570
          %2657 = vmatprep.subr.bf16.mxu0 0
          %2658 = vmatpush1.bf16.msra.mxu0 %v2569
          %2659 = vmatprep.subr.bf16.mxu0 0
          %2660 = vmatpush1.bf16.msra.mxu0 %v2568
          %2661 = vmatprep.subr.bf16.mxu0 0
          %2662 = vmatpush1.bf16.msra.mxu0 %v2567
          %2663 = vmatprep.subr.bf16.mxu0 0
          %2664 = vmatpush1.bf16.msra.mxu0 %v2566
          %2665 = vmatprep.subr.bf16.mxu0 0
          %2666 = vmatpush1.bf16.msra.mxu0 %v2565
          %2667 = vmatprep.subr.bf16.mxu0 0
          %2668 = vmatpush1.bf16.msra.mxu0 %v2564
          %2669 = vmatprep.subr.bf16.mxu0 0
          %2670 = vmatpush2.bf16.msra.mxu0 %v2579
          %2671 = vmatprep.subr.bf16.mxu0 0
          %2672 = vmatpush2.bf16.msra.mxu0 %v2578
          %2673 = vmatprep.subr.bf16.mxu0 0
          %2674 = vmatpush2.bf16.msra.mxu0 %v2577
          %2675 = vmatprep.subr.bf16.mxu0 0
          %2676 = vmatpush2.bf16.msra.mxu0 %v2576
          %2677 = vmatprep.subr.bf16.mxu0 0
          %2678 = vmatpush2.bf16.msra.mxu0 %v2575
          %2679 = vmatprep.subr.bf16.mxu0 0
          %2680 = vmatpush2.bf16.msra.mxu0 %v2574
          %2681 = vmatprep.subr.bf16.mxu0 0
          %2682 = vmatpush2.bf16.msra.mxu0 %v2573
          %2683 = vmatprep.subr.bf16.mxu0 0
          %2684 = vmatpush2.bf16.msra.mxu0 %v2572
          %2685 = vmatprep.mubr.bf16.mxu0 %v2415
          %2686 = vmatmul.mubr.bf16.gmra.mxu0 %v2414
          %v2687 = vpop.f32.mrf.mxu0
          %v2688 = vadd.f32 %v2647, %v2687
          %v2689 = vpop.f32.mrf.mxu0
          %v2690 = vpop.f32.mrf.mxu0
          %v2691 = vadd.f32 %v2650, %v2690
          %v2692 = vpop.f32.mrf.mxu0
          %2693 = vdwg.mxu0
          %vm2694 = vcmp.gt.f32.partialorder %v2688, 20.0
          %vm2695 = vcmp.gt.f32.partialorder %v2691, 20.0
          %v2696 = vmin.f32 %v2688, 20.0
          %v2697 = vmin.f32 %v2691, 20.0
          %v2698 = vmul.f32 %v2696, 1.442695
          %v2699 = vpow.pop %v2698
          %v2700 = vmul.f32 %v2697, 1.442695
          %v2701 = vpow.pop %v2700
          %v2702 = vadd.f32 %v2699, 1.0
          %v2703 = vlog2.pop %v2702
          %v2704 = vmul.f32 %v2703, 0.6931472
          %v2705 = vmul.f32 -0.5, %v2699
          %v2706 = vadd.f32 %v2705, 1.0
          %v2707 = vmul.f32 %v2706, %v2699
          %v2708 = vand.u32 2147483647, %v2699
          %vm2709 = vcmp.lt.f32.partialorder %v2708, 0.0004427343
          %v2710 = vsel %vm2709, %v2707, %v2704
          %v2711 = vadd.f32 %v2701, 1.0
          %v2712 = vlog2.pop %v2711
          %v2713 = vmul.f32 %v2712, 0.6931472
          %v2714 = vmul.f32 -0.5, %v2701
          %v2715 = vadd.f32 %v2714, 1.0
          %v2716 = vmul.f32 %v2715, %v2701
          %v2717 = vand.u32 2147483647, %v2701
          %vm2718 = vcmp.lt.f32.partialorder %v2717, 0.0004427343
          %v2719 = vsel %vm2718, %v2716, %v2713
          %v2720 = vsel %vm2694, %v2688, %v2710
          %v2721 = vsel %vm2695, %v2691, %v2719
          %2722 = vst [vmem:[%s802] sm:$0xff] %v2720
          %2723 = vst [vmem:[%s802 + $0x8] sm:$0xff] %v2721
        $region116: #{tpu_custom_call.1} parent=79 // pred_fallthru
          _
        %v2724 = vld [vmem:[#allocation3] sm:$0xff]
        %v2725 = vld [vmem:[#allocation3 + $0x8] sm:$0xff]
        %v2726 = vld [vmem:[#allocation3 + $0x10] sm:$0xff]
        %v2727 = vld [vmem:[#allocation3 + $0x18] sm:$0xff]
        %v2728 = vld [vmem:[%s719] sm:$0xf]
        %v2729 = vld [vmem:[%s719 + $0x4] sm:$0xf]
        %v2730 = vld [vmem:[%s719 + $0x8] sm:$0xf]
        %v2731 = vld [vmem:[%s719 + $0xc] sm:$0xf]
        %v2732 = vld [vmem:[%s719 + $0x10] sm:$0xf]
        %v2733 = vld [vmem:[%s719 + $0x14] sm:$0xf]
        %v2734 = vld [vmem:[%s719 + $0x18] sm:$0xf]
        %v2735 = vld [vmem:[%s719 + $0x1c] sm:$0xf]
        %v2736 = vld [vmem:[%s719 + $0x20] sm:$0xf]
        %v2737 = vld [vmem:[%s719 + $0x24] sm:$0xf]
        %v2738 = vld [vmem:[%s719 + $0x28] sm:$0xf]
        %v2739 = vld [vmem:[%s719 + $0x2c] sm:$0xf]
        %v2740 = vld [vmem:[%s719 + $0x30] sm:$0xf]
        %v2741 = vld [vmem:[%s719 + $0x34] sm:$0xf]
        %v2742 = vld [vmem:[%s719 + $0x38] sm:$0xf]
        %v2743 = vld [vmem:[%s719 + $0x3c] sm:$0xf]
        %v2744 = vld [vmem:[%s719 + $0x40] sm:$0xf]
        %v2745 = vld [vmem:[%s719 + $0x44] sm:$0xf]
        %v2746 = vld [vmem:[%s719 + $0x48] sm:$0xf]
        %v2747 = vld [vmem:[%s719 + $0x4c] sm:$0xf]
        %v2748 = vld [vmem:[%s719 + $0x50] sm:$0xf]
        %v2749 = vld [vmem:[%s719 + $0x54] sm:$0xf]
        %v2750 = vld [vmem:[%s719 + $0x58] sm:$0xf]
        %v2751 = vld [vmem:[%s719 + $0x5c] sm:$0xf]
        %v2752 = vld [vmem:[%s719 + $0x60] sm:$0xf]
        %v2753 = vld [vmem:[%s719 + $0x64] sm:$0xf]
        %v2754 = vld [vmem:[%s719 + $0x68] sm:$0xf]
        %v2755 = vld [vmem:[%s719 + $0x6c] sm:$0xf]
        %v2756 = vld [vmem:[%s719 + $0x70] sm:$0xf]
        %v2757 = vld [vmem:[%s719 + $0x74] sm:$0xf]
        %v2758 = vld [vmem:[%s719 + $0x78] sm:$0xf]
        %v2759 = vld [vmem:[%s719 + $0x7c] sm:$0xf]
        %v2760 = vld [vmem:[%s719 + $0x80] sm:$0xf]
        %v2761 = vld [vmem:[%s719 + $0x84] sm:$0xf]
        %v2762 = vld [vmem:[%s719 + $0x88] sm:$0xf]
        %v2763 = vld [vmem:[%s719 + $0x8c] sm:$0xf]
        %v2764 = vld [vmem:[%s719 + $0x90] sm:$0xf]
        %v2765 = vld [vmem:[%s719 + $0x94] sm:$0xf]
        %v2766 = vld [vmem:[%s719 + $0x98] sm:$0xf]
        %v2767 = vld [vmem:[%s719 + $0x9c] sm:$0xf]
        %v2768 = vld [vmem:[%s719 + $0xa0] sm:$0xf]
        %v2769 = vld [vmem:[%s719 + $0xa4] sm:$0xf]
        %v2770 = vld [vmem:[%s719 + $0xa8] sm:$0xf]
        %v2771 = vld [vmem:[%s719 + $0xac] sm:$0xf]
        %v2772 = vld [vmem:[%s719 + $0xb0] sm:$0xf]
        %v2773 = vld [vmem:[%s719 + $0xb4] sm:$0xf]
        %v2774 = vld [vmem:[%s719 + $0xb8] sm:$0xf]
        %v2775 = vld [vmem:[%s719 + $0xbc] sm:$0xf]
        %v2776 = vld [vmem:[%s719 + $0xc0] sm:$0xf]
        %v2777 = vld [vmem:[%s719 + $0xc4] sm:$0xf]
        %v2778 = vld [vmem:[%s719 + $0xc8] sm:$0xf]
        %v2779 = vld [vmem:[%s719 + $0xcc] sm:$0xf]
        %v2780 = vld [vmem:[%s719 + $0xd0] sm:$0xf]
        %v2781 = vld [vmem:[%s719 + $0xd4] sm:$0xf]
        %v2782 = vld [vmem:[%s719 + $0xd8] sm:$0xf]
        %v2783 = vld [vmem:[%s719 + $0xdc] sm:$0xf]
        %v2784 = vld [vmem:[%s719 + $0xe0] sm:$0xf]
        %v2785 = vld [vmem:[%s719 + $0xe4] sm:$0xf]
        %v2786 = vld [vmem:[%s719 + $0xe8] sm:$0xf]
        %v2787 = vld [vmem:[%s719 + $0xec] sm:$0xf]
        %v2788 = vld [vmem:[%s719 + $0xf0] sm:$0xf]
        %v2789 = vld [vmem:[%s719 + $0xf4] sm:$0xf]
        %v2790 = vld [vmem:[%s719 + $0xf8] sm:$0xf]
        %v2791 = vld [vmem:[%s719 + $0xfc] sm:$0xf]
        %v2792 = vld [vmem:[%s834] sm:$0x1]
        %v2794 = vlaneseq
        %v2795 = vshrl.u32 %v2794, 7
        %v2796 = vsub.s32 0, %v2795
        %v2797 = vrot.slane %v2792, %v2796
        %v2803 = vunpack.c.l.b16 %v2724
        %v2804 = vunpack.c.h.b16 %v2724
        %v2805 = vunpack.c.l.b16 %v2725
        %v2806 = vunpack.c.h.b16 %v2725
        %v2807 = vunpack.c.l.b16 %v2726
        %v2808 = vunpack.c.h.b16 %v2726
        %v2809 = vunpack.c.l.b16 %v2727
        %v2810 = vunpack.c.h.b16 %v2727
        %v2811 = vpack.c.b16 %v2807, %v2803
        %v2812 = vpack.c.b16 %v2808, %v2804
        %v2813 = vpack.c.b16 %v2809, %v2805
        %v2814 = vpack.c.b16 %v2810, %v2806
        %v2883 = vunpack.c.l.b16 %v2728
        %v2884 = vunpack.c.l.b16 %v2729
        %v2885 = vunpack.c.l.b16 %v2730
        %v2886 = vunpack.c.l.b16 %v2731
        %v2887 = vunpack.c.l.b16 %v2732
        %v2888 = vunpack.c.l.b16 %v2733
        %v2889 = vunpack.c.l.b16 %v2734
        %v2890 = vunpack.c.l.b16 %v2735
        %v2891 = vunpack.c.l.b16 %v2736
        %v2892 = vunpack.c.l.b16 %v2737
        %v2893 = vunpack.c.l.b16 %v2738
        %v2894 = vunpack.c.l.b16 %v2739
        %v2895 = vunpack.c.l.b16 %v2740
        %v2896 = vunpack.c.l.b16 %v2741
        %v2897 = vunpack.c.l.b16 %v2742
        %v2898 = vunpack.c.l.b16 %v2743
        %v2899 = vunpack.c.l.b16 %v2744
        %v2900 = vunpack.c.l.b16 %v2745
        %v2901 = vunpack.c.l.b16 %v2746
        %v2902 = vunpack.c.l.b16 %v2747
        %v2903 = vunpack.c.l.b16 %v2748
        %v2904 = vunpack.c.l.b16 %v2749
        %v2905 = vunpack.c.l.b16 %v2750
        %v2906 = vunpack.c.l.b16 %v2751
        %v2907 = vunpack.c.l.b16 %v2752
        %v2908 = vunpack.c.l.b16 %v2753
        %v2909 = vunpack.c.l.b16 %v2754
        %v2910 = vunpack.c.l.b16 %v2755
        %v2911 = vunpack.c.l.b16 %v2756
        %v2912 = vunpack.c.l.b16 %v2757
        %v2913 = vunpack.c.l.b16 %v2758
        %v2914 = vunpack.c.l.b16 %v2759
        %v2915 = vunpack.c.l.b16 %v2760
        %v2916 = vunpack.c.l.b16 %v2761
        %v2917 = vunpack.c.l.b16 %v2762
        %v2918 = vunpack.c.l.b16 %v2763
        %v2919 = vunpack.c.l.b16 %v2764
        %v2920 = vunpack.c.l.b16 %v2765
        %v2921 = vunpack.c.l.b16 %v2766
        %v2922 = vunpack.c.l.b16 %v2767
        %v2923 = vunpack.c.l.b16 %v2768
        %v2924 = vunpack.c.l.b16 %v2769
        %v2925 = vunpack.c.l.b16 %v2770
        %v2926 = vunpack.c.l.b16 %v2771
        %v2927 = vunpack.c.l.b16 %v2772
        %v2928 = vunpack.c.l.b16 %v2773
        %v2929 = vunpack.c.l.b16 %v2774
        %v2930 = vunpack.c.l.b16 %v2775
        %v2931 = vunpack.c.l.b16 %v2776
        %v2932 = vunpack.c.l.b16 %v2777
        %v2933 = vunpack.c.l.b16 %v2778
        %v2934 = vunpack.c.l.b16 %v2779
        %v2935 = vunpack.c.l.b16 %v2780
        %v2936 = vunpack.c.l.b16 %v2781
        %v2937 = vunpack.c.l.b16 %v2782
        %v2938 = vunpack.c.l.b16 %v2783
        %v2939 = vunpack.c.l.b16 %v2784
        %v2940 = vunpack.c.l.b16 %v2785
        %v2941 = vunpack.c.l.b16 %v2786
        %v2942 = vunpack.c.l.b16 %v2787
        %v2943 = vunpack.c.l.b16 %v2788
        %v2944 = vunpack.c.l.b16 %v2789
        %v2945 = vunpack.c.l.b16 %v2790
        %v2946 = vunpack.c.l.b16 %v2791
        %v2947 = vpack.c.b16 %v2884, %v2883
        %v2948 = vpack.c.b16 %v2886, %v2885
        %v2949 = vpack.c.b16 %v2888, %v2887
        %v2950 = vpack.c.b16 %v2890, %v2889
        %v2951 = vpack.c.b16 %v2892, %v2891
        %v2952 = vpack.c.b16 %v2894, %v2893
        %v2953 = vpack.c.b16 %v2896, %v2895
        %v2954 = vpack.c.b16 %v2898, %v2897
        %v2955 = vpack.c.b16 %v2900, %v2899
        %v2956 = vpack.c.b16 %v2902, %v2901
        %v2957 = vpack.c.b16 %v2904, %v2903
        %v2958 = vpack.c.b16 %v2906, %v2905
        %v2959 = vpack.c.b16 %v2908, %v2907
        %v2960 = vpack.c.b16 %v2910, %v2909
        %v2961 = vpack.c.b16 %v2912, %v2911
        %v2962 = vpack.c.b16 %v2914, %v2913
        %v2963 = vpack.c.b16 %v2916, %v2915
        %v2964 = vpack.c.b16 %v2918, %v2917
        %v2965 = vpack.c.b16 %v2920, %v2919
        %v2966 = vpack.c.b16 %v2922, %v2921
        %v2967 = vpack.c.b16 %v2924, %v2923
        %v2968 = vpack.c.b16 %v2926, %v2925
        %v2969 = vpack.c.b16 %v2928, %v2927
        %v2970 = vpack.c.b16 %v2930, %v2929
        %v2971 = vpack.c.b16 %v2932, %v2931
        %v2972 = vpack.c.b16 %v2934, %v2933
        %v2973 = vpack.c.b16 %v2936, %v2935
        %v2974 = vpack.c.b16 %v2938, %v2937
        %v2975 = vpack.c.b16 %v2940, %v2939
        %v2976 = vpack.c.b16 %v2942, %v2941
        %v2977 = vpack.c.b16 %v2944, %v2943
        %v2978 = vpack.c.b16 %v2946, %v2945
        %3011 = vmatprep.subr.bf16.mxu0 0
        %3012 = vmatpush1.bf16.msra.mxu0 %v2954
        %3013 = vmatprep.subr.bf16.mxu0 0
        %3014 = vmatpush1.bf16.msra.mxu0 %v2953
        %3015 = vmatprep.subr.bf16.mxu0 0
        %3016 = vmatpush1.bf16.msra.mxu0 %v2952
        %3017 = vmatprep.subr.bf16.mxu0 0
        %3018 = vmatpush1.bf16.msra.mxu0 %v2951
        %3019 = vmatprep.subr.bf16.mxu0 0
        %3020 = vmatpush1.bf16.msra.mxu0 %v2950
        %3021 = vmatprep.subr.bf16.mxu0 0
        %3022 = vmatpush1.bf16.msra.mxu0 %v2949
        %3023 = vmatprep.subr.bf16.mxu0 0
        %3024 = vmatpush1.bf16.msra.mxu0 %v2948
        %3025 = vmatprep.subr.bf16.mxu0 0
        %3026 = vmatpush1.bf16.msra.mxu0 %v2947
        %3027 = vmatprep.subr.bf16.mxu0 0
        %3028 = vmatpush2.bf16.msra.mxu0 %v2962
        %3029 = vmatprep.subr.bf16.mxu0 0
        %3030 = vmatpush2.bf16.msra.mxu0 %v2961
        %3031 = vmatprep.subr.bf16.mxu0 0
        %3032 = vmatpush2.bf16.msra.mxu0 %v2960
        %3033 = vmatprep.subr.bf16.mxu0 0
        %3034 = vmatpush2.bf16.msra.mxu0 %v2959
        %3035 = vmatprep.subr.bf16.mxu0 0
        %3036 = vmatpush2.bf16.msra.mxu0 %v2958
        %3037 = vmatprep.subr.bf16.mxu0 0
        %3038 = vmatpush2.bf16.msra.mxu0 %v2957
        %3039 = vmatprep.subr.bf16.mxu0 0
        %3040 = vmatpush2.bf16.msra.mxu0 %v2956
        %3041 = vmatprep.subr.bf16.mxu0 0
        %3042 = vmatpush2.bf16.msra.mxu0 %v2955
        %3043 = vmatprep.mubr.bf16.mxu0 %v2812
        %3044 = vmatmul.mubr.bf16.gmra.mxu0 %v2811
        %v3045 = vpop.f32.mrf.mxu0
        %v3046 = vadd.f32 %v2797, %v3045
        %v3047 = vpop.f32.mrf.mxu0
        %v3048 = vpop.f32.mrf.mxu0
        %v3049 = vadd.f32 %v2797, %v3048
        %v3050 = vpop.f32.mrf.mxu0
        %3051 = vdwg.mxu0
        %3052 = vmatprep.subr.bf16.mxu0 0
        %3053 = vmatpush1.bf16.msra.mxu0 %v2970
        %3054 = vmatprep.subr.bf16.mxu0 0
        %3055 = vmatpush1.bf16.msra.mxu0 %v2969
        %3056 = vmatprep.subr.bf16.mxu0 0
        %3057 = vmatpush1.bf16.msra.mxu0 %v2968
        %3058 = vmatprep.subr.bf16.mxu0 0
        %3059 = vmatpush1.bf16.msra.mxu0 %v2967
        %3060 = vmatprep.subr.bf16.mxu0 0
        %3061 = vmatpush1.bf16.msra.mxu0 %v2966
        %3062 = vmatprep.subr.bf16.mxu0 0
        %3063 = vmatpush1.bf16.msra.mxu0 %v2965
        %3064 = vmatprep.subr.bf16.mxu0 0
        %3065 = vmatpush1.bf16.msra.mxu0 %v2964
        %3066 = vmatprep.subr.bf16.mxu0 0
        %3067 = vmatpush1.bf16.msra.mxu0 %v2963
        %3068 = vmatprep.subr.bf16.mxu0 0
        %3069 = vmatpush2.bf16.msra.mxu0 %v2978
        %3070 = vmatprep.subr.bf16.mxu0 0
        %3071 = vmatpush2.bf16.msra.mxu0 %v2977
        %3072 = vmatprep.subr.bf16.mxu0 0
        %3073 = vmatpush2.bf16.msra.mxu0 %v2976
        %3074 = vmatprep.subr.bf16.mxu0 0
        %3075 = vmatpush2.bf16.msra.mxu0 %v2975
        %3076 = vmatprep.subr.bf16.mxu0 0
        %3077 = vmatpush2.bf16.msra.mxu0 %v2974
        %3078 = vmatprep.subr.bf16.mxu0 0
        %3079 = vmatpush2.bf16.msra.mxu0 %v2973
        %3080 = vmatprep.subr.bf16.mxu0 0
        %3081 = vmatpush2.bf16.msra.mxu0 %v2972
        %3082 = vmatprep.subr.bf16.mxu0 0
        %3083 = vmatpush2.bf16.msra.mxu0 %v2971
        %3084 = vmatprep.mubr.bf16.mxu0 %v2814
        %3085 = vmatmul.mubr.bf16.gmra.mxu0 %v2813
        %v3086 = vpop.f32.mrf.mxu0
        %v3087 = vadd.f32 %v3046, %v3086
        %v3088 = vpop.f32.mrf.mxu0
        %v3089 = vpop.f32.mrf.mxu0
        %v3090 = vadd.f32 %v3049, %v3089
        %v3091 = vpop.f32.mrf.mxu0
        %3092 = vdwg.mxu0
        %vm3093 = vcmp.gt.f32.partialorder %v3087, 20.0
        %vm3094 = vcmp.gt.f32.partialorder %v3090, 20.0
        %v3095 = vmin.f32 %v3087, 20.0
        %v3096 = vmin.f32 %v3090, 20.0
        %v3097 = vmul.f32 %v3095, 1.442695
        %v3098 = vpow.pop %v3097
        %v3099 = vmul.f32 %v3096, 1.442695
        %v3100 = vpow.pop %v3099
        %v3101 = vadd.f32 %v3098, 1.0
        %v3102 = vlog2.pop %v3101
        %v3103 = vmul.f32 %v3102, 0.6931472
        %v3104 = vmul.f32 -0.5, %v3098
        %v3105 = vadd.f32 %v3104, 1.0
        %v3106 = vmul.f32 %v3105, %v3098
        %v3107 = vand.u32 2147483647, %v3098
        %vm3108 = vcmp.lt.f32.partialorder %v3107, 0.0004427343
        %v3109 = vsel %vm3108, %v3106, %v3103
        %v3110 = vadd.f32 %v3100, 1.0
        %v3111 = vlog2.pop %v3110
        %v3112 = vmul.f32 %v3111, 0.6931472
        %v3113 = vmul.f32 -0.5, %v3100
        %v3114 = vadd.f32 %v3113, 1.0
        %v3115 = vmul.f32 %v3114, %v3100
        %v3116 = vand.u32 2147483647, %v3100
        %vm3117 = vcmp.lt.f32.partialorder %v3116, 0.0004427343
        %v3118 = vsel %vm3117, %v3115, %v3112
        %v3119 = vsel %vm3093, %v3087, %v3109
        %v3120 = vsel %vm3094, %v3090, %v3118
        %3121 = vst [vmem:[%s809] sm:$0xff] %v3119
        %3122 = vst [vmem:[%s809 + $0x8] sm:$0xff] %v3120
        %p3123 = scmp.lt.s32.totalorder %s43, 1
        // Predicated region
        $region117: #{tpu_custom_call.1} parent=79 // pred_check
          %p3124 = pneg %p3123
        $region118: #{tpu_custom_call.1} parent=79 // pred_check_branch
          %3126 = sbr.rel (%p3124) target = $region120
        $region119: #{tpu_custom_call.1} parent=79 // pred_region
          %v3127 = vld [vmem:[#allocation4] sm:$0xff]
          %v3128 = vld [vmem:[#allocation4 + $0x8] sm:$0xff]
          %v3129 = vld [vmem:[%s728] sm:$0xf]
          %v3130 = vld [vmem:[%s728 + $0x4] sm:$0xf]
          %v3131 = vld [vmem:[%s728 + $0x8] sm:$0xf]
          %v3132 = vld [vmem:[%s728 + $0xc] sm:$0xf]
          %v3133 = vld [vmem:[%s728 + $0x10] sm:$0xf]
          %v3134 = vld [vmem:[%s728 + $0x14] sm:$0xf]
          %v3135 = vld [vmem:[%s728 + $0x18] sm:$0xf]
          %v3136 = vld [vmem:[%s728 + $0x1c] sm:$0xf]
          %v3137 = vld [vmem:[%s728 + $0x20] sm:$0xf]
          %v3138 = vld [vmem:[%s728 + $0x24] sm:$0xf]
          %v3139 = vld [vmem:[%s728 + $0x28] sm:$0xf]
          %v3140 = vld [vmem:[%s728 + $0x2c] sm:$0xf]
          %v3141 = vld [vmem:[%s728 + $0x30] sm:$0xf]
          %v3142 = vld [vmem:[%s728 + $0x34] sm:$0xf]
          %v3143 = vld [vmem:[%s728 + $0x38] sm:$0xf]
          %v3144 = vld [vmem:[%s728 + $0x3c] sm:$0xf]
          %v3145 = vld [vmem:[%s728 + $0x40] sm:$0xf]
          %v3146 = vld [vmem:[%s728 + $0x44] sm:$0xf]
          %v3147 = vld [vmem:[%s728 + $0x48] sm:$0xf]
          %v3148 = vld [vmem:[%s728 + $0x4c] sm:$0xf]
          %v3149 = vld [vmem:[%s728 + $0x50] sm:$0xf]
          %v3150 = vld [vmem:[%s728 + $0x54] sm:$0xf]
          %v3151 = vld [vmem:[%s728 + $0x58] sm:$0xf]
          %v3152 = vld [vmem:[%s728 + $0x5c] sm:$0xf]
          %v3153 = vld [vmem:[%s728 + $0x60] sm:$0xf]
          %v3154 = vld [vmem:[%s728 + $0x64] sm:$0xf]
          %v3155 = vld [vmem:[%s728 + $0x68] sm:$0xf]
          %v3156 = vld [vmem:[%s728 + $0x6c] sm:$0xf]
          %v3157 = vld [vmem:[%s728 + $0x70] sm:$0xf]
          %v3158 = vld [vmem:[%s728 + $0x74] sm:$0xf]
          %v3159 = vld [vmem:[%s728 + $0x78] sm:$0xf]
          %v3160 = vld [vmem:[%s728 + $0x7c] sm:$0xf]
          %v3161 = vld [vmem:[%s841] sm:$0x1]
          %v3163 = vlaneseq
          %v3164 = vshrl.u32 %v3163, 7
          %v3165 = vsub.s32 0, %v3164
          %v3166 = vrot.slane %v3161, %v3165
          %v3170 = vunpack.c.l.b16 %v3127
          %v3171 = vunpack.c.h.b16 %v3127
          %v3172 = vunpack.c.l.b16 %v3128
          %v3173 = vunpack.c.h.b16 %v3128
          %v3174 = vpack.c.b16 %v3172, %v3170
          %v3175 = vpack.c.b16 %v3173, %v3171
          %v3210 = vunpack.c.l.b16 %v3129
          %v3211 = vunpack.c.l.b16 %v3130
          %v3212 = vunpack.c.l.b16 %v3131
          %v3213 = vunpack.c.l.b16 %v3132
          %v3214 = vunpack.c.l.b16 %v3133
          %v3215 = vunpack.c.l.b16 %v3134
          %v3216 = vunpack.c.l.b16 %v3135
          %v3217 = vunpack.c.l.b16 %v3136
          %v3218 = vunpack.c.l.b16 %v3137
          %v3219 = vunpack.c.l.b16 %v3138
          %v3220 = vunpack.c.l.b16 %v3139
          %v3221 = vunpack.c.l.b16 %v3140
          %v3222 = vunpack.c.l.b16 %v3141
          %v3223 = vunpack.c.l.b16 %v3142
          %v3224 = vunpack.c.l.b16 %v3143
          %v3225 = vunpack.c.l.b16 %v3144
          %v3226 = vunpack.c.l.b16 %v3145
          %v3227 = vunpack.c.l.b16 %v3146
          %v3228 = vunpack.c.l.b16 %v3147
          %v3229 = vunpack.c.l.b16 %v3148
          %v3230 = vunpack.c.l.b16 %v3149
          %v3231 = vunpack.c.l.b16 %v3150
          %v3232 = vunpack.c.l.b16 %v3151
          %v3233 = vunpack.c.l.b16 %v3152
          %v3234 = vunpack.c.l.b16 %v3153
          %v3235 = vunpack.c.l.b16 %v3154
          %v3236 = vunpack.c.l.b16 %v3155
          %v3237 = vunpack.c.l.b16 %v3156
          %v3238 = vunpack.c.l.b16 %v3157
          %v3239 = vunpack.c.l.b16 %v3158
          %v3240 = vunpack.c.l.b16 %v3159
          %v3241 = vunpack.c.l.b16 %v3160
          %v3242 = vpack.c.b16 %v3211, %v3210
          %v3243 = vpack.c.b16 %v3213, %v3212
          %v3244 = vpack.c.b16 %v3215, %v3214
          %v3245 = vpack.c.b16 %v3217, %v3216
          %v3246 = vpack.c.b16 %v3219, %v3218
          %v3247 = vpack.c.b16 %v3221, %v3220
          %v3248 = vpack.c.b16 %v3223, %v3222
          %v3249 = vpack.c.b16 %v3225, %v3224
          %v3250 = vpack.c.b16 %v3227, %v3226
          %v3251 = vpack.c.b16 %v3229, %v3228
          %v3252 = vpack.c.b16 %v3231, %v3230
          %v3253 = vpack.c.b16 %v3233, %v3232
          %v3254 = vpack.c.b16 %v3235, %v3234
          %v3255 = vpack.c.b16 %v3237, %v3236
          %v3256 = vpack.c.b16 %v3239, %v3238
          %v3257 = vpack.c.b16 %v3241, %v3240
          %3274 = vmatprep.subr.bf16.mxu0 0
          %3275 = vmatpush1.bf16.msra.mxu0 %v3249
          %3276 = vmatprep.subr.bf16.mxu0 0
          %3277 = vmatpush1.bf16.msra.mxu0 %v3248
          %3278 = vmatprep.subr.bf16.mxu0 0
          %3279 = vmatpush1.bf16.msra.mxu0 %v3247
          %3280 = vmatprep.subr.bf16.mxu0 0
          %3281 = vmatpush1.bf16.msra.mxu0 %v3246
          %3282 = vmatprep.subr.bf16.mxu0 0
          %3283 = vmatpush1.bf16.msra.mxu0 %v3245
          %3284 = vmatprep.subr.bf16.mxu0 0
          %3285 = vmatpush1.bf16.msra.mxu0 %v3244
          %3286 = vmatprep.subr.bf16.mxu0 0
          %3287 = vmatpush1.bf16.msra.mxu0 %v3243
          %3288 = vmatprep.subr.bf16.mxu0 0
          %3289 = vmatpush1.bf16.msra.mxu0 %v3242
          %3290 = vmatprep.subr.bf16.mxu0 0
          %3291 = vmatpush2.bf16.msra.mxu0 %v3257
          %3292 = vmatprep.subr.bf16.mxu0 0
          %3293 = vmatpush2.bf16.msra.mxu0 %v3256
          %3294 = vmatprep.subr.bf16.mxu0 0
          %3295 = vmatpush2.bf16.msra.mxu0 %v3255
          %3296 = vmatprep.subr.bf16.mxu0 0
          %3297 = vmatpush2.bf16.msra.mxu0 %v3254
          %3298 = vmatprep.subr.bf16.mxu0 0
          %3299 = vmatpush2.bf16.msra.mxu0 %v3253
          %3300 = vmatprep.subr.bf16.mxu0 0
          %3301 = vmatpush2.bf16.msra.mxu0 %v3252
          %3302 = vmatprep.subr.bf16.mxu0 0
          %3303 = vmatpush2.bf16.msra.mxu0 %v3251
          %3304 = vmatprep.subr.bf16.mxu0 0
          %3305 = vmatpush2.bf16.msra.mxu0 %v3250
          %3306 = vmatprep.mubr.bf16.mxu0 %v3175
          %3307 = vmatmul.mubr.bf16.gmra.mxu0 %v3174
          %v3308 = vpop.f32.mrf.mxu0
          %v3309 = vadd.f32 %v3166, %v3308
          %v3310 = vpop.f32.mrf.mxu0
          %v3311 = vpop.f32.mrf.mxu0
          %v3312 = vadd.f32 %v3166, %v3311
          %v3313 = vpop.f32.mrf.mxu0
          %3314 = vdwg.mxu0
          %v3315 = vmul.f32 %v3309, 0.5
          %v3316 = vmul.f32 %v3312, 0.5
          %v3317 = vtanh.pop %v3315
          %v3318 = vtanh.pop %v3316
          %v3319 = vmul.f32 %v3317, 0.5
          %v3320 = vmul.f32 %v3318, 0.5
          %v3321 = vadd.f32 %v3319, 0.5
          %v3322 = vadd.f32 %v3320, 0.5
          %3323 = vst [vmem:[%s816] sm:$0xff] %v3321
          %3324 = vst [vmem:[%s816 + $0x8] sm:$0xff] %v3322
        $region120: #{tpu_custom_call.1} parent=79 // pred_fallthru
          _
        %s3325 = sand.u32 %s430, 1
        %s3326 = scalar_lea.sflag [#allocation7], %s3325
        %s3327 = sand.u32 %s430, 1
        %s3328 = smul.addr %s3327, 16
        %s3329 = scalar_lea.vmem [#allocation16], %s3328
        %s3330 = sand.u32 %s38, 1
        %s3331 = scalar_lea.sflag [#allocation18], %s3330
        %s3332 = sand.u32 %s458, 1
        %s3333 = smul.addr %s3332, 16
        %s3334 = scalar_lea.vmem [#allocation17], %s3333
        %s3335 = sand.u32 %s38, 1
        %s3336 = scalar_lea.sflag [#allocation18], %s3335
        %s3337 = sand.u32 %s490, 1
        %s3338 = smul.addr %s3337, 16
        %s3339 = scalar_lea.vmem [#allocation19], %s3338
        // Predicated region
        $region121: #{tpu_custom_call.1} parent=79 // pred_check
          %p3340 = pneg %p440
        $region122: #{tpu_custom_call.1} parent=79 // pred_check_branch
          %3342 = sbr.rel (%p3340) target = $region124
        $region123: #{tpu_custom_call.1} parent=79 // pred_region
          %p3343 = scmp.lt.s32.totalorder %s43, 1
          %s3344 = scalar_select %p3343, %s43, 1
          %s3345 = smul.u32 2, %s42
          %s3347 = ssub.s32 256, 256
          %3348 = vsyncadd %s3326, %s3347
          %s3349 = smul.addr %s3345, 2
          %s3350 = sadd.s32 %s3344, %s3349
          %s3351 = smul.addr %s3350, 128
          %s3352 = scalar_lea.hbm %s15, %s3351
          %s3353 = sshll.u32 %s3329, 4
          %s3354 = int_to_ptr.vmem [resolvable:$true] %s3353
          %3359 = dma.vmem_to_hbm [thread:$0]  %s3354, 256, %s3352, %s3326, 128, 256, 8
        $region124: #{tpu_custom_call.1} parent=79 // pred_fallthru
          _
        // Predicated region
        $region125: #{tpu_custom_call.1} parent=79 // pred_check
          %p3360 = pneg %p468
        $region126: #{tpu_custom_call.1} parent=79 // pred_check_branch
          %3362 = sbr.rel (%p3360) target = $region128
        $region127: #{tpu_custom_call.1} parent=79 // pred_region
          %s3363 = smul.u32 2, %s42
          %s3365 = ssub.s32 256, 256
          %3366 = vsyncadd %s3331, %s3365
          %s3367 = smul.addr %s3363, 3
          %s3368 = sadd.s32 %s43, %s3367
          %s3369 = smul.addr %s3368, 128
          %s3370 = scalar_lea.hbm %s16, %s3369
          %s3371 = sshll.u32 %s3334, 4
          %s3372 = int_to_ptr.vmem [resolvable:$true] %s3371
          %3377 = dma.vmem_to_hbm [thread:$0]  %s3372, 256, %s3370, %s3331, 128, 384, 8
        $region128: #{tpu_custom_call.1} parent=79 // pred_fallthru
          _
        // Predicated region
        $region129: #{tpu_custom_call.1} parent=79 // pred_check
          %p3378 = pneg %p500
        $region130: #{tpu_custom_call.1} parent=79 // pred_check_branch
          %3380 = sbr.rel (%p3378) target = $region132
        $region131: #{tpu_custom_call.1} parent=79 // pred_region
          %p3381 = scmp.lt.s32.totalorder %s43, 0
          %s3382 = scalar_select %p3381, %s43, 0
          %s3383 = smul.u32 2, %s42
          %s3385 = ssub.s32 256, 256
          %3386 = vsyncadd %s3336, %s3385
          %s3387 = sadd.s32 %s3382, %s3383
          %s3388 = smul.addr %s3387, 128
          %s3389 = scalar_lea.hbm %s17, %s3388
          %s3390 = sshll.u32 %s3339, 4
          %s3391 = int_to_ptr.vmem [resolvable:$true] %s3390
          %3396 = dma.vmem_to_hbm [thread:$0]  %s3391, 256, %s3389, %s3336, 128, 128, 8
        $region132: #{tpu_custom_call.1} parent=79 // pred_fallthru
          _
      $region80: #{tpu_custom_call.1} parent=5 // pred_fallthru
        _
      %p3397 = scmp.le.s32.totalorder 2, %s33
      // Predicated region
      $region133: #{tpu_custom_call.1} parent=5 // pred_check
        %p3398 = pneg %p3397
      $region134: #{tpu_custom_call.1} parent=5 // pred_check_branch
        %3400 = sbr.rel (%p3398) target = $region136
      $region135: #{tpu_custom_call.1} parent=5 // pred_region
        %s3401 = ssub.s32 %s33, 2
        // Predicated region
        $region137: #{tpu_custom_call.1} parent=135 // pred_check
          %p3402 = pneg %p446
        $region138: #{tpu_custom_call.1} parent=135 // pred_check_branch
          %3404 = sbr.rel (%p3402) target = $region140
        $region139: #{tpu_custom_call.1} parent=135 // pred_region
          %s3405 = sand.u32 %s431, 1
          %s3406 = scalar_lea.sflag [#allocation7], %s3405
          %s3407 = sand.u32 %s431, 1
          %s3408 = smul.addr %s3407, 16
          %s3409 = scalar_lea.vmem [#allocation16], %s3408
          %3410 = dma.done %s3406, 256
        $region140: #{tpu_custom_call.1} parent=135 // pred_fallthru
          _
        // Predicated region
        $region141: #{tpu_custom_call.1} parent=135 // pred_check
          %p3411 = pneg %p474
        $region142: #{tpu_custom_call.1} parent=135 // pred_check_branch
          %3413 = sbr.rel (%p3411) target = $region144
        $region143: #{tpu_custom_call.1} parent=135 // pred_region
          %s3414 = sand.u32 %s39, 1
          %s3415 = scalar_lea.sflag [#allocation18], %s3414
          %s3416 = sand.u32 %s459, 1
          %s3417 = smul.addr %s3416, 16
          %s3418 = scalar_lea.vmem [#allocation17], %s3417
          %3419 = dma.done %s3415, 256
        $region144: #{tpu_custom_call.1} parent=135 // pred_fallthru
          _
        // Predicated region
        $region145: #{tpu_custom_call.1} parent=135 // pred_check
          %p3420 = pneg %p506
        $region146: #{tpu_custom_call.1} parent=135 // pred_check_branch
          %3422 = sbr.rel (%p3420) target = $region148
        $region147: #{tpu_custom_call.1} parent=135 // pred_region
          %s3423 = sand.u32 %s39, 1
          %s3424 = scalar_lea.sflag [#allocation18], %s3423
          %s3425 = sand.u32 %s491, 1
          %s3426 = smul.addr %s3425, 16
          %s3427 = scalar_lea.vmem [#allocation19], %s3426
          %3428 = dma.done %s3424, 256
        $region148: #{tpu_custom_call.1} parent=135 // pred_fallthru
          _
      $region136: #{tpu_custom_call.1} parent=5 // pred_fallthru
        _
    $region6: #{tpu_custom_call.1} parent=1 // loop_footer
      %s37 = sadd.s32 1, %s33
    $region7: #{tpu_custom_call.1} parent=1 // loop_footer_branch
      %32 = sbr.rel target = $region3
    $region8: #{tpu_custom_call.1} parent=1 // loop_exit
      _
    %3429 = vsyncpa [#allocation6], 1
    %s3430 = scalar_lea.sflag [#allocation6], 1
    %3431 = vsyncpa %s3430, 1
    %3432 = vsyncpa [#allocation9], 1
    %3433 = vsyncpa [#allocation12], 1
    %3434 = vsyncpa [#allocation7], 1
    %s3435 = scalar_lea.sflag [#allocation7], 1
    %3436 = vsyncpa %s3435, 1
    %3437 = vsyncpa [#allocation18], 1
    %s3438 = scalar_lea.sflag [#allocation18], 1
    %3439 = vsyncpa %s3438, 1

</llo_original>
